<compile_context>
chip_gen: v7x
topology: tpu7x:2x2x1
jax: 0.10.0
libtpu: 0.0.40
codegen_flags: <defaults>
</compile_context>

<pallas_src>
import functools

import jax
import jax.numpy as jnp
from jax.experimental import pallas as pl
from jax.experimental.pallas import tpu as pltpu

EPS = 1e-5          # torch nn.LayerNorm default
BF16 = jnp.bfloat16

# rows of the packed (10, D) f32 vector table
ROW_SA_BO, ROW_CA_BQ, ROW_CA_BO, ROW_FF_B2 = 0, 1, 2, 3
ROW_G1, ROW_B1, ROW_G2, ROW_B2, ROW_G3, ROW_B3 = 4, 5, 6, 7, 8, 9


def _layernorm(x, gamma, beta):
    # x: (S, D) f32; gamma/beta: (1, D) f32.  Biased variance, like torch.
    mean = jnp.mean(x, axis=-1, keepdims=True)
    var = jnp.mean(jnp.square(x - mean), axis=-1, keepdims=True)
    return (x - mean) * jax.lax.rsqrt(var + EPS) * gamma + beta


def decoder_layer_kernel(
    # activations (per-batch slabs; batch dim squeezed)
    x_ref, enc_ref,
    # self-attention params
    sa_wqkv_ref, sa_bqkv_ref, sa_wo_ref,
    # cross-attention params
    ca_wq_ref, ca_wkv_ref, ca_bkv_ref, ca_wo_ref,
    # feedforward params
    ff_w1_ref, ff_b1_ref, ff_w2_ref,
    # packed D-wide bias / LayerNorm vectors
    vec_ref,
    # output
    out_ref,
    *, num_heads, depth,
):
    d_model = num_heads * depth
    x = x_ref[...]        # (S, D)     f32
    enc = enc_ref[...]    # (S_enc, D) f32
    vec = vec_ref[...]    # (10, D)    f32

    sa_bo = vec[ROW_SA_BO:ROW_SA_BO + 1, :]
    ca_bq = vec[ROW_CA_BQ:ROW_CA_BQ + 1, :]
    ca_bo = vec[ROW_CA_BO:ROW_CA_BO + 1, :]
    ff_b2 = vec[ROW_FF_B2:ROW_FF_B2 + 1, :]
    g1, b1 = vec[ROW_G1:ROW_G1 + 1, :], vec[ROW_B1:ROW_B1 + 1, :]
    g2, b2 = vec[ROW_G2:ROW_G2 + 1, :], vec[ROW_B2:ROW_B2 + 1, :]
    g3, b3 = vec[ROW_G3:ROW_G3 + 1, :], vec[ROW_B3:ROW_B3 + 1, :]

    scale = float(depth) ** -0.5

    def attention(q, k, v, wo_ref, bo):
        # q: (Sq, D) f32 (already scaled); k, v: (Skv, D) f32.
        # wo_ref: (H, depth, D) bf16.  Per-head unrolled loop; only one head's
        # (Sq, Skv) scores live at a time; Wo contribution accumulates
        # directly into the (Sq, D) output (no head merge/concat).
        acc = jnp.zeros((q.shape[0], d_model), jnp.float32)
        for h in range(num_heads):
            sl = slice(h * depth, (h + 1) * depth)
            qh = q[:, sl].astype(BF16)                       # (Sq, depth)
            kh = k[:, sl].astype(BF16)                       # (Skv, depth)
            vh = v[:, sl]                                    # (Skv, depth) f32
            # contract last dims of both (no explicit transpose)
            s = jax.lax.dot_general(qh, kh, (((1,), (1,)), ((), ())),
                                    preferred_element_type=jnp.float32)
            s = s - jnp.max(s, axis=-1, keepdims=True)
            p = jnp.exp(s)
            p = p * pl.reciprocal(jnp.sum(p, axis=-1, keepdims=True),
                                  approx=False)
            o_h = jnp.dot(p, vh, preferred_element_type=jnp.float32)
            acc = acc + jnp.dot(o_h.astype(BF16), wo_ref[h],
                                preferred_element_type=jnp.float32)
        return acc + bo

    # --- self attention + residual + norm1 ---
    qkv = jnp.dot(x.astype(BF16), sa_wqkv_ref[...],
                  preferred_element_type=jnp.float32) + sa_bqkv_ref[...]
    q = qkv[:, 0:d_model] * scale          # fold 1/sqrt(depth) into Q
    k = qkv[:, d_model:2 * d_model]
    v = qkv[:, 2 * d_model:3 * d_model]
    sa = attention(q, k, v, sa_wo_ref, sa_bo)
    h1 = _layernorm(x + sa, g1, b1)

    # --- encoder (cross) attention + residual + norm2 ---
    q2 = (jnp.dot(h1.astype(BF16), ca_wq_ref[...],
                  preferred_element_type=jnp.float32) + ca_bq) * scale
    kv = jnp.dot(enc.astype(BF16), ca_wkv_ref[...],
                 preferred_element_type=jnp.float32) + ca_bkv_ref[...]
    k2 = kv[:, 0:d_model]
    v2 = kv[:, d_model:2 * d_model]
    ca = attention(q2, k2, v2, ca_wo_ref, ca_bo)
    h2 = _layernorm(h1 + ca, g2, b2)

    # --- feedforward + residual + norm3 ---
    ff = jnp.dot(h2.astype(BF16), ff_w1_ref[...],
                 preferred_element_type=jnp.float32) + ff_b1_ref[...]
    ff = jnp.maximum(ff, 0.0)
    ff = jnp.dot(ff.astype(BF16), ff_w2_ref[...],
                 preferred_element_type=jnp.float32) + ff_b2
    out = _layernorm(h2 + ff, g3, b3)

    out_ref[...] = out.astype(out_ref.dtype)


PARAM_ORDER = [
    "sa_wqkv", "sa_bqkv", "sa_wo",
    "ca_wq", "ca_wkv", "ca_bkv", "ca_wo",
    "ff_w1", "ff_b1", "ff_w2",
    "vec_d",
]


def init_params(key, d_model, num_heads):
    """Deterministic synthetic params.

    Returns (kernel_params, raw_params): kernel_params use the fused/packed
    layouts consumed by the Pallas kernel; raw_params are the per-projection
    [in, out] matrices used by the pure-JAX reference.
    """
    depth = d_model // num_heads
    ks = iter(jax.random.split(key, 24))

    def lin(in_d, out_d):
        w = 0.05 * jax.random.normal(next(ks), (in_d, out_d), jnp.float32)
        b = 0.05 * jax.random.normal(next(ks), (1, out_d), jnp.float32)
        return w.astype(BF16), b

    raw = {}
    for pre in ("sa", "ca"):
        for name in ("wq", "wk", "wv", "wo"):
            w, b = lin(d_model, d_model)
            raw[f"{pre}_{name}"] = w
            raw[f"{pre}_b{name[-1]}"] = b
    raw["ff_w1"], raw["ff_b1"] = lin(d_model, 4 * d_model)
    raw["ff_w2"], raw["ff_b2"] = lin(4 * d_model, d_model)
    for i in (1, 2, 3):
        raw[f"g{i}"] = jnp.ones((1, d_model), jnp.float32)
        raw[f"be{i}"] = jnp.zeros((1, d_model), jnp.float32)

    p = {
        # fused QKV projection for self-attn; fused KV for cross-attn
        "sa_wqkv": jnp.concatenate(
            [raw["sa_wq"], raw["sa_wk"], raw["sa_wv"]], axis=1),
        "sa_bqkv": jnp.concatenate(
            [raw["sa_bq"], raw["sa_bk"], raw["sa_bv"]], axis=1),
        "sa_wo": raw["sa_wo"].reshape(num_heads, depth, d_model),
        "ca_wq": raw["ca_wq"],
        "ca_wkv": jnp.concatenate([raw["ca_wk"], raw["ca_wv"]], axis=1),
        "ca_bkv": jnp.concatenate([raw["ca_bk"], raw["ca_bv"]], axis=1),
        "ca_wo": raw["ca_wo"].reshape(num_heads, depth, d_model),
        "ff_w1": raw["ff_w1"],
        "ff_b1": raw["ff_b1"],
        "ff_w2": raw["ff_w2"],
        # packed D-wide bias / LN vectors, one (10, D) f32 table
        "vec_d": jnp.concatenate(
            [raw["sa_bo"], raw["ca_bq"], raw["ca_bo"], raw["ff_b2"],
             raw["g1"], raw["be1"], raw["g2"], raw["be2"],
             raw["g3"], raw["be3"]], axis=0),
    }
    return p, raw


def decoder_layer(x, encoder_output, params, num_heads):
    B, S, D = x.shape
    _, S_enc, _ = encoder_output.shape
    depth = D // num_heads

    # Grid-invariant params: whole-array resident in VMEM (copied once,
    # no per-step DMA, no double-buffering).
    vmem_resident = pl.BlockSpec(memory_space=pltpu.MemorySpace.VMEM)
    param_args = [params[k] for k in PARAM_ORDER]
    param_specs = [vmem_resident] * len(PARAM_ORDER)

    kernel = functools.partial(decoder_layer_kernel,
                               num_heads=num_heads, depth=depth)

    return pl.pallas_call(
        kernel,
        out_shape=jax.ShapeDtypeStruct((B, S, D), jnp.float32),
        grid_spec=pltpu.PrefetchScalarGridSpec(
            num_scalar_prefetch=0,
            grid=(B,),
            in_specs=[
                # full sequence for this batch element (Q and self-attn K/V)
                pl.BlockSpec((None, S, D), lambda b: (b, 0, 0)),
                # encoder output (cross-attn K/V source)
                pl.BlockSpec((None, S_enc, D), lambda b: (b, 0, 0)),
            ] + param_specs,
            out_specs=pl.BlockSpec((None, S, D), lambda b: (b, 0, 0)),
        ),
        compiler_params=pltpu.CompilerParams(
            dimension_semantics=("parallel",),
            vmem_limit_bytes=32 * 1024 * 1024,
        ),
    )(x, encoder_output, *param_args)


# ----------------------------- pure-JAX reference -----------------------------
def _ref_layernorm(x, g, b):
    m = jnp.mean(x, axis=-1, keepdims=True)
    v = jnp.mean((x - m) ** 2, axis=-1, keepdims=True)
    return (x - m) / jnp.sqrt(v + EPS) * g + b


def _ref_mha(q_in, kv_in, p, pre, num_heads, depth):
    q = q_in @ p[f"{pre}_wq"] + p[f"{pre}_bq"]
    k = kv_in @ p[f"{pre}_wk"] + p[f"{pre}_bk"]
    v = kv_in @ p[f"{pre}_wv"] + p[f"{pre}_bv"]

    def split(t):  # (B,S,D) -> (B,H,S,depth)
        B, S, D = t.shape
        return t.reshape(B, S, num_heads, depth).transpose(0, 2, 1, 3)

    qh, kh, vh = split(q), split(k), split(v)
    s = jnp.einsum("bhqd,bhkd->bhqk", qh, kh) / jnp.sqrt(jnp.float32(depth))
    a = jax.nn.softmax(s, axis=-1)
    o = jnp.einsum("bhqk,bhkd->bhqd", a, vh)
    B, H, S, Dp = o.shape
    o = o.transpose(0, 2, 1, 3).reshape(B, S, H * Dp)
    return o @ p[f"{pre}_wo"] + p[f"{pre}_bo"]


def decoder_layer_ref(x, enc, p, num_heads):
    D = x.shape[-1]
    depth = D // num_heads
    sa = _ref_mha(x, x, p, "sa", num_heads, depth)
    h1 = _ref_layernorm(x + sa, p["g1"], p["be1"])
    ca = _ref_mha(h1, enc, p, "ca", num_heads, depth)
    h2 = _ref_layernorm(h1 + ca, p["g2"], p["be2"])
    ff = jnp.maximum(h2 @ p["ff_w1"] + p["ff_b1"], 0.0) @ p["ff_w2"] + p["ff_b2"]
    return _ref_layernorm(h2 + ff, p["g3"], p["be3"])


if __name__ == "__main__":
    B, S, D, H = 2, 8, 32, 4  # batch, seq, d_model, num_heads

    key = jax.random.PRNGKey(0)
    kx, kenc, kp = jax.random.split(key, 3)
    x = jax.random.normal(kx, (B, S, D), jnp.float32)
    encoder_output = jax.random.normal(kenc, (B, S, D), jnp.float32)
    params, raw = init_params(kp, D, H)

    out = decoder_layer(x, encoder_output, params, num_heads=H)
    out = jax.block_until_ready(out)

    # f32 reference using the same (bf16-quantized) weight values; tolerance
    # absorbs the in-kernel bf16 activation casts on the MXU matmuls.
    raw_f32 = jax.tree_util.tree_map(lambda a: a.astype(jnp.float32), raw)
    ref = decoder_layer_ref(x, encoder_output, raw_f32, H)

    assert out.shape == (B, S, D)
    assert jnp.allclose(out, ref, rtol=2e-2, atol=2e-2), "mismatch vs reference"

    print("KERNEL_OK")
</pallas_src>

<mosaic_0001>
module attributes {stable_mosaic.version = 11 : i64} {
  func.func @decoder_layer_kernel(%arg0: i32, %arg1: memref<1x8x32xf32, #tpu.memory_space<vmem>>, %arg2: memref<1x8x32xf32, #tpu.memory_space<vmem>>, %arg3: memref<32x96xbf16, #tpu.memory_space<vmem>>, %arg4: memref<1x96xf32, #tpu.memory_space<vmem>>, %arg5: memref<4x8x32xbf16, #tpu.memory_space<vmem>>, %arg6: memref<32x32xbf16, #tpu.memory_space<vmem>>, %arg7: memref<32x64xbf16, #tpu.memory_space<vmem>>, %arg8: memref<1x64xf32, #tpu.memory_space<vmem>>, %arg9: memref<4x8x32xbf16, #tpu.memory_space<vmem>>, %arg10: memref<32x128xbf16, #tpu.memory_space<vmem>>, %arg11: memref<1x128xf32, #tpu.memory_space<vmem>>, %arg12: memref<128x32xbf16, #tpu.memory_space<vmem>>, %arg13: memref<10x32xf32, #tpu.memory_space<vmem>>, %arg14: memref<1x8x32xf32, #tpu.memory_space<vmem>>) attributes {dimension_semantics = [#tpu.dimension_semantics<parallel>], iteration_bounds = array<i64: 2>, scalar_prefetch = 0 : i64, scratch_operands = 0 : i64, tpu.core_type = #tpu.core_type<tc>, window_params = [{transform_indices = @transform_0, window_bounds = array<i64: 1, 8, 32>}, {transform_indices = @transform_1, window_bounds = array<i64: 1, 8, 32>}, {pipeline_mode = #tpu.pipeline_mode<synchronous>, transform_indices = @transform_2, window_bounds = array<i64: 32, 96>}, {pipeline_mode = #tpu.pipeline_mode<synchronous>, transform_indices = @transform_3, window_bounds = array<i64: 1, 96>}, {pipeline_mode = #tpu.pipeline_mode<synchronous>, transform_indices = @transform_4, window_bounds = array<i64: 4, 8, 32>}, {pipeline_mode = #tpu.pipeline_mode<synchronous>, transform_indices = @transform_5, window_bounds = array<i64: 32, 32>}, {pipeline_mode = #tpu.pipeline_mode<synchronous>, transform_indices = @transform_6, window_bounds = array<i64: 32, 64>}, {pipeline_mode = #tpu.pipeline_mode<synchronous>, transform_indices = @transform_7, window_bounds = array<i64: 1, 64>}, {pipeline_mode = #tpu.pipeline_mode<synchronous>, transform_indices = @transform_8, window_bounds = array<i64: 4, 8, 32>}, {pipeline_mode = #tpu.pipeline_mode<synchronous>, transform_indices = @transform_9, window_bounds = array<i64: 32, 128>}, {pipeline_mode = #tpu.pipeline_mode<synchronous>, transform_indices = @transform_10, window_bounds = array<i64: 1, 128>}, {pipeline_mode = #tpu.pipeline_mode<synchronous>, transform_indices = @transform_11, window_bounds = array<i64: 128, 32>}, {pipeline_mode = #tpu.pipeline_mode<synchronous>, transform_indices = @transform_12, window_bounds = array<i64: 10, 32>}, {transform_indices = @transform_13, window_bounds = array<i64: 1, 8, 32>}]} {
    %c0 = arith.constant 0 : index
    %c0_0 = arith.constant 0 : index
    %c0_1 = arith.constant 0 : index
    %0 = vector.load %arg1[%c0, %c0_0, %c0_1] : memref<1x8x32xf32, #tpu.memory_space<vmem>>, vector<1x8x32xf32>
    %1 = vector.shape_cast %0 : vector<1x8x32xf32> to vector<8x32xf32>
    %c0_2 = arith.constant 0 : index
    %c0_3 = arith.constant 0 : index
    %c0_4 = arith.constant 0 : index
    %2 = vector.load %arg2[%c0_2, %c0_3, %c0_4] : memref<1x8x32xf32, #tpu.memory_space<vmem>>, vector<1x8x32xf32>
    %3 = vector.shape_cast %2 : vector<1x8x32xf32> to vector<8x32xf32>
    %c0_5 = arith.constant 0 : index
    %c0_6 = arith.constant 0 : index
    %4 = vector.load %arg13[%c0_5, %c0_6] : memref<10x32xf32, #tpu.memory_space<vmem>>, vector<10x32xf32>
    %5 = vector.extract_strided_slice %4 {offsets = [0, 0], sizes = [1, 32], strides = [1, 1]} : vector<10x32xf32> to vector<1x32xf32>
    %6 = vector.extract_strided_slice %4 {offsets = [1, 0], sizes = [1, 32], strides = [1, 1]} : vector<10x32xf32> to vector<1x32xf32>
    %7 = vector.extract_strided_slice %4 {offsets = [2, 0], sizes = [1, 32], strides = [1, 1]} : vector<10x32xf32> to vector<1x32xf32>
    %8 = vector.extract_strided_slice %4 {offsets = [3, 0], sizes = [1, 32], strides = [1, 1]} : vector<10x32xf32> to vector<1x32xf32>
    %9 = vector.extract_strided_slice %4 {offsets = [4, 0], sizes = [1, 32], strides = [1, 1]} : vector<10x32xf32> to vector<1x32xf32>
    %10 = vector.extract_strided_slice %4 {offsets = [5, 0], sizes = [1, 32], strides = [1, 1]} : vector<10x32xf32> to vector<1x32xf32>
    %11 = vector.extract_strided_slice %4 {offsets = [6, 0], sizes = [1, 32], strides = [1, 1]} : vector<10x32xf32> to vector<1x32xf32>
    %12 = vector.extract_strided_slice %4 {offsets = [7, 0], sizes = [1, 32], strides = [1, 1]} : vector<10x32xf32> to vector<1x32xf32>
    %13 = vector.extract_strided_slice %4 {offsets = [8, 0], sizes = [1, 32], strides = [1, 1]} : vector<10x32xf32> to vector<1x32xf32>
    %14 = vector.extract_strided_slice %4 {offsets = [9, 0], sizes = [1, 32], strides = [1, 1]} : vector<10x32xf32> to vector<1x32xf32>
    %15 = arith.truncf %1 : vector<8x32xf32> to vector<8x32xbf16>
    %c0_7 = arith.constant 0 : index
    %c0_8 = arith.constant 0 : index
    %16 = vector.load %arg3[%c0_7, %c0_8] : memref<32x96xbf16, #tpu.memory_space<vmem>>, vector<32x96xbf16>
    %cst = arith.constant dense<0.000000e+00> : vector<8x96xf32>
    %17 = tpu.matmul %15, %16, %cst {dimension_numbers = #tpu.dot_dimension_numbers<[1], [0], [0], [1], [0, 0, 1, 1], [], []>} : vector<8x32xbf16>, vector<32x96xbf16>, vector<8x96xf32> -> vector<8x96xf32>
    %c0_9 = arith.constant 0 : index
    %c0_10 = arith.constant 0 : index
    %18 = vector.load %arg4[%c0_9, %c0_10] : memref<1x96xf32, #tpu.memory_space<vmem>>, vector<1x96xf32>
    %19 = vector.broadcast %18 : vector<1x96xf32> to vector<8x96xf32>
    %20 = arith.addf %17, %19 : vector<8x96xf32>
    %21 = vector.extract_strided_slice %20 {offsets = [0, 0], sizes = [8, 32], strides = [1, 1]} : vector<8x96xf32> to vector<8x32xf32>
    %cst_11 = arith.constant 0.353553385 : f32
    %22 = vector.broadcast %cst_11 : f32 to vector<8x32xf32>
    %23 = arith.mulf %21, %22 : vector<8x32xf32>
    %24 = vector.extract_strided_slice %20 {offsets = [0, 32], sizes = [8, 32], strides = [1, 1]} : vector<8x96xf32> to vector<8x32xf32>
    %25 = vector.extract_strided_slice %20 {offsets = [0, 64], sizes = [8, 32], strides = [1, 1]} : vector<8x96xf32> to vector<8x32xf32>
    %cst_12 = arith.constant 0.000000e+00 : f32
    %26 = vector.broadcast %cst_12 : f32 to vector<8x32xf32>
    %27 = vector.extract_strided_slice %23 {offsets = [0, 0], sizes = [8, 8], strides = [1, 1]} : vector<8x32xf32> to vector<8x8xf32>
    %28 = arith.truncf %27 : vector<8x8xf32> to vector<8x8xbf16>
    %29 = vector.extract_strided_slice %24 {offsets = [0, 0], sizes = [8, 8], strides = [1, 1]} : vector<8x32xf32> to vector<8x8xf32>
    %30 = arith.truncf %29 : vector<8x8xf32> to vector<8x8xbf16>
    %31 = vector.extract_strided_slice %25 {offsets = [0, 0], sizes = [8, 8], strides = [1, 1]} : vector<8x32xf32> to vector<8x8xf32>
    %cst_13 = arith.constant dense<0.000000e+00> : vector<8x8xf32>
    %32 = tpu.matmul %28, %30, %cst_13 {dimension_numbers = #tpu.dot_dimension_numbers<[1], [1], [0], [0], [0, 0, 1, 0], [], []>} : vector<8x8xbf16>, vector<8x8xbf16>, vector<8x8xf32> -> vector<8x8xf32>
    %cst_14 = arith.constant dense<0xFF800000> : vector<8xf32>
    %33 = vector.multi_reduction <maximumf>, %32, %cst_14 [1] : vector<8x8xf32> to vector<8xf32>
    %34 = vector.shape_cast %33 : vector<8xf32> to vector<8x1xf32>
    %35 = vector.broadcast %34 : vector<8x1xf32> to vector<8x8xf32>
    %36 = arith.subf %32, %35 : vector<8x8xf32>
    %37 = math.exp %36 : vector<8x8xf32>
    %cst_15 = arith.constant dense<0.000000e+00> : vector<8xf32>
    %38 = vector.multi_reduction <add>, %37, %cst_15 [1] : vector<8x8xf32> to vector<8xf32>
    %39 = vector.shape_cast %38 : vector<8xf32> to vector<8x1xf32>
    %40 = tpu.reciprocal %39 : vector<8x1xf32> -> vector<8x1xf32>
    %41 = vector.broadcast %40 : vector<8x1xf32> to vector<8x8xf32>
    %42 = arith.mulf %37, %41 : vector<8x8xf32>
    %cst_16 = arith.constant dense<0.000000e+00> : vector<8x8xf32>
    %43 = tpu.matmul %42, %31, %cst_16 {dimension_numbers = #tpu.dot_dimension_numbers<[1], [0], [0], [1], [0, 0, 1, 1], [], []>} : vector<8x8xf32>, vector<8x8xf32>, vector<8x8xf32> -> vector<8x8xf32>
    %44 = arith.truncf %43 : vector<8x8xf32> to vector<8x8xbf16>
    %c0_17 = arith.constant 0 : index
    %c0_18 = arith.constant 0 : index
    %c0_19 = arith.constant 0 : index
    %45 = vector.load %arg5[%c0_17, %c0_18, %c0_19] : memref<4x8x32xbf16, #tpu.memory_space<vmem>>, vector<1x8x32xbf16>
    %46 = vector.shape_cast %45 : vector<1x8x32xbf16> to vector<8x32xbf16>
    %cst_20 = arith.constant dense<0.000000e+00> : vector<8x32xf32>
    %47 = tpu.matmul %44, %46, %cst_20 {dimension_numbers = #tpu.dot_dimension_numbers<[1], [0], [0], [1], [0, 0, 1, 1], [], []>} : vector<8x8xbf16>, vector<8x32xbf16>, vector<8x32xf32> -> vector<8x32xf32>
    %48 = arith.addf %26, %47 : vector<8x32xf32>
    %49 = vector.extract_strided_slice %23 {offsets = [0, 8], sizes = [8, 8], strides = [1, 1]} : vector<8x32xf32> to vector<8x8xf32>
    %50 = arith.truncf %49 : vector<8x8xf32> to vector<8x8xbf16>
    %51 = vector.extract_strided_slice %24 {offsets = [0, 8], sizes = [8, 8], strides = [1, 1]} : vector<8x32xf32> to vector<8x8xf32>
    %52 = arith.truncf %51 : vector<8x8xf32> to vector<8x8xbf16>
    %53 = vector.extract_strided_slice %25 {offsets = [0, 8], sizes = [8, 8], strides = [1, 1]} : vector<8x32xf32> to vector<8x8xf32>
    %cst_21 = arith.constant dense<0.000000e+00> : vector<8x8xf32>
    %54 = tpu.matmul %50, %52, %cst_21 {dimension_numbers = #tpu.dot_dimension_numbers<[1], [1], [0], [0], [0, 0, 1, 0], [], []>} : vector<8x8xbf16>, vector<8x8xbf16>, vector<8x8xf32> -> vector<8x8xf32>
    %cst_22 = arith.constant dense<0xFF800000> : vector<8xf32>
    %55 = vector.multi_reduction <maximumf>, %54, %cst_22 [1] : vector<8x8xf32> to vector<8xf32>
    %56 = vector.shape_cast %55 : vector<8xf32> to vector<8x1xf32>
    %57 = vector.broadcast %56 : vector<8x1xf32> to vector<8x8xf32>
    %58 = arith.subf %54, %57 : vector<8x8xf32>
    %59 = math.exp %58 : vector<8x8xf32>
    %cst_23 = arith.constant dense<0.000000e+00> : vector<8xf32>
    %60 = vector.multi_reduction <add>, %59, %cst_23 [1] : vector<8x8xf32> to vector<8xf32>
    %61 = vector.shape_cast %60 : vector<8xf32> to vector<8x1xf32>
    %62 = tpu.reciprocal %61 : vector<8x1xf32> -> vector<8x1xf32>
    %63 = vector.broadcast %62 : vector<8x1xf32> to vector<8x8xf32>
    %64 = arith.mulf %59, %63 : vector<8x8xf32>
    %cst_24 = arith.constant dense<0.000000e+00> : vector<8x8xf32>
    %65 = tpu.matmul %64, %53, %cst_24 {dimension_numbers = #tpu.dot_dimension_numbers<[1], [0], [0], [1], [0, 0, 1, 1], [], []>} : vector<8x8xf32>, vector<8x8xf32>, vector<8x8xf32> -> vector<8x8xf32>
    %66 = arith.truncf %65 : vector<8x8xf32> to vector<8x8xbf16>
    %c1 = arith.constant 1 : index
    %c0_25 = arith.constant 0 : index
    %c0_26 = arith.constant 0 : index
    %67 = vector.load %arg5[%c1, %c0_25, %c0_26] : memref<4x8x32xbf16, #tpu.memory_space<vmem>>, vector<1x8x32xbf16>
    %68 = vector.shape_cast %67 : vector<1x8x32xbf16> to vector<8x32xbf16>
    %cst_27 = arith.constant dense<0.000000e+00> : vector<8x32xf32>
    %69 = tpu.matmul %66, %68, %cst_27 {dimension_numbers = #tpu.dot_dimension_numbers<[1], [0], [0], [1], [0, 0, 1, 1], [], []>} : vector<8x8xbf16>, vector<8x32xbf16>, vector<8x32xf32> -> vector<8x32xf32>
    %70 = arith.addf %48, %69 : vector<8x32xf32>
    %71 = vector.extract_strided_slice %23 {offsets = [0, 16], sizes = [8, 8], strides = [1, 1]} : vector<8x32xf32> to vector<8x8xf32>
    %72 = arith.truncf %71 : vector<8x8xf32> to vector<8x8xbf16>
    %73 = vector.extract_strided_slice %24 {offsets = [0, 16], sizes = [8, 8], strides = [1, 1]} : vector<8x32xf32> to vector<8x8xf32>
    %74 = arith.truncf %73 : vector<8x8xf32> to vector<8x8xbf16>
    %75 = vector.extract_strided_slice %25 {offsets = [0, 16], sizes = [8, 8], strides = [1, 1]} : vector<8x32xf32> to vector<8x8xf32>
    %cst_28 = arith.constant dense<0.000000e+00> : vector<8x8xf32>
    %76 = tpu.matmul %72, %74, %cst_28 {dimension_numbers = #tpu.dot_dimension_numbers<[1], [1], [0], [0], [0, 0, 1, 0], [], []>} : vector<8x8xbf16>, vector<8x8xbf16>, vector<8x8xf32> -> vector<8x8xf32>
    %cst_29 = arith.constant dense<0xFF800000> : vector<8xf32>
    %77 = vector.multi_reduction <maximumf>, %76, %cst_29 [1] : vector<8x8xf32> to vector<8xf32>
    %78 = vector.shape_cast %77 : vector<8xf32> to vector<8x1xf32>
    %79 = vector.broadcast %78 : vector<8x1xf32> to vector<8x8xf32>
    %80 = arith.subf %76, %79 : vector<8x8xf32>
    %81 = math.exp %80 : vector<8x8xf32>
    %cst_30 = arith.constant dense<0.000000e+00> : vector<8xf32>
    %82 = vector.multi_reduction <add>, %81, %cst_30 [1] : vector<8x8xf32> to vector<8xf32>
    %83 = vector.shape_cast %82 : vector<8xf32> to vector<8x1xf32>
    %84 = tpu.reciprocal %83 : vector<8x1xf32> -> vector<8x1xf32>
    %85 = vector.broadcast %84 : vector<8x1xf32> to vector<8x8xf32>
    %86 = arith.mulf %81, %85 : vector<8x8xf32>
    %cst_31 = arith.constant dense<0.000000e+00> : vector<8x8xf32>
    %87 = tpu.matmul %86, %75, %cst_31 {dimension_numbers = #tpu.dot_dimension_numbers<[1], [0], [0], [1], [0, 0, 1, 1], [], []>} : vector<8x8xf32>, vector<8x8xf32>, vector<8x8xf32> -> vector<8x8xf32>
    %88 = arith.truncf %87 : vector<8x8xf32> to vector<8x8xbf16>
    %c2 = arith.constant 2 : index
    %c0_32 = arith.constant 0 : index
    %c0_33 = arith.constant 0 : index
    %89 = vector.load %arg5[%c2, %c0_32, %c0_33] : memref<4x8x32xbf16, #tpu.memory_space<vmem>>, vector<1x8x32xbf16>
    %90 = vector.shape_cast %89 : vector<1x8x32xbf16> to vector<8x32xbf16>
    %cst_34 = arith.constant dense<0.000000e+00> : vector<8x32xf32>
    %91 = tpu.matmul %88, %90, %cst_34 {dimension_numbers = #tpu.dot_dimension_numbers<[1], [0], [0], [1], [0, 0, 1, 1], [], []>} : vector<8x8xbf16>, vector<8x32xbf16>, vector<8x32xf32> -> vector<8x32xf32>
    %92 = arith.addf %70, %91 : vector<8x32xf32>
    %93 = vector.extract_strided_slice %23 {offsets = [0, 24], sizes = [8, 8], strides = [1, 1]} : vector<8x32xf32> to vector<8x8xf32>
    %94 = arith.truncf %93 : vector<8x8xf32> to vector<8x8xbf16>
    %95 = vector.extract_strided_slice %24 {offsets = [0, 24], sizes = [8, 8], strides = [1, 1]} : vector<8x32xf32> to vector<8x8xf32>
    %96 = arith.truncf %95 : vector<8x8xf32> to vector<8x8xbf16>
    %97 = vector.extract_strided_slice %25 {offsets = [0, 24], sizes = [8, 8], strides = [1, 1]} : vector<8x32xf32> to vector<8x8xf32>
    %cst_35 = arith.constant dense<0.000000e+00> : vector<8x8xf32>
    %98 = tpu.matmul %94, %96, %cst_35 {dimension_numbers = #tpu.dot_dimension_numbers<[1], [1], [0], [0], [0, 0, 1, 0], [], []>} : vector<8x8xbf16>, vector<8x8xbf16>, vector<8x8xf32> -> vector<8x8xf32>
    %cst_36 = arith.constant dense<0xFF800000> : vector<8xf32>
    %99 = vector.multi_reduction <maximumf>, %98, %cst_36 [1] : vector<8x8xf32> to vector<8xf32>
    %100 = vector.shape_cast %99 : vector<8xf32> to vector<8x1xf32>
    %101 = vector.broadcast %100 : vector<8x1xf32> to vector<8x8xf32>
    %102 = arith.subf %98, %101 : vector<8x8xf32>
    %103 = math.exp %102 : vector<8x8xf32>
    %cst_37 = arith.constant dense<0.000000e+00> : vector<8xf32>
    %104 = vector.multi_reduction <add>, %103, %cst_37 [1] : vector<8x8xf32> to vector<8xf32>
    %105 = vector.shape_cast %104 : vector<8xf32> to vector<8x1xf32>
    %106 = tpu.reciprocal %105 : vector<8x1xf32> -> vector<8x1xf32>
    %107 = vector.broadcast %106 : vector<8x1xf32> to vector<8x8xf32>
    %108 = arith.mulf %103, %107 : vector<8x8xf32>
    %cst_38 = arith.constant dense<0.000000e+00> : vector<8x8xf32>
    %109 = tpu.matmul %108, %97, %cst_38 {dimension_numbers = #tpu.dot_dimension_numbers<[1], [0], [0], [1], [0, 0, 1, 1], [], []>} : vector<8x8xf32>, vector<8x8xf32>, vector<8x8xf32> -> vector<8x8xf32>
    %110 = arith.truncf %109 : vector<8x8xf32> to vector<8x8xbf16>
    %c3 = arith.constant 3 : index
    %c0_39 = arith.constant 0 : index
    %c0_40 = arith.constant 0 : index
    %111 = vector.load %arg5[%c3, %c0_39, %c0_40] : memref<4x8x32xbf16, #tpu.memory_space<vmem>>, vector<1x8x32xbf16>
    %112 = vector.shape_cast %111 : vector<1x8x32xbf16> to vector<8x32xbf16>
    %cst_41 = arith.constant dense<0.000000e+00> : vector<8x32xf32>
    %113 = tpu.matmul %110, %112, %cst_41 {dimension_numbers = #tpu.dot_dimension_numbers<[1], [0], [0], [1], [0, 0, 1, 1], [], []>} : vector<8x8xbf16>, vector<8x32xbf16>, vector<8x32xf32> -> vector<8x32xf32>
    %114 = arith.addf %92, %113 : vector<8x32xf32>
    %115 = vector.broadcast %5 : vector<1x32xf32> to vector<8x32xf32>
    %116 = arith.addf %114, %115 : vector<8x32xf32>
    %117 = arith.addf %1, %116 : vector<8x32xf32>
    %cst_42 = arith.constant dense<0.000000e+00> : vector<8xf32>
    %118 = vector.multi_reduction <add>, %117, %cst_42 [1] : vector<8x32xf32> to vector<8xf32>
    %119 = vector.shape_cast %118 : vector<8xf32> to vector<8x1xf32>
    %cst_43 = arith.constant 3.200000e+01 : f32
    %120 = vector.broadcast %cst_43 : f32 to vector<8x1xf32>
    %121 = arith.divf %119, %120 : vector<8x1xf32>
    %122 = vector.broadcast %121 : vector<8x1xf32> to vector<8x32xf32>
    %123 = arith.subf %117, %122 : vector<8x32xf32>
    %124 = arith.mulf %123, %123 : vector<8x32xf32>
    %cst_44 = arith.constant dense<0.000000e+00> : vector<8xf32>
    %125 = vector.multi_reduction <add>, %124, %cst_44 [1] : vector<8x32xf32> to vector<8xf32>
    %126 = vector.shape_cast %125 : vector<8xf32> to vector<8x1xf32>
    %cst_45 = arith.constant 3.200000e+01 : f32
    %127 = vector.broadcast %cst_45 : f32 to vector<8x1xf32>
    %128 = arith.divf %126, %127 : vector<8x1xf32>
    %129 = vector.broadcast %121 : vector<8x1xf32> to vector<8x32xf32>
    %130 = arith.subf %117, %129 : vector<8x32xf32>
    %cst_46 = arith.constant 9.99999974E-6 : f32
    %131 = vector.broadcast %cst_46 : f32 to vector<8x1xf32>
    %132 = arith.addf %128, %131 : vector<8x1xf32>
    %133 = math.rsqrt %132 : vector<8x1xf32>
    %134 = vector.broadcast %133 : vector<8x1xf32> to vector<8x32xf32>
    %135 = arith.mulf %130, %134 : vector<8x32xf32>
    %136 = vector.broadcast %9 : vector<1x32xf32> to vector<8x32xf32>
    %137 = arith.mulf %135, %136 : vector<8x32xf32>
    %138 = vector.broadcast %10 : vector<1x32xf32> to vector<8x32xf32>
    %139 = arith.addf %137, %138 : vector<8x32xf32>
    %140 = arith.truncf %139 : vector<8x32xf32> to vector<8x32xbf16>
    %c0_47 = arith.constant 0 : index
    %c0_48 = arith.constant 0 : index
    %141 = vector.load %arg6[%c0_47, %c0_48] : memref<32x32xbf16, #tpu.memory_space<vmem>>, vector<32x32xbf16>
    %cst_49 = arith.constant dense<0.000000e+00> : vector<8x32xf32>
    %142 = tpu.matmul %140, %141, %cst_49 {dimension_numbers = #tpu.dot_dimension_numbers<[1], [0], [0], [1], [0, 0, 1, 1], [], []>} : vector<8x32xbf16>, vector<32x32xbf16>, vector<8x32xf32> -> vector<8x32xf32>
    %143 = vector.broadcast %6 : vector<1x32xf32> to vector<8x32xf32>
    %144 = arith.addf %142, %143 : vector<8x32xf32>
    %cst_50 = arith.constant 0.353553385 : f32
    %145 = vector.broadcast %cst_50 : f32 to vector<8x32xf32>
    %146 = arith.mulf %144, %145 : vector<8x32xf32>
    %147 = arith.truncf %3 : vector<8x32xf32> to vector<8x32xbf16>
    %c0_51 = arith.constant 0 : index
    %c0_52 = arith.constant 0 : index
    %148 = vector.load %arg7[%c0_51, %c0_52] : memref<32x64xbf16, #tpu.memory_space<vmem>>, vector<32x64xbf16>
    %cst_53 = arith.constant dense<0.000000e+00> : vector<8x64xf32>
    %149 = tpu.matmul %147, %148, %cst_53 {dimension_numbers = #tpu.dot_dimension_numbers<[1], [0], [0], [1], [0, 0, 1, 1], [], []>} : vector<8x32xbf16>, vector<32x64xbf16>, vector<8x64xf32> -> vector<8x64xf32>
    %c0_54 = arith.constant 0 : index
    %c0_55 = arith.constant 0 : index
    %150 = vector.load %arg8[%c0_54, %c0_55] : memref<1x64xf32, #tpu.memory_space<vmem>>, vector<1x64xf32>
    %151 = vector.broadcast %150 : vector<1x64xf32> to vector<8x64xf32>
    %152 = arith.addf %149, %151 : vector<8x64xf32>
    %153 = vector.extract_strided_slice %152 {offsets = [0, 0], sizes = [8, 32], strides = [1, 1]} : vector<8x64xf32> to vector<8x32xf32>
    %154 = vector.extract_strided_slice %152 {offsets = [0, 32], sizes = [8, 32], strides = [1, 1]} : vector<8x64xf32> to vector<8x32xf32>
    %cst_56 = arith.constant 0.000000e+00 : f32
    %155 = vector.broadcast %cst_56 : f32 to vector<8x32xf32>
    %156 = vector.extract_strided_slice %146 {offsets = [0, 0], sizes = [8, 8], strides = [1, 1]} : vector<8x32xf32> to vector<8x8xf32>
    %157 = arith.truncf %156 : vector<8x8xf32> to vector<8x8xbf16>
    %158 = vector.extract_strided_slice %153 {offsets = [0, 0], sizes = [8, 8], strides = [1, 1]} : vector<8x32xf32> to vector<8x8xf32>
    %159 = arith.truncf %158 : vector<8x8xf32> to vector<8x8xbf16>
    %160 = vector.extract_strided_slice %154 {offsets = [0, 0], sizes = [8, 8], strides = [1, 1]} : vector<8x32xf32> to vector<8x8xf32>
    %cst_57 = arith.constant dense<0.000000e+00> : vector<8x8xf32>
    %161 = tpu.matmul %157, %159, %cst_57 {dimension_numbers = #tpu.dot_dimension_numbers<[1], [1], [0], [0], [0, 0, 1, 0], [], []>} : vector<8x8xbf16>, vector<8x8xbf16>, vector<8x8xf32> -> vector<8x8xf32>
    %cst_58 = arith.constant dense<0xFF800000> : vector<8xf32>
    %162 = vector.multi_reduction <maximumf>, %161, %cst_58 [1] : vector<8x8xf32> to vector<8xf32>
    %163 = vector.shape_cast %162 : vector<8xf32> to vector<8x1xf32>
    %164 = vector.broadcast %163 : vector<8x1xf32> to vector<8x8xf32>
    %165 = arith.subf %161, %164 : vector<8x8xf32>
    %166 = math.exp %165 : vector<8x8xf32>
    %cst_59 = arith.constant dense<0.000000e+00> : vector<8xf32>
    %167 = vector.multi_reduction <add>, %166, %cst_59 [1] : vector<8x8xf32> to vector<8xf32>
    %168 = vector.shape_cast %167 : vector<8xf32> to vector<8x1xf32>
    %169 = tpu.reciprocal %168 : vector<8x1xf32> -> vector<8x1xf32>
    %170 = vector.broadcast %169 : vector<8x1xf32> to vector<8x8xf32>
    %171 = arith.mulf %166, %170 : vector<8x8xf32>
    %cst_60 = arith.constant dense<0.000000e+00> : vector<8x8xf32>
    %172 = tpu.matmul %171, %160, %cst_60 {dimension_numbers = #tpu.dot_dimension_numbers<[1], [0], [0], [1], [0, 0, 1, 1], [], []>} : vector<8x8xf32>, vector<8x8xf32>, vector<8x8xf32> -> vector<8x8xf32>
    %173 = arith.truncf %172 : vector<8x8xf32> to vector<8x8xbf16>
    %c0_61 = arith.constant 0 : index
    %c0_62 = arith.constant 0 : index
    %c0_63 = arith.constant 0 : index
    %174 = vector.load %arg9[%c0_61, %c0_62, %c0_63] : memref<4x8x32xbf16, #tpu.memory_space<vmem>>, vector<1x8x32xbf16>
    %175 = vector.shape_cast %174 : vector<1x8x32xbf16> to vector<8x32xbf16>
    %cst_64 = arith.constant dense<0.000000e+00> : vector<8x32xf32>
    %176 = tpu.matmul %173, %175, %cst_64 {dimension_numbers = #tpu.dot_dimension_numbers<[1], [0], [0], [1], [0, 0, 1, 1], [], []>} : vector<8x8xbf16>, vector<8x32xbf16>, vector<8x32xf32> -> vector<8x32xf32>
    %177 = arith.addf %155, %176 : vector<8x32xf32>
    %178 = vector.extract_strided_slice %146 {offsets = [0, 8], sizes = [8, 8], strides = [1, 1]} : vector<8x32xf32> to vector<8x8xf32>
    %179 = arith.truncf %178 : vector<8x8xf32> to vector<8x8xbf16>
    %180 = vector.extract_strided_slice %153 {offsets = [0, 8], sizes = [8, 8], strides = [1, 1]} : vector<8x32xf32> to vector<8x8xf32>
    %181 = arith.truncf %180 : vector<8x8xf32> to vector<8x8xbf16>
    %182 = vector.extract_strided_slice %154 {offsets = [0, 8], sizes = [8, 8], strides = [1, 1]} : vector<8x32xf32> to vector<8x8xf32>
    %cst_65 = arith.constant dense<0.000000e+00> : vector<8x8xf32>
    %183 = tpu.matmul %179, %181, %cst_65 {dimension_numbers = #tpu.dot_dimension_numbers<[1], [1], [0], [0], [0, 0, 1, 0], [], []>} : vector<8x8xbf16>, vector<8x8xbf16>, vector<8x8xf32> -> vector<8x8xf32>
    %cst_66 = arith.constant dense<0xFF800000> : vector<8xf32>
    %184 = vector.multi_reduction <maximumf>, %183, %cst_66 [1] : vector<8x8xf32> to vector<8xf32>
    %185 = vector.shape_cast %184 : vector<8xf32> to vector<8x1xf32>
    %186 = vector.broadcast %185 : vector<8x1xf32> to vector<8x8xf32>
    %187 = arith.subf %183, %186 : vector<8x8xf32>
    %188 = math.exp %187 : vector<8x8xf32>
    %cst_67 = arith.constant dense<0.000000e+00> : vector<8xf32>
    %189 = vector.multi_reduction <add>, %188, %cst_67 [1] : vector<8x8xf32> to vector<8xf32>
    %190 = vector.shape_cast %189 : vector<8xf32> to vector<8x1xf32>
    %191 = tpu.reciprocal %190 : vector<8x1xf32> -> vector<8x1xf32>
    %192 = vector.broadcast %191 : vector<8x1xf32> to vector<8x8xf32>
    %193 = arith.mulf %188, %192 : vector<8x8xf32>
    %cst_68 = arith.constant dense<0.000000e+00> : vector<8x8xf32>
    %194 = tpu.matmul %193, %182, %cst_68 {dimension_numbers = #tpu.dot_dimension_numbers<[1], [0], [0], [1], [0, 0, 1, 1], [], []>} : vector<8x8xf32>, vector<8x8xf32>, vector<8x8xf32> -> vector<8x8xf32>
    %195 = arith.truncf %194 : vector<8x8xf32> to vector<8x8xbf16>
    %c1_69 = arith.constant 1 : index
    %c0_70 = arith.constant 0 : index
    %c0_71 = arith.constant 0 : index
    %196 = vector.load %arg9[%c1_69, %c0_70, %c0_71] : memref<4x8x32xbf16, #tpu.memory_space<vmem>>, vector<1x8x32xbf16>
    %197 = vector.shape_cast %196 : vector<1x8x32xbf16> to vector<8x32xbf16>
    %cst_72 = arith.constant dense<0.000000e+00> : vector<8x32xf32>
    %198 = tpu.matmul %195, %197, %cst_72 {dimension_numbers = #tpu.dot_dimension_numbers<[1], [0], [0], [1], [0, 0, 1, 1], [], []>} : vector<8x8xbf16>, vector<8x32xbf16>, vector<8x32xf32> -> vector<8x32xf32>
    %199 = arith.addf %177, %198 : vector<8x32xf32>
    %200 = vector.extract_strided_slice %146 {offsets = [0, 16], sizes = [8, 8], strides = [1, 1]} : vector<8x32xf32> to vector<8x8xf32>
    %201 = arith.truncf %200 : vector<8x8xf32> to vector<8x8xbf16>
    %202 = vector.extract_strided_slice %153 {offsets = [0, 16], sizes = [8, 8], strides = [1, 1]} : vector<8x32xf32> to vector<8x8xf32>
    %203 = arith.truncf %202 : vector<8x8xf32> to vector<8x8xbf16>
    %204 = vector.extract_strided_slice %154 {offsets = [0, 16], sizes = [8, 8], strides = [1, 1]} : vector<8x32xf32> to vector<8x8xf32>
    %cst_73 = arith.constant dense<0.000000e+00> : vector<8x8xf32>
    %205 = tpu.matmul %201, %203, %cst_73 {dimension_numbers = #tpu.dot_dimension_numbers<[1], [1], [0], [0], [0, 0, 1, 0], [], []>} : vector<8x8xbf16>, vector<8x8xbf16>, vector<8x8xf32> -> vector<8x8xf32>
    %cst_74 = arith.constant dense<0xFF800000> : vector<8xf32>
    %206 = vector.multi_reduction <maximumf>, %205, %cst_74 [1] : vector<8x8xf32> to vector<8xf32>
    %207 = vector.shape_cast %206 : vector<8xf32> to vector<8x1xf32>
    %208 = vector.broadcast %207 : vector<8x1xf32> to vector<8x8xf32>
    %209 = arith.subf %205, %208 : vector<8x8xf32>
    %210 = math.exp %209 : vector<8x8xf32>
    %cst_75 = arith.constant dense<0.000000e+00> : vector<8xf32>
    %211 = vector.multi_reduction <add>, %210, %cst_75 [1] : vector<8x8xf32> to vector<8xf32>
    %212 = vector.shape_cast %211 : vector<8xf32> to vector<8x1xf32>
    %213 = tpu.reciprocal %212 : vector<8x1xf32> -> vector<8x1xf32>
    %214 = vector.broadcast %213 : vector<8x1xf32> to vector<8x8xf32>
    %215 = arith.mulf %210, %214 : vector<8x8xf32>
    %cst_76 = arith.constant dense<0.000000e+00> : vector<8x8xf32>
    %216 = tpu.matmul %215, %204, %cst_76 {dimension_numbers = #tpu.dot_dimension_numbers<[1], [0], [0], [1], [0, 0, 1, 1], [], []>} : vector<8x8xf32>, vector<8x8xf32>, vector<8x8xf32> -> vector<8x8xf32>
    %217 = arith.truncf %216 : vector<8x8xf32> to vector<8x8xbf16>
    %c2_77 = arith.constant 2 : index
    %c0_78 = arith.constant 0 : index
    %c0_79 = arith.constant 0 : index
    %218 = vector.load %arg9[%c2_77, %c0_78, %c0_79] : memref<4x8x32xbf16, #tpu.memory_space<vmem>>, vector<1x8x32xbf16>
    %219 = vector.shape_cast %218 : vector<1x8x32xbf16> to vector<8x32xbf16>
    %cst_80 = arith.constant dense<0.000000e+00> : vector<8x32xf32>
    %220 = tpu.matmul %217, %219, %cst_80 {dimension_numbers = #tpu.dot_dimension_numbers<[1], [0], [0], [1], [0, 0, 1, 1], [], []>} : vector<8x8xbf16>, vector<8x32xbf16>, vector<8x32xf32> -> vector<8x32xf32>
    %221 = arith.addf %199, %220 : vector<8x32xf32>
    %222 = vector.extract_strided_slice %146 {offsets = [0, 24], sizes = [8, 8], strides = [1, 1]} : vector<8x32xf32> to vector<8x8xf32>
    %223 = arith.truncf %222 : vector<8x8xf32> to vector<8x8xbf16>
    %224 = vector.extract_strided_slice %153 {offsets = [0, 24], sizes = [8, 8], strides = [1, 1]} : vector<8x32xf32> to vector<8x8xf32>
    %225 = arith.truncf %224 : vector<8x8xf32> to vector<8x8xbf16>
    %226 = vector.extract_strided_slice %154 {offsets = [0, 24], sizes = [8, 8], strides = [1, 1]} : vector<8x32xf32> to vector<8x8xf32>
    %cst_81 = arith.constant dense<0.000000e+00> : vector<8x8xf32>
    %227 = tpu.matmul %223, %225, %cst_81 {dimension_numbers = #tpu.dot_dimension_numbers<[1], [1], [0], [0], [0, 0, 1, 0], [], []>} : vector<8x8xbf16>, vector<8x8xbf16>, vector<8x8xf32> -> vector<8x8xf32>
    %cst_82 = arith.constant dense<0xFF800000> : vector<8xf32>
    %228 = vector.multi_reduction <maximumf>, %227, %cst_82 [1] : vector<8x8xf32> to vector<8xf32>
    %229 = vector.shape_cast %228 : vector<8xf32> to vector<8x1xf32>
    %230 = vector.broadcast %229 : vector<8x1xf32> to vector<8x8xf32>
    %231 = arith.subf %227, %230 : vector<8x8xf32>
    %232 = math.exp %231 : vector<8x8xf32>
    %cst_83 = arith.constant dense<0.000000e+00> : vector<8xf32>
    %233 = vector.multi_reduction <add>, %232, %cst_83 [1] : vector<8x8xf32> to vector<8xf32>
    %234 = vector.shape_cast %233 : vector<8xf32> to vector<8x1xf32>
    %235 = tpu.reciprocal %234 : vector<8x1xf32> -> vector<8x1xf32>
    %236 = vector.broadcast %235 : vector<8x1xf32> to vector<8x8xf32>
    %237 = arith.mulf %232, %236 : vector<8x8xf32>
    %cst_84 = arith.constant dense<0.000000e+00> : vector<8x8xf32>
    %238 = tpu.matmul %237, %226, %cst_84 {dimension_numbers = #tpu.dot_dimension_numbers<[1], [0], [0], [1], [0, 0, 1, 1], [], []>} : vector<8x8xf32>, vector<8x8xf32>, vector<8x8xf32> -> vector<8x8xf32>
    %239 = arith.truncf %238 : vector<8x8xf32> to vector<8x8xbf16>
    %c3_85 = arith.constant 3 : index
    %c0_86 = arith.constant 0 : index
    %c0_87 = arith.constant 0 : index
    %240 = vector.load %arg9[%c3_85, %c0_86, %c0_87] : memref<4x8x32xbf16, #tpu.memory_space<vmem>>, vector<1x8x32xbf16>
    %241 = vector.shape_cast %240 : vector<1x8x32xbf16> to vector<8x32xbf16>
    %cst_88 = arith.constant dense<0.000000e+00> : vector<8x32xf32>
    %242 = tpu.matmul %239, %241, %cst_88 {dimension_numbers = #tpu.dot_dimension_numbers<[1], [0], [0], [1], [0, 0, 1, 1], [], []>} : vector<8x8xbf16>, vector<8x32xbf16>, vector<8x32xf32> -> vector<8x32xf32>
    %243 = arith.addf %221, %242 : vector<8x32xf32>
    %244 = vector.broadcast %7 : vector<1x32xf32> to vector<8x32xf32>
    %245 = arith.addf %243, %244 : vector<8x32xf32>
    %246 = arith.addf %139, %245 : vector<8x32xf32>
    %cst_89 = arith.constant dense<0.000000e+00> : vector<8xf32>
    %247 = vector.multi_reduction <add>, %246, %cst_89 [1] : vector<8x32xf32> to vector<8xf32>
    %248 = vector.shape_cast %247 : vector<8xf32> to vector<8x1xf32>
    %cst_90 = arith.constant 3.200000e+01 : f32
    %249 = vector.broadcast %cst_90 : f32 to vector<8x1xf32>
    %250 = arith.divf %248, %249 : vector<8x1xf32>
    %251 = vector.broadcast %250 : vector<8x1xf32> to vector<8x32xf32>
    %252 = arith.subf %246, %251 : vector<8x32xf32>
    %253 = arith.mulf %252, %252 : vector<8x32xf32>
    %cst_91 = arith.constant dense<0.000000e+00> : vector<8xf32>
    %254 = vector.multi_reduction <add>, %253, %cst_91 [1] : vector<8x32xf32> to vector<8xf32>
    %255 = vector.shape_cast %254 : vector<8xf32> to vector<8x1xf32>
    %cst_92 = arith.constant 3.200000e+01 : f32
    %256 = vector.broadcast %cst_92 : f32 to vector<8x1xf32>
    %257 = arith.divf %255, %256 : vector<8x1xf32>
    %258 = vector.broadcast %250 : vector<8x1xf32> to vector<8x32xf32>
    %259 = arith.subf %246, %258 : vector<8x32xf32>
    %cst_93 = arith.constant 9.99999974E-6 : f32
    %260 = vector.broadcast %cst_93 : f32 to vector<8x1xf32>
    %261 = arith.addf %257, %260 : vector<8x1xf32>
    %262 = math.rsqrt %261 : vector<8x1xf32>
    %263 = vector.broadcast %262 : vector<8x1xf32> to vector<8x32xf32>
    %264 = arith.mulf %259, %263 : vector<8x32xf32>
    %265 = vector.broadcast %11 : vector<1x32xf32> to vector<8x32xf32>
    %266 = arith.mulf %264, %265 : vector<8x32xf32>
    %267 = vector.broadcast %12 : vector<1x32xf32> to vector<8x32xf32>
    %268 = arith.addf %266, %267 : vector<8x32xf32>
    %269 = arith.truncf %268 : vector<8x32xf32> to vector<8x32xbf16>
    %c0_94 = arith.constant 0 : index
    %c0_95 = arith.constant 0 : index
    %270 = vector.load %arg10[%c0_94, %c0_95] : memref<32x128xbf16, #tpu.memory_space<vmem>>, vector<32x128xbf16>
    %cst_96 = arith.constant dense<0.000000e+00> : vector<8x128xf32>
    %271 = tpu.matmul %269, %270, %cst_96 {dimension_numbers = #tpu.dot_dimension_numbers<[1], [0], [0], [1], [0, 0, 1, 1], [], []>} : vector<8x32xbf16>, vector<32x128xbf16>, vector<8x128xf32> -> vector<8x128xf32>
    %c0_97 = arith.constant 0 : index
    %c0_98 = arith.constant 0 : index
    %272 = vector.load %arg11[%c0_97, %c0_98] : memref<1x128xf32, #tpu.memory_space<vmem>>, vector<1x128xf32>
    %273 = vector.broadcast %272 : vector<1x128xf32> to vector<8x128xf32>
    %274 = arith.addf %271, %273 : vector<8x128xf32>
    %cst_99 = arith.constant 0.000000e+00 : f32
    %275 = vector.broadcast %cst_99 : f32 to vector<8x128xf32>
    %276 = arith.maximumf %274, %275 : vector<8x128xf32>
    %277 = arith.truncf %276 : vector<8x128xf32> to vector<8x128xbf16>
    %c0_100 = arith.constant 0 : index
    %c0_101 = arith.constant 0 : index
    %278 = vector.load %arg12[%c0_100, %c0_101] : memref<128x32xbf16, #tpu.memory_space<vmem>>, vector<128x32xbf16>
    %cst_102 = arith.constant dense<0.000000e+00> : vector<8x32xf32>
    %279 = tpu.matmul %277, %278, %cst_102 {dimension_numbers = #tpu.dot_dimension_numbers<[1], [0], [0], [1], [0, 0, 1, 1], [], []>} : vector<8x128xbf16>, vector<128x32xbf16>, vector<8x32xf32> -> vector<8x32xf32>
    %280 = vector.broadcast %8 : vector<1x32xf32> to vector<8x32xf32>
    %281 = arith.addf %279, %280 : vector<8x32xf32>
    %282 = arith.addf %268, %281 : vector<8x32xf32>
    %cst_103 = arith.constant dense<0.000000e+00> : vector<8xf32>
    %283 = vector.multi_reduction <add>, %282, %cst_103 [1] : vector<8x32xf32> to vector<8xf32>
    %284 = vector.shape_cast %283 : vector<8xf32> to vector<8x1xf32>
    %cst_104 = arith.constant 3.200000e+01 : f32
    %285 = vector.broadcast %cst_104 : f32 to vector<8x1xf32>
    %286 = arith.divf %284, %285 : vector<8x1xf32>
    %287 = vector.broadcast %286 : vector<8x1xf32> to vector<8x32xf32>
    %288 = arith.subf %282, %287 : vector<8x32xf32>
    %289 = arith.mulf %288, %288 : vector<8x32xf32>
    %cst_105 = arith.constant dense<0.000000e+00> : vector<8xf32>
    %290 = vector.multi_reduction <add>, %289, %cst_105 [1] : vector<8x32xf32> to vector<8xf32>
    %291 = vector.shape_cast %290 : vector<8xf32> to vector<8x1xf32>
    %cst_106 = arith.constant 3.200000e+01 : f32
    %292 = vector.broadcast %cst_106 : f32 to vector<8x1xf32>
    %293 = arith.divf %291, %292 : vector<8x1xf32>
    %294 = vector.broadcast %286 : vector<8x1xf32> to vector<8x32xf32>
    %295 = arith.subf %282, %294 : vector<8x32xf32>
    %cst_107 = arith.constant 9.99999974E-6 : f32
    %296 = vector.broadcast %cst_107 : f32 to vector<8x1xf32>
    %297 = arith.addf %293, %296 : vector<8x1xf32>
    %298 = math.rsqrt %297 : vector<8x1xf32>
    %299 = vector.broadcast %298 : vector<8x1xf32> to vector<8x32xf32>
    %300 = arith.mulf %295, %299 : vector<8x32xf32>
    %301 = vector.broadcast %13 : vector<1x32xf32> to vector<8x32xf32>
    %302 = arith.mulf %300, %301 : vector<8x32xf32>
    %303 = vector.broadcast %14 : vector<1x32xf32> to vector<8x32xf32>
    %304 = arith.addf %302, %303 : vector<8x32xf32>
    %c0_108 = arith.constant 0 : index
    %c0_109 = arith.constant 0 : index
    %c0_110 = arith.constant 0 : index
    %305 = vector.load %arg14[%c0_108, %c0_109, %c0_110] : memref<1x8x32xf32, #tpu.memory_space<vmem>>, vector<1x8x32xf32>
    %306 = vector.shape_cast %305 : vector<1x8x32xf32> to vector<8x32xf32>
    %307 = vector.shape_cast %304 : vector<8x32xf32> to vector<1x8x32xf32>
    tpu.vector_store %arg14[%c0_108, %c0_109, %c0_110], %307 {strides = array<i32>} : memref<1x8x32xf32, #tpu.memory_space<vmem>>, vector<1x8x32xf32>,
    return
  }
  func.func @transform_0(%arg0: i32) -> (i32, i32, i32) {
    %c0_i32 = arith.constant 0 : i32
    %c0_i32_0 = arith.constant 0 : i32
    %c0_i32_1 = arith.constant 0 : i32
    return %arg0, %c0_i32, %c0_i32_0 : i32, i32, i32
  }
  func.func @transform_1(%arg0: i32) -> (i32, i32, i32) {
    %c0_i32 = arith.constant 0 : i32
    %c0_i32_0 = arith.constant 0 : i32
    %c0_i32_1 = arith.constant 0 : i32
    return %arg0, %c0_i32, %c0_i32_0 : i32, i32, i32
  }
  func.func @transform_2(%arg0: i32) -> (i32, i32) {
    %c0_i32 = arith.constant 0 : i32
    %c0_i32_0 = arith.constant 0 : i32
    %c0_i32_1 = arith.constant 0 : i32
    return %c0_i32, %c0_i32_0 : i32, i32
  }
  func.func @transform_3(%arg0: i32) -> (i32, i32) {
    %c0_i32 = arith.constant 0 : i32
    %c0_i32_0 = arith.constant 0 : i32
    %c0_i32_1 = arith.constant 0 : i32
    return %c0_i32, %c0_i32_0 : i32, i32
  }
  func.func @transform_4(%arg0: i32) -> (i32, i32, i32) {
    %c0_i32 = arith.constant 0 : i32
    %c0_i32_0 = arith.constant 0 : i32
    %c0_i32_1 = arith.constant 0 : i32
    %c0_i32_2 = arith.constant 0 : i32
    return %c0_i32, %c0_i32_0, %c0_i32_1 : i32, i32, i32
  }
  func.func @transform_5(%arg0: i32) -> (i32, i32) {
    %c0_i32 = arith.constant 0 : i32
    %c0_i32_0 = arith.constant 0 : i32
    %c0_i32_1 = arith.constant 0 : i32
    return %c0_i32, %c0_i32_0 : i32, i32
  }
  func.func @transform_6(%arg0: i32) -> (i32, i32) {
    %c0_i32 = arith.constant 0 : i32
    %c0_i32_0 = arith.constant 0 : i32
    %c0_i32_1 = arith.constant 0 : i32
    return %c0_i32, %c0_i32_0 : i32, i32
  }
  func.func @transform_7(%arg0: i32) -> (i32, i32) {
    %c0_i32 = arith.constant 0 : i32
    %c0_i32_0 = arith.constant 0 : i32
    %c0_i32_1 = arith.constant 0 : i32
    return %c0_i32, %c0_i32_0 : i32, i32
  }
  func.func @transform_8(%arg0: i32) -> (i32, i32, i32) {
    %c0_i32 = arith.constant 0 : i32
    %c0_i32_0 = arith.constant 0 : i32
    %c0_i32_1 = arith.constant 0 : i32
    %c0_i32_2 = arith.constant 0 : i32
    return %c0_i32, %c0_i32_0, %c0_i32_1 : i32, i32, i32
  }
  func.func @transform_9(%arg0: i32) -> (i32, i32) {
    %c0_i32 = arith.constant 0 : i32
    %c0_i32_0 = arith.constant 0 : i32
    %c0_i32_1 = arith.constant 0 : i32
    return %c0_i32, %c0_i32_0 : i32, i32
  }
  func.func @transform_10(%arg0: i32) -> (i32, i32) {
    %c0_i32 = arith.constant 0 : i32
    %c0_i32_0 = arith.constant 0 : i32
    %c0_i32_1 = arith.constant 0 : i32
    return %c0_i32, %c0_i32_0 : i32, i32
  }
  func.func @transform_11(%arg0: i32) -> (i32, i32) {
    %c0_i32 = arith.constant 0 : i32
    %c0_i32_0 = arith.constant 0 : i32
    %c0_i32_1 = arith.constant 0 : i32
    return %c0_i32, %c0_i32_0 : i32, i32
  }
  func.func @transform_12(%arg0: i32) -> (i32, i32) {
    %c0_i32 = arith.constant 0 : i32
    %c0_i32_0 = arith.constant 0 : i32
    %c0_i32_1 = arith.constant 0 : i32
    return %c0_i32, %c0_i32_0 : i32, i32
  }
  func.func @transform_13(%arg0: i32) -> (i32, i32, i32) {
    %c0_i32 = arith.constant 0 : i32
    %c0_i32_0 = arith.constant 0 : i32
    %c0_i32_1 = arith.constant 0 : i32
    return %arg0, %c0_i32, %c0_i32_0 : i32, i32, i32
  }
}

</mosaic_0001>

<llo_original>
// kernel: tpu_custom_call.1
$region0: #{tpu_custom_call.1}
  #allocation0 [shape = 'u32[]', space=smem, size = 0x4, offset = 0x4, fixed_abs, tag = 'smem constant byte address 0x4 - core index']
  #allocation1 [shape = 'u32[144,128]{1,0:T(1,128)}', space=vmem, size = 0x12000, scoped, tag = 'internal scratch']
  %s0 = inlined_call_operand.vmem [shape: f32[2,8,32], index: 0, kind: input, shape index: {}]
  %s1 = inlined_call_operand.vmem [shape: f32[2,8,32], index: 1, kind: input, shape index: {}]
  %s2 = inlined_call_operand.vmem [shape: bf16[32,96], index: 2, kind: input, shape index: {}]
  %s3 = inlined_call_operand.vmem [shape: f32[1,96], index: 3, kind: input, shape index: {}]
  %s4 = inlined_call_operand.vmem [shape: bf16[4,8,32], index: 4, kind: input, shape index: {}]
  %s5 = inlined_call_operand.vmem [shape: bf16[32,32], index: 5, kind: input, shape index: {}]
  %s6 = inlined_call_operand.vmem [shape: bf16[32,64], index: 6, kind: input, shape index: {}]
  %s7 = inlined_call_operand.vmem [shape: f32[1,64], index: 7, kind: input, shape index: {}]
  %s8 = inlined_call_operand.hbm [shape: bf16[4,8,32], index: 8, kind: input, shape index: {}]
  %s9 = inlined_call_operand.vmem [shape: bf16[32,128], index: 9, kind: input, shape index: {}]
  %s10 = inlined_call_operand.vmem [shape: f32[1,128], index: 10, kind: input, shape index: {}]
  %s11 = inlined_call_operand.vmem [shape: bf16[128,32], index: 11, kind: input, shape index: {}]
  %s12 = inlined_call_operand.hbm [shape: f32[10,32], index: 12, kind: input, shape index: {}]
  %s13 = inlined_call_operand.hbm [shape: f32[2,8,32], index: 13, kind: output, shape index: {}]
  %s14 = sld [smem:[#allocation0]]
  $region93: #{tpu_custom_call.1} parent=0
    _
  %s16 = ssub.s32 1, %s14
  %s17 = scalar_select 0, %s16, %s14
  $region1: #{tpu_custom_call.1} parent=0
    #allocation2 [shape = 'u8[8192]{0}', space=vmem, size = 0x2000, scoped, tag = 'input window, operand 8, single buffered']
    #allocation3 [shape = 's32[2]{0}', space=sflag, size = 0x8, scoped, tag = 'scoped memory for tpu_custom_call.1']
    #allocation4 [shape = 's32[2]{0}', space=sflag, size = 0x8, scoped, tag = 'scoped memory for tpu_custom_call.1']
    #allocation5 [shape = 'u8[8192]{0}', space=vmem, size = 0x2000, scoped, tag = 'input window, operand 12, single buffered']
    #allocation6 [shape = 's32[1]{0}', space=sflag, size = 0x4, scoped, tag = 'scoped memory for tpu_custom_call.1']
    #allocation7 [shape = 'u8[8192]{0}', space=vmem, size = 0x2000, scoped, tag = 'output window, operand 0']
    %18 = vsyncpa [#allocation3], 0
    %19 = vsyncpa [#allocation6], 0
    %20 = vsyncpa [#allocation4], 0
    %s21 = scalar_lea.sflag [#allocation4], 1
    %22 = vsyncpa %s21, 0
    loop: start=0, step=1, limit=4
    $region2: #{tpu_custom_call.1} parent=1 // loop_pre_header
      _
    $region3: #{tpu_custom_call.1} parent=1 // loop_header
      %s24 = sphi 0, %s28
      %p25 = scmp.ge.s32.totalorder %s24, 4
      %s34 = sphi 0, %s36
      %s37 = sphi 0, %s34
      %s38 = sphi 0, %s37
      %s54 = sphi 0, %s38
      %s60 = sphi 0, %s62
      %s63 = sphi 0, %s60
      %s64 = sphi 0, %s63
      %s80 = sphi 0, %s64
      %s84 = sphi 0, %s84
      %s86 = sphi 0, %s84
      %s87 = sphi 0, %s86
      %s101 = sphi 0, %s87
      %s105 = sphi 0, %s105
      %s107 = sphi 0, %s105
      %s108 = sphi 0, %s107
      %s122 = sphi 0, %s108
      %s126 = sphi 0, %s126
      %s128 = sphi 0, %s126
      %s129 = sphi 0, %s128
      %s143 = sphi 0, %s129
      %s147 = sphi 0, %s147
      %s149 = sphi 0, %s147
      %s150 = sphi 0, %s149
      %s164 = sphi 0, %s150
      %s168 = sphi 0, %s168
      %s170 = sphi 0, %s168
      %s171 = sphi 0, %s170
      %s185 = sphi 0, %s171
      %s189 = sphi 0, %s189
      %s191 = sphi 0, %s189
      %s192 = sphi 0, %s191
      %s206 = sphi 0, %s192
      %s210 = sphi 0, %s210
      %s212 = sphi 0, %s210
      %s213 = sphi 0, %s212
      %s227 = sphi 0, %s213
      %s231 = sphi 0, %s231
      %s233 = sphi 0, %s231
      %s234 = sphi 0, %s233
      %s248 = sphi 0, %s234
      %s252 = sphi 0, %s252
      %s254 = sphi 0, %s252
      %s255 = sphi 0, %s254
      %s269 = sphi 0, %s255
      %s273 = sphi 0, %s273
      %s275 = sphi 0, %s273
      %s276 = sphi 0, %s275
      %s290 = sphi 0, %s276
      %s294 = sphi 0, %s294
      %s296 = sphi 0, %s294
      %s297 = sphi 0, %s296
      %s311 = sphi 0, %s297
      %s317 = sphi 0, %s319
      %s320 = sphi 0, %s317
      %s321 = sphi 0, %s320
      %s337 = sphi 0, %s321
    $region4: #{tpu_custom_call.1} parent=1 // loop_header_branch
      %27 = sbr.rel (%p25) target = $region8
    $region5: #{tpu_custom_call.1} parent=1 // loop_body
      %s29 = ssub.s32 %s24, 1
      %s30 = ssub.s32 %s24, 2
      %s31 = sadd.s32 %s24, 1
      %s32 = ssub.s32 %s24, %s31
      %p33 = scmp.eq.s32.totalorder %s32, 0
      %s35 = sadd.s32 %s34, 1
      %s36 = scalar_select %p33, %s34, %s35
      %p39 = pneg %p33
      %p40 = scmp.eq.s32.totalorder %s24, 1
      %p41 = por %p39, %p40
      %p42 = scmp.ne.s32.totalorder %s34, %s37
      %p43 = scmp.eq.s32.totalorder %s24, 0
      %p44 = por %p42, %p43
      %p45 = scmp.ne.s32.totalorder %s34, %s37
      %p46 = scmp.eq.s32.totalorder %s29, 1
      %p47 = por %p45, %p46
      %p48 = scmp.ne.s32.totalorder %s37, %s38
      %p49 = scmp.eq.s32.totalorder %s29, 0
      %p50 = por %p48, %p49
      %p51 = scmp.ne.s32.totalorder %s37, %s38
      %p52 = scmp.eq.s32.totalorder %s30, 1
      %p53 = por %p51, %p52
      %p55 = scmp.ne.s32.totalorder %s38, %s54
      %p56 = scmp.eq.s32.totalorder %s30, 0
      %p57 = por %p55, %p56
      %s58 = ssub.s32 %s24, %s31
      %p59 = scmp.eq.s32.totalorder %s58, 0
      %s61 = sadd.s32 %s60, 1
      %s62 = scalar_select %p59, %s60, %s61
      %p65 = pneg %p59
      %p66 = scmp.eq.s32.totalorder %s24, 1
      %p67 = por %p65, %p66
      %p68 = scmp.ne.s32.totalorder %s60, %s63
      %p69 = scmp.eq.s32.totalorder %s24, 0
      %p70 = por %p68, %p69
      %p71 = scmp.ne.s32.totalorder %s60, %s63
      %p72 = scmp.eq.s32.totalorder %s29, 1
      %p73 = por %p71, %p72
      %p74 = scmp.ne.s32.totalorder %s63, %s64
      %p75 = scmp.eq.s32.totalorder %s29, 0
      %p76 = por %p74, %p75
      %p77 = scmp.ne.s32.totalorder %s63, %s64
      %p78 = scmp.eq.s32.totalorder %s30, 1
      %p79 = por %p77, %p78
      %p81 = scmp.ne.s32.totalorder %s64, %s80
      %p82 = scmp.eq.s32.totalorder %s30, 0
      %p83 = por %p81, %p82
      %s85 = sadd.s32 %s84, 1
      %p88 = scmp.eq.s32.totalorder %s24, 1
      %p89 = scmp.ne.s32.totalorder %s84, %s86
      %p90 = scmp.eq.s32.totalorder %s24, 0
      %p91 = por %p89, %p90
      %p92 = scmp.ne.s32.totalorder %s84, %s86
      %p93 = scmp.eq.s32.totalorder %s29, 1
      %p94 = por %p92, %p93
      %p95 = scmp.ne.s32.totalorder %s86, %s87
      %p96 = scmp.eq.s32.totalorder %s29, 0
      %p97 = por %p95, %p96
      %p98 = scmp.ne.s32.totalorder %s86, %s87
      %p99 = scmp.eq.s32.totalorder %s30, 1
      %p100 = por %p98, %p99
      %p102 = scmp.ne.s32.totalorder %s87, %s101
      %p103 = scmp.eq.s32.totalorder %s30, 0
      %p104 = por %p102, %p103
      %s106 = sadd.s32 %s105, 1
      %p109 = scmp.eq.s32.totalorder %s24, 1
      %p110 = scmp.ne.s32.totalorder %s105, %s107
      %p111 = scmp.eq.s32.totalorder %s24, 0
      %p112 = por %p110, %p111
      %p113 = scmp.ne.s32.totalorder %s105, %s107
      %p114 = scmp.eq.s32.totalorder %s29, 1
      %p115 = por %p113, %p114
      %p116 = scmp.ne.s32.totalorder %s107, %s108
      %p117 = scmp.eq.s32.totalorder %s29, 0
      %p118 = por %p116, %p117
      %p119 = scmp.ne.s32.totalorder %s107, %s108
      %p120 = scmp.eq.s32.totalorder %s30, 1
      %p121 = por %p119, %p120
      %p123 = scmp.ne.s32.totalorder %s108, %s122
      %p124 = scmp.eq.s32.totalorder %s30, 0
      %p125 = por %p123, %p124
      %s127 = sadd.s32 %s126, 1
      %p130 = scmp.eq.s32.totalorder %s24, 1
      %p131 = scmp.ne.s32.totalorder %s126, %s128
      %p132 = scmp.eq.s32.totalorder %s24, 0
      %p133 = por %p131, %p132
      %p134 = scmp.ne.s32.totalorder %s126, %s128
      %p135 = scmp.eq.s32.totalorder %s29, 1
      %p136 = por %p134, %p135
      %p137 = scmp.ne.s32.totalorder %s128, %s129
      %p138 = scmp.eq.s32.totalorder %s29, 0
      %p139 = por %p137, %p138
      %p140 = scmp.ne.s32.totalorder %s128, %s129
      %p141 = scmp.eq.s32.totalorder %s30, 1
      %p142 = por %p140, %p141
      %p144 = scmp.ne.s32.totalorder %s129, %s143
      %p145 = scmp.eq.s32.totalorder %s30, 0
      %p146 = por %p144, %p145
      %s148 = sadd.s32 %s147, 1
      %p151 = scmp.eq.s32.totalorder %s24, 1
      %p152 = scmp.ne.s32.totalorder %s147, %s149
      %p153 = scmp.eq.s32.totalorder %s24, 0
      %p154 = por %p152, %p153
      %p155 = scmp.ne.s32.totalorder %s147, %s149
      %p156 = scmp.eq.s32.totalorder %s29, 1
      %p157 = por %p155, %p156
      %p158 = scmp.ne.s32.totalorder %s149, %s150
      %p159 = scmp.eq.s32.totalorder %s29, 0
      %p160 = por %p158, %p159
      %p161 = scmp.ne.s32.totalorder %s149, %s150
      %p162 = scmp.eq.s32.totalorder %s30, 1
      %p163 = por %p161, %p162
      %p165 = scmp.ne.s32.totalorder %s150, %s164
      %p166 = scmp.eq.s32.totalorder %s30, 0
      %p167 = por %p165, %p166
      %s169 = sadd.s32 %s168, 1
      %p172 = scmp.eq.s32.totalorder %s24, 1
      %p173 = scmp.ne.s32.totalorder %s168, %s170
      %p174 = scmp.eq.s32.totalorder %s24, 0
      %p175 = por %p173, %p174
      %p176 = scmp.ne.s32.totalorder %s168, %s170
      %p177 = scmp.eq.s32.totalorder %s29, 1
      %p178 = por %p176, %p177
      %p179 = scmp.ne.s32.totalorder %s170, %s171
      %p180 = scmp.eq.s32.totalorder %s29, 0
      %p181 = por %p179, %p180
      %p182 = scmp.ne.s32.totalorder %s170, %s171
      %p183 = scmp.eq.s32.totalorder %s30, 1
      %p184 = por %p182, %p183
      %p186 = scmp.ne.s32.totalorder %s171, %s185
      %p187 = scmp.eq.s32.totalorder %s30, 0
      %p188 = por %p186, %p187
      %s190 = sadd.s32 %s189, 1
      %p193 = scmp.eq.s32.totalorder %s24, 1
      %p194 = scmp.ne.s32.totalorder %s189, %s191
      %p195 = scmp.eq.s32.totalorder %s24, 0
      %p196 = por %p194, %p195
      %p197 = scmp.ne.s32.totalorder %s189, %s191
      %p198 = scmp.eq.s32.totalorder %s29, 1
      %p199 = por %p197, %p198
      %p200 = scmp.ne.s32.totalorder %s191, %s192
      %p201 = scmp.eq.s32.totalorder %s29, 0
      %p202 = por %p200, %p201
      %p203 = scmp.ne.s32.totalorder %s191, %s192
      %p204 = scmp.eq.s32.totalorder %s30, 1
      %p205 = por %p203, %p204
      %p207 = scmp.ne.s32.totalorder %s192, %s206
      %p208 = scmp.eq.s32.totalorder %s30, 0
      %p209 = por %p207, %p208
      %s211 = sadd.s32 %s210, 1
      %p214 = scmp.eq.s32.totalorder %s24, 1
      %p215 = scmp.ne.s32.totalorder %s210, %s212
      %p216 = scmp.eq.s32.totalorder %s24, 0
      %p217 = por %p215, %p216
      %p218 = scmp.ne.s32.totalorder %s210, %s212
      %p219 = scmp.eq.s32.totalorder %s29, 1
      %p220 = por %p218, %p219
      %p221 = scmp.ne.s32.totalorder %s212, %s213
      %p222 = scmp.eq.s32.totalorder %s29, 0
      %p223 = por %p221, %p222
      %p224 = scmp.ne.s32.totalorder %s212, %s213
      %p225 = scmp.eq.s32.totalorder %s30, 1
      %p226 = por %p224, %p225
      %p228 = scmp.ne.s32.totalorder %s213, %s227
      %p229 = scmp.eq.s32.totalorder %s30, 0
      %p230 = por %p228, %p229
      %s232 = sadd.s32 %s231, 1
      %p235 = scmp.eq.s32.totalorder %s24, 1
      %p236 = scmp.ne.s32.totalorder %s231, %s233
      %p237 = scmp.eq.s32.totalorder %s24, 0
      %p238 = por %p236, %p237
      %p239 = scmp.ne.s32.totalorder %s231, %s233
      %p240 = scmp.eq.s32.totalorder %s29, 1
      %p241 = por %p239, %p240
      %p242 = scmp.ne.s32.totalorder %s233, %s234
      %p243 = scmp.eq.s32.totalorder %s29, 0
      %p244 = por %p242, %p243
      %p245 = scmp.ne.s32.totalorder %s233, %s234
      %p246 = scmp.eq.s32.totalorder %s30, 1
      %p247 = por %p245, %p246
      %p249 = scmp.ne.s32.totalorder %s234, %s248
      %p250 = scmp.eq.s32.totalorder %s30, 0
      %p251 = por %p249, %p250
      %s253 = sadd.s32 %s252, 1
      %p256 = scmp.eq.s32.totalorder %s24, 1
      %p257 = scmp.ne.s32.totalorder %s252, %s254
      %p258 = scmp.eq.s32.totalorder %s24, 0
      %p259 = por %p257, %p258
      %p260 = scmp.ne.s32.totalorder %s252, %s254
      %p261 = scmp.eq.s32.totalorder %s29, 1
      %p262 = por %p260, %p261
      %p263 = scmp.ne.s32.totalorder %s254, %s255
      %p264 = scmp.eq.s32.totalorder %s29, 0
      %p265 = por %p263, %p264
      %p266 = scmp.ne.s32.totalorder %s254, %s255
      %p267 = scmp.eq.s32.totalorder %s30, 1
      %p268 = por %p266, %p267
      %p270 = scmp.ne.s32.totalorder %s255, %s269
      %p271 = scmp.eq.s32.totalorder %s30, 0
      %p272 = por %p270, %p271
      %s274 = sadd.s32 %s273, 1
      %p277 = scmp.eq.s32.totalorder %s24, 1
      %p278 = scmp.ne.s32.totalorder %s273, %s275
      %p279 = scmp.eq.s32.totalorder %s24, 0
      %p280 = por %p278, %p279
      %p281 = scmp.ne.s32.totalorder %s273, %s275
      %p282 = scmp.eq.s32.totalorder %s29, 1
      %p283 = por %p281, %p282
      %p284 = scmp.ne.s32.totalorder %s275, %s276
      %p285 = scmp.eq.s32.totalorder %s29, 0
      %p286 = por %p284, %p285
      %p287 = scmp.ne.s32.totalorder %s275, %s276
      %p288 = scmp.eq.s32.totalorder %s30, 1
      %p289 = por %p287, %p288
      %p291 = scmp.ne.s32.totalorder %s276, %s290
      %p292 = scmp.eq.s32.totalorder %s30, 0
      %p293 = por %p291, %p292
      %s295 = sadd.s32 %s294, 1
      %p298 = scmp.eq.s32.totalorder %s24, 1
      %p299 = scmp.ne.s32.totalorder %s294, %s296
      %p300 = scmp.eq.s32.totalorder %s24, 0
      %p301 = por %p299, %p300
      %p302 = scmp.ne.s32.totalorder %s294, %s296
      %p303 = scmp.eq.s32.totalorder %s29, 1
      %p304 = por %p302, %p303
      %p305 = scmp.ne.s32.totalorder %s296, %s297
      %p306 = scmp.eq.s32.totalorder %s29, 0
      %p307 = por %p305, %p306
      %p308 = scmp.ne.s32.totalorder %s296, %s297
      %p309 = scmp.eq.s32.totalorder %s30, 1
      %p310 = por %p308, %p309
      %p312 = scmp.ne.s32.totalorder %s297, %s311
      %p313 = scmp.eq.s32.totalorder %s30, 0
      %p314 = por %p312, %p313
      %s315 = ssub.s32 %s24, %s31
      %p316 = scmp.eq.s32.totalorder %s315, 0
      %s318 = sadd.s32 %s317, 1
      %s319 = scalar_select %p316, %s317, %s318
      %p322 = pneg %p316
      %p323 = scmp.eq.s32.totalorder %s24, 1
      %p324 = por %p322, %p323
      %p325 = scmp.ne.s32.totalorder %s317, %s320
      %p326 = scmp.eq.s32.totalorder %s24, 0
      %p327 = por %p325, %p326
      %p328 = scmp.ne.s32.totalorder %s317, %s320
      %p329 = scmp.eq.s32.totalorder %s29, 1
      %p330 = por %p328, %p329
      %p331 = scmp.ne.s32.totalorder %s320, %s321
      %p332 = scmp.eq.s32.totalorder %s29, 0
      %p333 = por %p331, %p332
      %p334 = scmp.ne.s32.totalorder %s320, %s321
      %p335 = scmp.eq.s32.totalorder %s30, 1
      %p336 = por %p334, %p335
      %p338 = scmp.ne.s32.totalorder %s321, %s337
      %p339 = scmp.eq.s32.totalorder %s30, 0
      %p340 = por %p338, %p339
      %p341 = scmp.le.s32.totalorder 1, %s24
      %p342 = scmp.lt.s32.totalorder %s24, 3
      %p343 = pnand %p341, %p342
      %p344 = pneg %p343
      // Predicated region
      $region9: #{tpu_custom_call.1} parent=5 // pred_check
        _
      $region10: #{tpu_custom_call.1} parent=5 // pred_check_branch
        %346 = sbr.rel (%p343) target = $region12
      $region11: #{tpu_custom_call.1} parent=5 // pred_region
        %s347 = ssub.s32 %s24, 1
        // Predicated region
        $region13: #{tpu_custom_call.1} parent=11 // pred_check
          %p348 = pneg %p97
        $region14: #{tpu_custom_call.1} parent=11 // pred_check_branch
          %350 = sbr.rel (%p348) target = $region16
        $region15: #{tpu_custom_call.1} parent=11 // pred_region
          _
        $region16: #{tpu_custom_call.1} parent=11 // pred_fallthru
          _
        // Predicated region
        $region17: #{tpu_custom_call.1} parent=11 // pred_check
          %p351 = pneg %p118
        $region18: #{tpu_custom_call.1} parent=11 // pred_check_branch
          %353 = sbr.rel (%p351) target = $region20
        $region19: #{tpu_custom_call.1} parent=11 // pred_region
          _
        $region20: #{tpu_custom_call.1} parent=11 // pred_fallthru
          _
        // Predicated region
        $region21: #{tpu_custom_call.1} parent=11 // pred_check
          %p354 = pneg %p139
        $region22: #{tpu_custom_call.1} parent=11 // pred_check_branch
          %356 = sbr.rel (%p354) target = $region24
        $region23: #{tpu_custom_call.1} parent=11 // pred_region
          _
        $region24: #{tpu_custom_call.1} parent=11 // pred_fallthru
          _
        // Predicated region
        $region25: #{tpu_custom_call.1} parent=11 // pred_check
          %p357 = pneg %p160
        $region26: #{tpu_custom_call.1} parent=11 // pred_check_branch
          %359 = sbr.rel (%p357) target = $region28
        $region27: #{tpu_custom_call.1} parent=11 // pred_region
          _
        $region28: #{tpu_custom_call.1} parent=11 // pred_fallthru
          _
        // Predicated region
        $region29: #{tpu_custom_call.1} parent=11 // pred_check
          %p360 = pneg %p181
        $region30: #{tpu_custom_call.1} parent=11 // pred_check_branch
          %362 = sbr.rel (%p360) target = $region32
        $region31: #{tpu_custom_call.1} parent=11 // pred_region
          _
        $region32: #{tpu_custom_call.1} parent=11 // pred_fallthru
          _
        // Predicated region
        $region33: #{tpu_custom_call.1} parent=11 // pred_check
          %p363 = pneg %p202
        $region34: #{tpu_custom_call.1} parent=11 // pred_check_branch
          %365 = sbr.rel (%p363) target = $region36
        $region35: #{tpu_custom_call.1} parent=11 // pred_region
          _
        $region36: #{tpu_custom_call.1} parent=11 // pred_fallthru
          _
        // Predicated region
        $region37: #{tpu_custom_call.1} parent=11 // pred_check
          %p366 = pneg %p223
        $region38: #{tpu_custom_call.1} parent=11 // pred_check_branch
          %368 = sbr.rel (%p366) target = $region40
        $region39: #{tpu_custom_call.1} parent=11 // pred_region
          %s370 = ssub.s32 256, 256
          %371 = vsyncadd [#allocation3], %s370
          %s372 = sshll.u32 [#allocation2], 4
          %s373 = int_to_ptr.vmem [resolvable:$true] %s372
          %378 = dma.hbm_to_vmem [thread:$0]  %s8, 256, %s373, [#allocation3], 64, 64, 4
        $region40: #{tpu_custom_call.1} parent=11 // pred_fallthru
          _
        // Predicated region
        $region41: #{tpu_custom_call.1} parent=11 // pred_check
          %p379 = pneg %p244
        $region42: #{tpu_custom_call.1} parent=11 // pred_check_branch
          %381 = sbr.rel (%p379) target = $region44
        $region43: #{tpu_custom_call.1} parent=11 // pred_region
          _
        $region44: #{tpu_custom_call.1} parent=11 // pred_fallthru
          _
        // Predicated region
        $region45: #{tpu_custom_call.1} parent=11 // pred_check
          %p382 = pneg %p265
        $region46: #{tpu_custom_call.1} parent=11 // pred_check_branch
          %384 = sbr.rel (%p382) target = $region48
        $region47: #{tpu_custom_call.1} parent=11 // pred_region
          _
        $region48: #{tpu_custom_call.1} parent=11 // pred_fallthru
          _
        // Predicated region
        $region49: #{tpu_custom_call.1} parent=11 // pred_check
          %p385 = pneg %p286
        $region50: #{tpu_custom_call.1} parent=11 // pred_check_branch
          %387 = sbr.rel (%p385) target = $region52
        $region51: #{tpu_custom_call.1} parent=11 // pred_region
          _
        $region52: #{tpu_custom_call.1} parent=11 // pred_fallthru
          _
        // Predicated region
        $region53: #{tpu_custom_call.1} parent=11 // pred_check
          %p388 = pneg %p307
        $region54: #{tpu_custom_call.1} parent=11 // pred_check_branch
          %390 = sbr.rel (%p388) target = $region56
        $region55: #{tpu_custom_call.1} parent=11 // pred_region
          %s392 = ssub.s32 256, 256
          %393 = vsyncadd [#allocation6], %s392
          %s394 = sshll.u32 [#allocation5], 4
          %s395 = int_to_ptr.vmem [resolvable:$true] %s394
          %400 = dma.hbm_to_vmem [thread:$0]  %s12, 256, %s395, [#allocation6], 128, 128, 8
        $region56: #{tpu_custom_call.1} parent=11 // pred_fallthru
          _
      $region12: #{tpu_custom_call.1} parent=5 // pred_fallthru
        _
      %p401 = scmp.lt.s32.totalorder %s24, 2
      // Predicated region
      $region57: #{tpu_custom_call.1} parent=5 // pred_check
        %p402 = pneg %p401
      $region58: #{tpu_custom_call.1} parent=5 // pred_check_branch
        %404 = sbr.rel (%p402) target = $region60
      $region59: #{tpu_custom_call.1} parent=5 // pred_region
        // Predicated region
        $region61: #{tpu_custom_call.1} parent=59 // pred_check
          %p405 = pneg %p44
        $region62: #{tpu_custom_call.1} parent=59 // pred_check_branch
          %407 = sbr.rel (%p405) target = $region64
        $region63: #{tpu_custom_call.1} parent=59 // pred_region
          %p408 = scmp.lt.s32.totalorder %s24, 1
          %s409 = scalar_select %p408, %s24, 1
          %s410 = smul.addr %s409, 8
          %s411 = scalar_lea.vmem %s0, %s410
        $region64: #{tpu_custom_call.1} parent=59 // pred_fallthru
          _
        // Predicated region
        $region65: #{tpu_custom_call.1} parent=59 // pred_check
          %p412 = pneg %p70
        $region66: #{tpu_custom_call.1} parent=59 // pred_check_branch
          %414 = sbr.rel (%p412) target = $region68
        $region67: #{tpu_custom_call.1} parent=59 // pred_region
          %p415 = scmp.lt.s32.totalorder %s24, 1
          %s416 = scalar_select %p415, %s24, 1
          %s417 = smul.addr %s416, 8
          %s418 = scalar_lea.vmem %s1, %s417
        $region68: #{tpu_custom_call.1} parent=59 // pred_fallthru
          _
      $region60: #{tpu_custom_call.1} parent=5 // pred_fallthru
        _
      %p419 = scmp.le.s32.totalorder 1, %s24
      %p420 = scmp.lt.s32.totalorder %s24, 3
      %p421 = pnand %p419, %p420
      %p422 = pneg %p421
      // Predicated region
      $region69: #{tpu_custom_call.1} parent=5 // pred_check
        _
      $region70: #{tpu_custom_call.1} parent=5 // pred_check_branch
        %424 = sbr.rel (%p421) target = $region72
      $region71: #{tpu_custom_call.1} parent=5 // pred_region
        %s425 = ssub.s32 %s24, 1
        // Predicated region
        $region73: #{tpu_custom_call.1} parent=71 // pred_check
          %p426 = pneg %p223
        $region74: #{tpu_custom_call.1} parent=71 // pred_check_branch
          %428 = sbr.rel (%p426) target = $region76
        $region75: #{tpu_custom_call.1} parent=71 // pred_region
          %429 = dma.done [#allocation3], 256
        $region76: #{tpu_custom_call.1} parent=71 // pred_fallthru
          _
        // Predicated region
        $region77: #{tpu_custom_call.1} parent=71 // pred_check
          %p430 = pneg %p307
        $region78: #{tpu_custom_call.1} parent=71 // pred_check_branch
          %432 = sbr.rel (%p430) target = $region80
        $region79: #{tpu_custom_call.1} parent=71 // pred_region
          %433 = dma.done [#allocation6], 256
        $region80: #{tpu_custom_call.1} parent=71 // pred_fallthru
          _
        %p434 = scmp.lt.s32.totalorder %s29, 1
        %s435 = scalar_select %p434, %s29, 1
        %s436 = smul.addr %s435, 8
        %s437 = scalar_lea.vmem %s0, %s436
        %p438 = pneg %p50
        %p439 = pneg %p47
        %p440 = scmp.lt.s32.totalorder %s29, 1
        %s441 = scalar_select %p440, %s29, 1
        %s442 = smul.addr %s441, 8
        %s443 = scalar_lea.vmem %s1, %s442
        %p444 = pneg %p76
        %p445 = pneg %p73
        %p446 = pneg %p97
        %p447 = pneg %p94
        %p448 = pneg %p118
        %p449 = pneg %p115
        %p450 = pneg %p139
        %p451 = pneg %p136
        %p452 = pneg %p160
        %p453 = pneg %p157
        %p454 = pneg %p181
        %p455 = pneg %p178
        %p456 = pneg %p202
        %p457 = pneg %p199
        %p458 = pneg %p223
        %p459 = pneg %p220
        %p460 = pneg %p244
        %p461 = pneg %p241
        %p462 = pneg %p265
        %p463 = pneg %p262
        %p464 = pneg %p286
        %p465 = pneg %p283
        %p466 = pneg %p307
        %p467 = pneg %p304
        %p468 = pneg %p333
        %p469 = pneg %p330
        %s470 = sand.u32 %s320, 1
        %s471 = scalar_lea.sflag [#allocation4], %s470
        %s472 = sand.u32 %s320, 1
        %s473 = smul.addr %s472, 8
        %s474 = scalar_lea.vmem [#allocation7], %s473
        %p475 = scmp.lt.s32.totalorder %s29, 1
        %s476 = scalar_select %p475, %s29, 1
        %s477 = smul.addr %s476, 8
        %s478 = scalar_lea.vmem %s0, %s477
        %p479 = scmp.lt.s32.totalorder %s29, 1
        %s480 = scalar_select %p479, %s29, 1
        %s481 = smul.addr %s480, 8
        %s482 = scalar_lea.vmem %s1, %s481
        %v484 = vld [vmem:[%s478] sm:$0xff]
        %v485 = vld [vmem:[%s482] sm:$0xff]
        %v486 = vld [vmem:[#allocation5] sm:$0xff]
        %v487 = vld [vmem:[#allocation5 + $0x8] sm:$0x3]
        %v488 = vpack.c.bf16 %v484, %v484
        %v489 = vld [vmem:[%s2] sm:$0xf]
        %v490 = vld [vmem:[%s2 + $0x4] sm:$0xf]
        %v491 = vld [vmem:[%s2 + $0x8] sm:$0xf]
        %v492 = vld [vmem:[%s2 + $0xc] sm:$0xf]
        %v493 = vld [vmem:[%s3] sm:$0x1]
        %v495 = vlaneseq
        %v496 = vshrl.u32 %v495, 7
        %v497 = vsub.s32 0, %v496
        %v498 = vrot.slane %v493, %v497
        %v504 = vunpack.c.l.b16 %v489
        %v505 = vunpack.c.l.b16 %v490
        %v506 = vunpack.c.l.b16 %v491
        %v507 = vunpack.c.l.b16 %v492
        %v508 = vpack.c.b16 %v505, %v504
        %v509 = vpack.c.b16 %v507, %v506
        %vm512 = vcmask 261120
        %v514 = vsel %vm512, %v488, 0
        %516 = vmatprep.subr.bf16.mxu0 0
        %517 = vmatpush1.bf16.msra.mxu0 %v508
        %518 = vmatprep.subr.bf16.mxu0 0
        %519 = vmatpush1.bf16.msra.mxu0 %v509
        %520 = vmatprep.subr.bf16.mxu0 0
        %521 = vmatpush1.bf16.msra.mxu0 0
        %522 = vmatprep.subr.bf16.mxu0 0
        %523 = vmatpush1.bf16.msra.mxu0 0
        %524 = vmatprep.subr.bf16.mxu0 0
        %525 = vmatpush1.bf16.msra.mxu0 0
        %526 = vmatprep.subr.bf16.mxu0 0
        %527 = vmatpush1.bf16.msra.mxu0 0
        %528 = vmatprep.subr.bf16.mxu0 0
        %529 = vmatpush1.bf16.msra.mxu0 0
        %530 = vmatprep.subr.bf16.mxu0 0
        %531 = vmatpush1.bf16.msra.mxu0 0
        %532 = vmatprep.subr.bf16.mxu0 0
        %533 = vmatpush1.bf16.msra.mxu0 0
        %534 = vmatprep.subr.bf16.mxu0 0
        %535 = vmatpush1.bf16.msra.mxu0 0
        %536 = vmatprep.subr.bf16.mxu0 0
        %537 = vmatpush1.bf16.msra.mxu0 0
        %538 = vmatprep.subr.bf16.mxu0 0
        %539 = vmatpush1.bf16.msra.mxu0 0
        %540 = vmatprep.subr.bf16.mxu0 0
        %541 = vmatpush1.bf16.msra.mxu0 0
        %542 = vmatprep.subr.bf16.mxu0 0
        %543 = vmatpush1.bf16.msra.mxu0 0
        %544 = vmatprep.subr.bf16.mxu0 0
        %545 = vmatpush1.bf16.msra.mxu0 0
        %546 = vmatprep.subr.bf16.mxu0 0
        %547 = vmatpush1.bf16.msra.mxu0 0
        %548 = vmatprep.mubr.bf16.mxu0 0
        %549 = vmatmul.mubr.bf16.gmra.mrb[0].mxu0 %v514
        %v550 = vpop.f32.mrb[0].mxu0
        %v551 = vadd.f32 %v498, %v550
        %v552 = vpop.f32.mrb[0].mxu0
        %v553 = vpop.f32.mrb[0].mxu0
        %v554 = vpop.f32.mrb[0].mxu0
        %555 = vdwg.mxu0
        %v556 = vmul.f32 %v551, 0.35355338
        %v557 = vpack.c.bf16 %v556, %v556
        %v558 = vpack.c.bf16 %v551, %v551
        %560 = vrot.lane.b32.xlu0 %v558, 96
        %v561 = vpop.permute.xlu0 %560
        %vm562 = vcmask 64512
        %v564 = vsel %vm562, %v557, 0
        %v567 = vsel %vm562, %v561, 0
        %569 = vmatprep.subr.bf16.mxu0 0
        %570 = vmatpush1.bf16.xpose.msra.mxu0 %v567
        %571 = vmatprep.subr.bf16.mxu0 0
        %572 = vmatpush1.bf16.xpose.msra.mxu0 0
        %573 = vmatprep.subr.bf16.mxu0 0
        %574 = vmatpush1.bf16.xpose.msra.mxu0 0
        %575 = vmatprep.subr.bf16.mxu0 0
        %576 = vmatpush1.bf16.xpose.msra.mxu0 0
        %577 = vmatprep.subr.bf16.mxu0 0
        %578 = vmatpush1.bf16.xpose.msra.mxu0 0
        %579 = vmatprep.subr.bf16.mxu0 0
        %580 = vmatpush1.bf16.xpose.msra.mxu0 0
        %581 = vmatprep.subr.bf16.mxu0 0
        %582 = vmatpush1.bf16.xpose.msra.mxu0 0
        %583 = vmatprep.subr.bf16.mxu0 0
        %584 = vmatpush1.bf16.xpose.msra.mxu0 0
        %585 = vmatprep.subr.bf16.mxu0 0
        %586 = vmatpush1.bf16.xpose.msra.mxu0 0
        %587 = vmatprep.subr.bf16.mxu0 0
        %588 = vmatpush1.bf16.xpose.msra.mxu0 0
        %589 = vmatprep.subr.bf16.mxu0 0
        %590 = vmatpush1.bf16.xpose.msra.mxu0 0
        %591 = vmatprep.subr.bf16.mxu0 0
        %592 = vmatpush1.bf16.xpose.msra.mxu0 0
        %593 = vmatprep.subr.bf16.mxu0 0
        %594 = vmatpush1.bf16.xpose.msra.mxu0 0
        %595 = vmatprep.subr.bf16.mxu0 0
        %596 = vmatpush1.bf16.xpose.msra.mxu0 0
        %597 = vmatprep.subr.bf16.mxu0 0
        %598 = vmatpush1.bf16.xpose.msra.mxu0 0
        %599 = vmatprep.subr.bf16.mxu0 0
        %600 = vmatpush1.bf16.xpose.msra.mxu0 0
        %601 = vmatprep.mubr.bf16.mxu0 0
        %602 = vmatmul.mubr.bf16.gmra.mrb[0].mxu0 %v564
        %v603 = vpop.f32.mrb[0].mxu0
        %v604 = vadd.f32 0.0, %v603
        %v605 = vpop.f32.mrb[0].mxu0
        %v606 = vpop.f32.mrb[0].mxu0
        %v607 = vpop.f32.mrb[0].mxu0
        %608 = vdwg.mxu0
        %v609 = vsel %vm562, %v604, -inf
        %610 = vmax.xlane.f32.xlu0 %v609
        %v611 = vpop.xlane.xlu0 %610
        %v612 = vsub.f32 %v604, %v611
        %v613 = vmul.f32 %v612, 1.442695
        %v614 = vpow.pop %v613
        %v615 = vsel %vm562, %v614, 0.0
        %616 = vadd.xlane.f32.xlu0 %v615
        %v617 = vpop.xlane.xlu0 %616
        %v618 = vrcp.pop %v617
        %v619 = vmul.f32 %v614, %v618
        %621 = vrot.lane.b32.xlu0 %v551, 64
        %v622 = vpop.permute.xlu0 %621
        %v625 = vsel %vm562, %v619, 0
        %627 = vmatprep.subr.mxu0 0.0
        %628 = vmatpush1.msra.mxu0 %v622
        %629 = vmatprep.subr.mxu0 0.0
        %630 = vmatpush1.msra.mxu0 0.0
        %631 = vmatprep.subr.mxu0 0.0
        %632 = vmatpush1.msra.mxu0 0.0
        %633 = vmatprep.subr.mxu0 0.0
        %634 = vmatpush1.msra.mxu0 0.0
        %635 = vmatprep.subr.mxu0 0.0
        %636 = vmatpush1.msra.mxu0 0.0
        %637 = vmatprep.subr.mxu0 0.0
        %638 = vmatpush1.msra.mxu0 0.0
        %639 = vmatprep.subr.mxu0 0.0
        %640 = vmatpush1.msra.mxu0 0.0
        %641 = vmatprep.subr.mxu0 0.0
        %642 = vmatpush1.msra.mxu0 0.0
        %643 = vmatprep.subr.mxu0 0.0
        %644 = vmatpush1.msra.mxu0 0.0
        %645 = vmatprep.subr.mxu0 0.0
        %646 = vmatpush1.msra.mxu0 0.0
        %647 = vmatprep.subr.mxu0 0.0
        %648 = vmatpush1.msra.mxu0 0.0
        %649 = vmatprep.subr.mxu0 0.0
        %650 = vmatpush1.msra.mxu0 0.0
        %651 = vmatprep.subr.mxu0 0.0
        %652 = vmatpush1.msra.mxu0 0.0
        %653 = vmatprep.subr.mxu0 0.0
        %654 = vmatpush1.msra.mxu0 0.0
        %655 = vmatprep.subr.mxu0 0.0
        %656 = vmatpush1.msra.mxu0 0.0
        %657 = vmatprep.subr.mxu0 0.0
        %658 = vmatpush1.msra.mxu0 0.0
        %659 = vmatprep.subr.mxu0 0.0
        %660 = vmatpush1.msra.mxu0 0.0
        %661 = vmatprep.subr.mxu0 0.0
        %662 = vmatpush1.msra.mxu0 0.0
        %663 = vmatprep.subr.mxu0 0.0
        %664 = vmatpush1.msra.mxu0 0.0
        %665 = vmatprep.subr.mxu0 0.0
        %666 = vmatpush1.msra.mxu0 0.0
        %667 = vmatprep.subr.mxu0 0.0
        %668 = vmatpush1.msra.mxu0 0.0
        %669 = vmatprep.subr.mxu0 0.0
        %670 = vmatpush1.msra.mxu0 0.0
        %671 = vmatprep.subr.mxu0 0.0
        %672 = vmatpush1.msra.mxu0 0.0
        %673 = vmatprep.subr.mxu0 0.0
        %674 = vmatpush1.msra.mxu0 0.0
        %675 = vmatprep.subr.mxu0 0.0
        %676 = vmatpush1.msra.mxu0 0.0
        %677 = vmatprep.subr.mxu0 0.0
        %678 = vmatpush1.msra.mxu0 0.0
        %679 = vmatprep.subr.mxu0 0.0
        %680 = vmatpush1.msra.mxu0 0.0
        %681 = vmatprep.subr.mxu0 0.0
        %682 = vmatpush1.msra.mxu0 0.0
        %683 = vmatprep.subr.mxu0 0.0
        %684 = vmatpush1.msra.mxu0 0.0
        %685 = vmatprep.subr.mxu0 0.0
        %686 = vmatpush1.msra.mxu0 0.0
        %687 = vmatprep.subr.mxu0 0.0
        %688 = vmatpush1.msra.mxu0 0.0
        %689 = vmatprep.subr.mxu0 0.0
        %690 = vmatpush1.msra.mxu0 0.0
        %691 = vmatprep.mubr.f32.mxu0 0.0
        %692 = vmatmul.mubr.f32.gmra.mrb[0].mxu0 %v625
        %v693 = vpop.f32.mrb[0].mxu0
        %v694 = vadd.f32 0.0, %v693
        %v695 = vpop.f32.mrb[0].mxu0
        %696 = vdwg.mxu0
        %v697 = vpack.c.bf16 %v694, %v694
        %v698 = vld [vmem:[%s4] sm:$0xf]
        %700 = vrot.lane.b32.xlu0 %v557, 120
        %v701 = vpop.permute.xlu0 %700
        %702 = vrot.lane.b32.xlu0 %v558, 88
        %v703 = vpop.permute.xlu0 %702
        %v705 = vsel %vm562, %v701, 0
        %v708 = vsel %vm562, %v703, 0
        %710 = vmatprep.subr.bf16.mxu0 0
        %711 = vmatpush1.bf16.xpose.msra.mxu0 %v708
        %712 = vmatprep.subr.bf16.mxu0 0
        %713 = vmatpush1.bf16.xpose.msra.mxu0 0
        %714 = vmatprep.subr.bf16.mxu0 0
        %715 = vmatpush1.bf16.xpose.msra.mxu0 0
        %716 = vmatprep.subr.bf16.mxu0 0
        %717 = vmatpush1.bf16.xpose.msra.mxu0 0
        %718 = vmatprep.subr.bf16.mxu0 0
        %719 = vmatpush1.bf16.xpose.msra.mxu0 0
        %720 = vmatprep.subr.bf16.mxu0 0
        %721 = vmatpush1.bf16.xpose.msra.mxu0 0
        %722 = vmatprep.subr.bf16.mxu0 0
        %723 = vmatpush1.bf16.xpose.msra.mxu0 0
        %724 = vmatprep.subr.bf16.mxu0 0
        %725 = vmatpush1.bf16.xpose.msra.mxu0 0
        %726 = vmatprep.subr.bf16.mxu0 0
        %727 = vmatpush1.bf16.xpose.msra.mxu0 0
        %728 = vmatprep.subr.bf16.mxu0 0
        %729 = vmatpush1.bf16.xpose.msra.mxu0 0
        %730 = vmatprep.subr.bf16.mxu0 0
        %731 = vmatpush1.bf16.xpose.msra.mxu0 0
        %732 = vmatprep.subr.bf16.mxu0 0
        %733 = vmatpush1.bf16.xpose.msra.mxu0 0
        %734 = vmatprep.subr.bf16.mxu0 0
        %735 = vmatpush1.bf16.xpose.msra.mxu0 0
        %736 = vmatprep.subr.bf16.mxu0 0
        %737 = vmatpush1.bf16.xpose.msra.mxu0 0
        %738 = vmatprep.subr.bf16.mxu0 0
        %739 = vmatpush1.bf16.xpose.msra.mxu0 0
        %740 = vmatprep.subr.bf16.mxu0 0
        %741 = vmatpush1.bf16.xpose.msra.mxu0 0
        %742 = vmatprep.mubr.bf16.mxu0 0
        %743 = vmatmul.mubr.bf16.gmra.mrb[0].mxu0 %v705
        %v744 = vpop.f32.mrb[0].mxu0
        %v745 = vadd.f32 0.0, %v744
        %v746 = vpop.f32.mrb[0].mxu0
        %v747 = vpop.f32.mrb[0].mxu0
        %v748 = vpop.f32.mrb[0].mxu0
        %749 = vdwg.mxu0
        %v750 = vsel %vm562, %v745, -inf
        %751 = vmax.xlane.f32.xlu0 %v750
        %v752 = vpop.xlane.xlu0 %751
        %v753 = vsub.f32 %v745, %v752
        %v754 = vmul.f32 %v753, 1.442695
        %v755 = vpow.pop %v754
        %v756 = vsel %vm562, %v755, 0.0
        %757 = vadd.xlane.f32.xlu0 %v756
        %v758 = vpop.xlane.xlu0 %757
        %v759 = vrcp.pop %v758
        %v760 = vmul.f32 %v755, %v759
        %761 = vrot.lane.b32.xlu0 %v551, 56
        %v762 = vpop.permute.xlu0 %761
        %v765 = vsel %vm562, %v760, 0
        %767 = vmatprep.subr.mxu0 0.0
        %768 = vmatpush1.msra.mxu0 %v762
        %769 = vmatprep.subr.mxu0 0.0
        %770 = vmatpush1.msra.mxu0 0.0
        %771 = vmatprep.subr.mxu0 0.0
        %772 = vmatpush1.msra.mxu0 0.0
        %773 = vmatprep.subr.mxu0 0.0
        %774 = vmatpush1.msra.mxu0 0.0
        %775 = vmatprep.subr.mxu0 0.0
        %776 = vmatpush1.msra.mxu0 0.0
        %777 = vmatprep.subr.mxu0 0.0
        %778 = vmatpush1.msra.mxu0 0.0
        %779 = vmatprep.subr.mxu0 0.0
        %780 = vmatpush1.msra.mxu0 0.0
        %781 = vmatprep.subr.mxu0 0.0
        %782 = vmatpush1.msra.mxu0 0.0
        %783 = vmatprep.subr.mxu0 0.0
        %784 = vmatpush1.msra.mxu0 0.0
        %785 = vmatprep.subr.mxu0 0.0
        %786 = vmatpush1.msra.mxu0 0.0
        %787 = vmatprep.subr.mxu0 0.0
        %788 = vmatpush1.msra.mxu0 0.0
        %789 = vmatprep.subr.mxu0 0.0
        %790 = vmatpush1.msra.mxu0 0.0
        %791 = vmatprep.subr.mxu0 0.0
        %792 = vmatpush1.msra.mxu0 0.0
        %793 = vmatprep.subr.mxu0 0.0
        %794 = vmatpush1.msra.mxu0 0.0
        %795 = vmatprep.subr.mxu0 0.0
        %796 = vmatpush1.msra.mxu0 0.0
        %797 = vmatprep.subr.mxu0 0.0
        %798 = vmatpush1.msra.mxu0 0.0
        %799 = vmatprep.subr.mxu0 0.0
        %800 = vmatpush1.msra.mxu0 0.0
        %801 = vmatprep.subr.mxu0 0.0
        %802 = vmatpush1.msra.mxu0 0.0
        %803 = vmatprep.subr.mxu0 0.0
        %804 = vmatpush1.msra.mxu0 0.0
        %805 = vmatprep.subr.mxu0 0.0
        %806 = vmatpush1.msra.mxu0 0.0
        %807 = vmatprep.subr.mxu0 0.0
        %808 = vmatpush1.msra.mxu0 0.0
        %809 = vmatprep.subr.mxu0 0.0
        %810 = vmatpush1.msra.mxu0 0.0
        %811 = vmatprep.subr.mxu0 0.0
        %812 = vmatpush1.msra.mxu0 0.0
        %813 = vmatprep.subr.mxu0 0.0
        %814 = vmatpush1.msra.mxu0 0.0
        %815 = vmatprep.subr.mxu0 0.0
        %816 = vmatpush1.msra.mxu0 0.0
        %817 = vmatprep.subr.mxu0 0.0
        %818 = vmatpush1.msra.mxu0 0.0
        %819 = vmatprep.subr.mxu0 0.0
        %820 = vmatpush1.msra.mxu0 0.0
        %821 = vmatprep.subr.mxu0 0.0
        %822 = vmatpush1.msra.mxu0 0.0
        %823 = vmatprep.subr.mxu0 0.0
        %824 = vmatpush1.msra.mxu0 0.0
        %825 = vmatprep.subr.mxu0 0.0
        %826 = vmatpush1.msra.mxu0 0.0
        %827 = vmatprep.subr.mxu0 0.0
        %828 = vmatpush1.msra.mxu0 0.0
        %829 = vmatprep.subr.mxu0 0.0
        %830 = vmatpush1.msra.mxu0 0.0
        %831 = vmatprep.mubr.f32.mxu0 0.0
        %832 = vmatmul.mubr.f32.gmra.mrb[0].mxu0 %v765
        %v833 = vpop.f32.mrb[0].mxu0
        %v834 = vadd.f32 0.0, %v833
        %v835 = vpop.f32.mrb[0].mxu0
        %836 = vdwg.mxu0
        %v837 = vpack.c.bf16 %v834, %v834
        %s838 = scalar_lea.vmem %s4, 4
        %v839 = vld [vmem:[%s838] sm:$0xf]
        %v841 = vsel %vm562, %v837, 0
        %vm843 = vcmask 1043456
        %v845 = vsel %vm843, %v839, 0
        %847 = vmatprep.subr.bf16.mxu0 0
        %848 = vmatpush1.bf16.msra.mxu0 %v845
        %849 = vmatprep.subr.bf16.mxu0 0
        %850 = vmatpush1.bf16.msra.mxu0 0
        %851 = vmatprep.subr.bf16.mxu0 0
        %852 = vmatpush1.bf16.msra.mxu0 0
        %853 = vmatprep.subr.bf16.mxu0 0
        %854 = vmatpush1.bf16.msra.mxu0 0
        %855 = vmatprep.subr.bf16.mxu0 0
        %856 = vmatpush1.bf16.msra.mxu0 0
        %857 = vmatprep.subr.bf16.mxu0 0
        %858 = vmatpush1.bf16.msra.mxu0 0
        %859 = vmatprep.subr.bf16.mxu0 0
        %860 = vmatpush1.bf16.msra.mxu0 0
        %861 = vmatprep.subr.bf16.mxu0 0
        %862 = vmatpush1.bf16.msra.mxu0 0
        %863 = vmatprep.subr.bf16.mxu0 0
        %864 = vmatpush1.bf16.msra.mxu0 0
        %865 = vmatprep.subr.bf16.mxu0 0
        %866 = vmatpush1.bf16.msra.mxu0 0
        %867 = vmatprep.subr.bf16.mxu0 0
        %868 = vmatpush1.bf16.msra.mxu0 0
        %869 = vmatprep.subr.bf16.mxu0 0
        %870 = vmatpush1.bf16.msra.mxu0 0
        %871 = vmatprep.subr.bf16.mxu0 0
        %872 = vmatpush1.bf16.msra.mxu0 0
        %873 = vmatprep.subr.bf16.mxu0 0
        %874 = vmatpush1.bf16.msra.mxu0 0
        %875 = vmatprep.subr.bf16.mxu0 0
        %876 = vmatpush1.bf16.msra.mxu0 0
        %877 = vmatprep.subr.bf16.mxu0 0
        %878 = vmatpush1.bf16.msra.mxu0 0
        %879 = vmatprep.mubr.bf16.mxu0 0
        %880 = vmatmul.mubr.bf16.gmra.mrb[0].mxu0 %v841
        %v881 = vpop.f32.mrb[0].mxu0
        %v882 = vadd.f32 0.0, %v881
        %v883 = vpop.f32.mrb[0].mxu0
        %v884 = vpop.f32.mrb[0].mxu0
        %v885 = vpop.f32.mrb[0].mxu0
        %886 = vdwg.mxu0
        %v888 = vsel %vm562, %v697, 0
        %v891 = vsel %vm843, %v698, 0
        %893 = vmatprep.subr.bf16.mxu0 0
        %894 = vmatpush1.bf16.msra.mxu0 %v891
        %895 = vmatprep.subr.bf16.mxu0 0
        %896 = vmatpush1.bf16.msra.mxu0 0
        %897 = vmatprep.subr.bf16.mxu0 0
        %898 = vmatpush1.bf16.msra.mxu0 0
        %899 = vmatprep.subr.bf16.mxu0 0
        %900 = vmatpush1.bf16.msra.mxu0 0
        %901 = vmatprep.subr.bf16.mxu0 0
        %902 = vmatpush1.bf16.msra.mxu0 0
        %903 = vmatprep.subr.bf16.mxu0 0
        %904 = vmatpush1.bf16.msra.mxu0 0
        %905 = vmatprep.subr.bf16.mxu0 0
        %906 = vmatpush1.bf16.msra.mxu0 0
        %907 = vmatprep.subr.bf16.mxu0 0
        %908 = vmatpush1.bf16.msra.mxu0 0
        %909 = vmatprep.subr.bf16.mxu0 0
        %910 = vmatpush1.bf16.msra.mxu0 0
        %911 = vmatprep.subr.bf16.mxu0 0
        %912 = vmatpush1.bf16.msra.mxu0 0
        %913 = vmatprep.subr.bf16.mxu0 0
        %914 = vmatpush1.bf16.msra.mxu0 0
        %915 = vmatprep.subr.bf16.mxu0 0
        %916 = vmatpush1.bf16.msra.mxu0 0
        %917 = vmatprep.subr.bf16.mxu0 0
        %918 = vmatpush1.bf16.msra.mxu0 0
        %919 = vmatprep.subr.bf16.mxu0 0
        %920 = vmatpush1.bf16.msra.mxu0 0
        %921 = vmatprep.subr.bf16.mxu0 0
        %922 = vmatpush1.bf16.msra.mxu0 0
        %923 = vmatprep.subr.bf16.mxu0 0
        %924 = vmatpush1.bf16.msra.mxu0 0
        %925 = vmatprep.mubr.bf16.mxu0 0
        %926 = vmatmul.mubr.bf16.gmra.mrb[0].mxu0 %v888
        %v927 = vpop.f32.mrb[0].mxu0
        %v928 = vadd.f32 %v882, %v927
        %v929 = vpop.f32.mrb[0].mxu0
        %v930 = vpop.f32.mrb[0].mxu0
        %v931 = vpop.f32.mrb[0].mxu0
        %932 = vdwg.mxu0
        %933 = vrot.lane.b32.xlu0 %v557, 112
        %v934 = vpop.permute.xlu0 %933
        %935 = vrot.lane.b32.xlu0 %v558, 80
        %v936 = vpop.permute.xlu0 %935
        %v938 = vsel %vm562, %v934, 0
        %v941 = vsel %vm562, %v936, 0
        %943 = vmatprep.subr.bf16.mxu0 0
        %944 = vmatpush1.bf16.xpose.msra.mxu0 %v941
        %945 = vmatprep.subr.bf16.mxu0 0
        %946 = vmatpush1.bf16.xpose.msra.mxu0 0
        %947 = vmatprep.subr.bf16.mxu0 0
        %948 = vmatpush1.bf16.xpose.msra.mxu0 0
        %949 = vmatprep.subr.bf16.mxu0 0
        %950 = vmatpush1.bf16.xpose.msra.mxu0 0
        %951 = vmatprep.subr.bf16.mxu0 0
        %952 = vmatpush1.bf16.xpose.msra.mxu0 0
        %953 = vmatprep.subr.bf16.mxu0 0
        %954 = vmatpush1.bf16.xpose.msra.mxu0 0
        %955 = vmatprep.subr.bf16.mxu0 0
        %956 = vmatpush1.bf16.xpose.msra.mxu0 0
        %957 = vmatprep.subr.bf16.mxu0 0
        %958 = vmatpush1.bf16.xpose.msra.mxu0 0
        %959 = vmatprep.subr.bf16.mxu0 0
        %960 = vmatpush1.bf16.xpose.msra.mxu0 0
        %961 = vmatprep.subr.bf16.mxu0 0
        %962 = vmatpush1.bf16.xpose.msra.mxu0 0
        %963 = vmatprep.subr.bf16.mxu0 0
        %964 = vmatpush1.bf16.xpose.msra.mxu0 0
        %965 = vmatprep.subr.bf16.mxu0 0
        %966 = vmatpush1.bf16.xpose.msra.mxu0 0
        %967 = vmatprep.subr.bf16.mxu0 0
        %968 = vmatpush1.bf16.xpose.msra.mxu0 0
        %969 = vmatprep.subr.bf16.mxu0 0
        %970 = vmatpush1.bf16.xpose.msra.mxu0 0
        %971 = vmatprep.subr.bf16.mxu0 0
        %972 = vmatpush1.bf16.xpose.msra.mxu0 0
        %973 = vmatprep.subr.bf16.mxu0 0
        %974 = vmatpush1.bf16.xpose.msra.mxu0 0
        %975 = vmatprep.mubr.bf16.mxu0 0
        %976 = vmatmul.mubr.bf16.gmra.mrb[0].mxu0 %v938
        %v977 = vpop.f32.mrb[0].mxu0
        %v978 = vadd.f32 0.0, %v977
        %v979 = vpop.f32.mrb[0].mxu0
        %v980 = vpop.f32.mrb[0].mxu0
        %v981 = vpop.f32.mrb[0].mxu0
        %982 = vdwg.mxu0
        %v983 = vsel %vm562, %v978, -inf
        %984 = vmax.xlane.f32.xlu0 %v983
        %v985 = vpop.xlane.xlu0 %984
        %v986 = vsub.f32 %v978, %v985
        %v987 = vmul.f32 %v986, 1.442695
        %v988 = vpow.pop %v987
        %v989 = vsel %vm562, %v988, 0.0
        %990 = vadd.xlane.f32.xlu0 %v989
        %v991 = vpop.xlane.xlu0 %990
        %v992 = vrcp.pop %v991
        %v993 = vmul.f32 %v988, %v992
        %994 = vrot.lane.b32.xlu0 %v551, 48
        %v995 = vpop.permute.xlu0 %994
        %v998 = vsel %vm562, %v993, 0
        %1000 = vmatprep.subr.mxu0 0.0
        %1001 = vmatpush1.msra.mxu0 %v995
        %1002 = vmatprep.subr.mxu0 0.0
        %1003 = vmatpush1.msra.mxu0 0.0
        %1004 = vmatprep.subr.mxu0 0.0
        %1005 = vmatpush1.msra.mxu0 0.0
        %1006 = vmatprep.subr.mxu0 0.0
        %1007 = vmatpush1.msra.mxu0 0.0
        %1008 = vmatprep.subr.mxu0 0.0
        %1009 = vmatpush1.msra.mxu0 0.0
        %1010 = vmatprep.subr.mxu0 0.0
        %1011 = vmatpush1.msra.mxu0 0.0
        %1012 = vmatprep.subr.mxu0 0.0
        %1013 = vmatpush1.msra.mxu0 0.0
        %1014 = vmatprep.subr.mxu0 0.0
        %1015 = vmatpush1.msra.mxu0 0.0
        %1016 = vmatprep.subr.mxu0 0.0
        %1017 = vmatpush1.msra.mxu0 0.0
        %1018 = vmatprep.subr.mxu0 0.0
        %1019 = vmatpush1.msra.mxu0 0.0
        %1020 = vmatprep.subr.mxu0 0.0
        %1021 = vmatpush1.msra.mxu0 0.0
        %1022 = vmatprep.subr.mxu0 0.0
        %1023 = vmatpush1.msra.mxu0 0.0
        %1024 = vmatprep.subr.mxu0 0.0
        %1025 = vmatpush1.msra.mxu0 0.0
        %1026 = vmatprep.subr.mxu0 0.0
        %1027 = vmatpush1.msra.mxu0 0.0
        %1028 = vmatprep.subr.mxu0 0.0
        %1029 = vmatpush1.msra.mxu0 0.0
        %1030 = vmatprep.subr.mxu0 0.0
        %1031 = vmatpush1.msra.mxu0 0.0
        %1032 = vmatprep.subr.mxu0 0.0
        %1033 = vmatpush1.msra.mxu0 0.0
        %1034 = vmatprep.subr.mxu0 0.0
        %1035 = vmatpush1.msra.mxu0 0.0
        %1036 = vmatprep.subr.mxu0 0.0
        %1037 = vmatpush1.msra.mxu0 0.0
        %1038 = vmatprep.subr.mxu0 0.0
        %1039 = vmatpush1.msra.mxu0 0.0
        %1040 = vmatprep.subr.mxu0 0.0
        %1041 = vmatpush1.msra.mxu0 0.0
        %1042 = vmatprep.subr.mxu0 0.0
        %1043 = vmatpush1.msra.mxu0 0.0
        %1044 = vmatprep.subr.mxu0 0.0
        %1045 = vmatpush1.msra.mxu0 0.0
        %1046 = vmatprep.subr.mxu0 0.0
        %1047 = vmatpush1.msra.mxu0 0.0
        %1048 = vmatprep.subr.mxu0 0.0
        %1049 = vmatpush1.msra.mxu0 0.0
        %1050 = vmatprep.subr.mxu0 0.0
        %1051 = vmatpush1.msra.mxu0 0.0
        %1052 = vmatprep.subr.mxu0 0.0
        %1053 = vmatpush1.msra.mxu0 0.0
        %1054 = vmatprep.subr.mxu0 0.0
        %1055 = vmatpush1.msra.mxu0 0.0
        %1056 = vmatprep.subr.mxu0 0.0
        %1057 = vmatpush1.msra.mxu0 0.0
        %1058 = vmatprep.subr.mxu0 0.0
        %1059 = vmatpush1.msra.mxu0 0.0
        %1060 = vmatprep.subr.mxu0 0.0
        %1061 = vmatpush1.msra.mxu0 0.0
        %1062 = vmatprep.subr.mxu0 0.0
        %1063 = vmatpush1.msra.mxu0 0.0
        %1064 = vmatprep.mubr.f32.mxu0 0.0
        %1065 = vmatmul.mubr.f32.gmra.mrb[0].mxu0 %v998
        %v1066 = vpop.f32.mrb[0].mxu0
        %v1067 = vadd.f32 0.0, %v1066
        %v1068 = vpop.f32.mrb[0].mxu0
        %1069 = vdwg.mxu0
        %v1070 = vpack.c.bf16 %v1067, %v1067
        %s1071 = scalar_lea.vmem %s4, 8
        %v1072 = vld [vmem:[%s1071] sm:$0xf]
        %v1074 = vsel %vm562, %v1070, 0
        %v1077 = vsel %vm843, %v1072, 0
        %1079 = vmatprep.subr.bf16.mxu0 0
        %1080 = vmatpush1.bf16.msra.mxu0 %v1077
        %1081 = vmatprep.subr.bf16.mxu0 0
        %1082 = vmatpush1.bf16.msra.mxu0 0
        %1083 = vmatprep.subr.bf16.mxu0 0
        %1084 = vmatpush1.bf16.msra.mxu0 0
        %1085 = vmatprep.subr.bf16.mxu0 0
        %1086 = vmatpush1.bf16.msra.mxu0 0
        %1087 = vmatprep.subr.bf16.mxu0 0
        %1088 = vmatpush1.bf16.msra.mxu0 0
        %1089 = vmatprep.subr.bf16.mxu0 0
        %1090 = vmatpush1.bf16.msra.mxu0 0
        %1091 = vmatprep.subr.bf16.mxu0 0
        %1092 = vmatpush1.bf16.msra.mxu0 0
        %1093 = vmatprep.subr.bf16.mxu0 0
        %1094 = vmatpush1.bf16.msra.mxu0 0
        %1095 = vmatprep.subr.bf16.mxu0 0
        %1096 = vmatpush1.bf16.msra.mxu0 0
        %1097 = vmatprep.subr.bf16.mxu0 0
        %1098 = vmatpush1.bf16.msra.mxu0 0
        %1099 = vmatprep.subr.bf16.mxu0 0
        %1100 = vmatpush1.bf16.msra.mxu0 0
        %1101 = vmatprep.subr.bf16.mxu0 0
        %1102 = vmatpush1.bf16.msra.mxu0 0
        %1103 = vmatprep.subr.bf16.mxu0 0
        %1104 = vmatpush1.bf16.msra.mxu0 0
        %1105 = vmatprep.subr.bf16.mxu0 0
        %1106 = vmatpush1.bf16.msra.mxu0 0
        %1107 = vmatprep.subr.bf16.mxu0 0
        %1108 = vmatpush1.bf16.msra.mxu0 0
        %1109 = vmatprep.subr.bf16.mxu0 0
        %1110 = vmatpush1.bf16.msra.mxu0 0
        %1111 = vmatprep.mubr.bf16.mxu0 0
        %1112 = vmatmul.mubr.bf16.gmra.mrb[0].mxu0 %v1074
        %v1113 = vpop.f32.mrb[0].mxu0
        %v1114 = vadd.f32 0.0, %v1113
        %v1115 = vpop.f32.mrb[0].mxu0
        %v1116 = vpop.f32.mrb[0].mxu0
        %v1117 = vpop.f32.mrb[0].mxu0
        %1118 = vdwg.mxu0
        %v1119 = vadd.f32 %v928, %v1114
        %1120 = vrot.lane.b32.xlu0 %v557, 104
        %v1121 = vpop.permute.xlu0 %1120
        %1122 = vrot.lane.b32.xlu0 %v558, 72
        %v1123 = vpop.permute.xlu0 %1122
        %v1125 = vsel %vm562, %v1121, 0
        %v1128 = vsel %vm562, %v1123, 0
        %1130 = vmatprep.subr.bf16.mxu0 0
        %1131 = vmatpush1.bf16.xpose.msra.mxu0 %v1128
        %1132 = vmatprep.subr.bf16.mxu0 0
        %1133 = vmatpush1.bf16.xpose.msra.mxu0 0
        %1134 = vmatprep.subr.bf16.mxu0 0
        %1135 = vmatpush1.bf16.xpose.msra.mxu0 0
        %1136 = vmatprep.subr.bf16.mxu0 0
        %1137 = vmatpush1.bf16.xpose.msra.mxu0 0
        %1138 = vmatprep.subr.bf16.mxu0 0
        %1139 = vmatpush1.bf16.xpose.msra.mxu0 0
        %1140 = vmatprep.subr.bf16.mxu0 0
        %1141 = vmatpush1.bf16.xpose.msra.mxu0 0
        %1142 = vmatprep.subr.bf16.mxu0 0
        %1143 = vmatpush1.bf16.xpose.msra.mxu0 0
        %1144 = vmatprep.subr.bf16.mxu0 0
        %1145 = vmatpush1.bf16.xpose.msra.mxu0 0
        %1146 = vmatprep.subr.bf16.mxu0 0
        %1147 = vmatpush1.bf16.xpose.msra.mxu0 0
        %1148 = vmatprep.subr.bf16.mxu0 0
        %1149 = vmatpush1.bf16.xpose.msra.mxu0 0
        %1150 = vmatprep.subr.bf16.mxu0 0
        %1151 = vmatpush1.bf16.xpose.msra.mxu0 0
        %1152 = vmatprep.subr.bf16.mxu0 0
        %1153 = vmatpush1.bf16.xpose.msra.mxu0 0
        %1154 = vmatprep.subr.bf16.mxu0 0
        %1155 = vmatpush1.bf16.xpose.msra.mxu0 0
        %1156 = vmatprep.subr.bf16.mxu0 0
        %1157 = vmatpush1.bf16.xpose.msra.mxu0 0
        %1158 = vmatprep.subr.bf16.mxu0 0
        %1159 = vmatpush1.bf16.xpose.msra.mxu0 0
        %1160 = vmatprep.subr.bf16.mxu0 0
        %1161 = vmatpush1.bf16.xpose.msra.mxu0 0
        %1162 = vmatprep.mubr.bf16.mxu0 0
        %1163 = vmatmul.mubr.bf16.gmra.mrb[0].mxu0 %v1125
        %v1164 = vpop.f32.mrb[0].mxu0
        %v1165 = vadd.f32 0.0, %v1164
        %v1166 = vpop.f32.mrb[0].mxu0
        %v1167 = vpop.f32.mrb[0].mxu0
        %v1168 = vpop.f32.mrb[0].mxu0
        %1169 = vdwg.mxu0
        %v1170 = vsel %vm562, %v1165, -inf
        %1171 = vmax.xlane.f32.xlu0 %v1170
        %v1172 = vpop.xlane.xlu0 %1171
        %v1173 = vsub.f32 %v1165, %v1172
        %v1174 = vmul.f32 %v1173, 1.442695
        %v1175 = vpow.pop %v1174
        %v1176 = vsel %vm562, %v1175, 0.0
        %1177 = vadd.xlane.f32.xlu0 %v1176
        %v1178 = vpop.xlane.xlu0 %1177
        %v1179 = vrcp.pop %v1178
        %v1180 = vmul.f32 %v1175, %v1179
        %1181 = vrot.lane.b32.xlu0 %v551, 40
        %v1182 = vpop.permute.xlu0 %1181
        %v1185 = vsel %vm562, %v1180, 0
        %1187 = vmatprep.subr.mxu0 0.0
        %1188 = vmatpush1.msra.mxu0 %v1182
        %1189 = vmatprep.subr.mxu0 0.0
        %1190 = vmatpush1.msra.mxu0 0.0
        %1191 = vmatprep.subr.mxu0 0.0
        %1192 = vmatpush1.msra.mxu0 0.0
        %1193 = vmatprep.subr.mxu0 0.0
        %1194 = vmatpush1.msra.mxu0 0.0
        %1195 = vmatprep.subr.mxu0 0.0
        %1196 = vmatpush1.msra.mxu0 0.0
        %1197 = vmatprep.subr.mxu0 0.0
        %1198 = vmatpush1.msra.mxu0 0.0
        %1199 = vmatprep.subr.mxu0 0.0
        %1200 = vmatpush1.msra.mxu0 0.0
        %1201 = vmatprep.subr.mxu0 0.0
        %1202 = vmatpush1.msra.mxu0 0.0
        %1203 = vmatprep.subr.mxu0 0.0
        %1204 = vmatpush1.msra.mxu0 0.0
        %1205 = vmatprep.subr.mxu0 0.0
        %1206 = vmatpush1.msra.mxu0 0.0
        %1207 = vmatprep.subr.mxu0 0.0
        %1208 = vmatpush1.msra.mxu0 0.0
        %1209 = vmatprep.subr.mxu0 0.0
        %1210 = vmatpush1.msra.mxu0 0.0
        %1211 = vmatprep.subr.mxu0 0.0
        %1212 = vmatpush1.msra.mxu0 0.0
        %1213 = vmatprep.subr.mxu0 0.0
        %1214 = vmatpush1.msra.mxu0 0.0
        %1215 = vmatprep.subr.mxu0 0.0
        %1216 = vmatpush1.msra.mxu0 0.0
        %1217 = vmatprep.subr.mxu0 0.0
        %1218 = vmatpush1.msra.mxu0 0.0
        %1219 = vmatprep.subr.mxu0 0.0
        %1220 = vmatpush1.msra.mxu0 0.0
        %1221 = vmatprep.subr.mxu0 0.0
        %1222 = vmatpush1.msra.mxu0 0.0
        %1223 = vmatprep.subr.mxu0 0.0
        %1224 = vmatpush1.msra.mxu0 0.0
        %1225 = vmatprep.subr.mxu0 0.0
        %1226 = vmatpush1.msra.mxu0 0.0
        %1227 = vmatprep.subr.mxu0 0.0
        %1228 = vmatpush1.msra.mxu0 0.0
        %1229 = vmatprep.subr.mxu0 0.0
        %1230 = vmatpush1.msra.mxu0 0.0
        %1231 = vmatprep.subr.mxu0 0.0
        %1232 = vmatpush1.msra.mxu0 0.0
        %1233 = vmatprep.subr.mxu0 0.0
        %1234 = vmatpush1.msra.mxu0 0.0
        %1235 = vmatprep.subr.mxu0 0.0
        %1236 = vmatpush1.msra.mxu0 0.0
        %1237 = vmatprep.subr.mxu0 0.0
        %1238 = vmatpush1.msra.mxu0 0.0
        %1239 = vmatprep.subr.mxu0 0.0
        %1240 = vmatpush1.msra.mxu0 0.0
        %1241 = vmatprep.subr.mxu0 0.0
        %1242 = vmatpush1.msra.mxu0 0.0
        %1243 = vmatprep.subr.mxu0 0.0
        %1244 = vmatpush1.msra.mxu0 0.0
        %1245 = vmatprep.subr.mxu0 0.0
        %1246 = vmatpush1.msra.mxu0 0.0
        %1247 = vmatprep.subr.mxu0 0.0
        %1248 = vmatpush1.msra.mxu0 0.0
        %1249 = vmatprep.subr.mxu0 0.0
        %1250 = vmatpush1.msra.mxu0 0.0
        %1251 = vmatprep.mubr.f32.mxu0 0.0
        %1252 = vmatmul.mubr.f32.gmra.mrb[0].mxu0 %v1185
        %v1253 = vpop.f32.mrb[0].mxu0
        %v1254 = vadd.f32 0.0, %v1253
        %v1255 = vpop.f32.mrb[0].mxu0
        %1256 = vdwg.mxu0
        %v1257 = vpack.c.bf16 %v1254, %v1254
        %s1258 = scalar_lea.vmem %s4, 12
        %v1259 = vld [vmem:[%s1258] sm:$0xf]
        %v1261 = vsel %vm562, %v1257, 0
        %v1264 = vsel %vm843, %v1259, 0
        %1266 = vmatprep.subr.bf16.mxu0 0
        %1267 = vmatpush1.bf16.msra.mxu0 %v1264
        %1268 = vmatprep.subr.bf16.mxu0 0
        %1269 = vmatpush1.bf16.msra.mxu0 0
        %1270 = vmatprep.subr.bf16.mxu0 0
        %1271 = vmatpush1.bf16.msra.mxu0 0
        %1272 = vmatprep.subr.bf16.mxu0 0
        %1273 = vmatpush1.bf16.msra.mxu0 0
        %1274 = vmatprep.subr.bf16.mxu0 0
        %1275 = vmatpush1.bf16.msra.mxu0 0
        %1276 = vmatprep.subr.bf16.mxu0 0
        %1277 = vmatpush1.bf16.msra.mxu0 0
        %1278 = vmatprep.subr.bf16.mxu0 0
        %1279 = vmatpush1.bf16.msra.mxu0 0
        %1280 = vmatprep.subr.bf16.mxu0 0
        %1281 = vmatpush1.bf16.msra.mxu0 0
        %1282 = vmatprep.subr.bf16.mxu0 0
        %1283 = vmatpush1.bf16.msra.mxu0 0
        %1284 = vmatprep.subr.bf16.mxu0 0
        %1285 = vmatpush1.bf16.msra.mxu0 0
        %1286 = vmatprep.subr.bf16.mxu0 0
        %1287 = vmatpush1.bf16.msra.mxu0 0
        %1288 = vmatprep.subr.bf16.mxu0 0
        %1289 = vmatpush1.bf16.msra.mxu0 0
        %1290 = vmatprep.subr.bf16.mxu0 0
        %1291 = vmatpush1.bf16.msra.mxu0 0
        %1292 = vmatprep.subr.bf16.mxu0 0
        %1293 = vmatpush1.bf16.msra.mxu0 0
        %1294 = vmatprep.subr.bf16.mxu0 0
        %1295 = vmatpush1.bf16.msra.mxu0 0
        %1296 = vmatprep.subr.bf16.mxu0 0
        %1297 = vmatpush1.bf16.msra.mxu0 0
        %1298 = vmatprep.mubr.bf16.mxu0 0
        %1299 = vmatmul.mubr.bf16.gmra.mrb[0].mxu0 %v1261
        %v1300 = vpop.f32.mrb[0].mxu0
        %v1301 = vadd.f32 0.0, %v1300
        %v1302 = vpop.f32.mrb[0].mxu0
        %v1303 = vpop.f32.mrb[0].mxu0
        %v1304 = vpop.f32.mrb[0].mxu0
        %1305 = vdwg.mxu0
        %v1306 = vadd.f32 %v1119, %v1301
        %v1307 = vlaneseq
        %v1308 = vshrl.u32 %v1307, 7
        %v1309 = vsub.s32 0, %v1308
        %v1310 = vrot.slane %v486, %v1309
        %v1311 = vadd.f32 %v1306, %v1310
        %v1312 = vadd.f32 %v484, %v1311
        %v1313 = vsel %vm512, %v1312, 0.0
        %1314 = vadd.xlane.f32.xlu0 %v1313
        %v1315 = vpop.xlane.xlu0 %1314
        %v1316 = vrcp.pop 32.0
        %v1317 = vmul.f32 %v1315, %v1316
        %v1318 = vsub.f32 %v1312, %v1317
        %v1319 = vmul.f32 %v1318, %v1318
        %v1320 = vsel %vm512, %v1319, 0.0
        %1321 = vadd.xlane.f32.xlu0 %v1320
        %v1322 = vpop.xlane.xlu0 %1321
        %v1323 = vmul.f32 %v1322, %v1316
        %v1324 = vadd.f32 %v1323, 1e-05
        %v1325 = vrsqrt.pop %v1324
        %v1326 = vmul.f32 %v1318, %v1325
        %v1327 = vlaneseq
        %v1328 = vshrl.u32 %v1327, 7
        %v1329 = vsub.s32 4, %v1328
        %v1330 = vrot.slane %v486, %v1329
        %v1331 = vmul.f32 %v1326, %v1330
        %v1332 = vlaneseq
        %v1333 = vshrl.u32 %v1332, 7
        %v1334 = vsub.s32 5, %v1333
        %v1335 = vrot.slane %v486, %v1334
        %v1336 = vadd.f32 %v1331, %v1335
        %v1337 = vpack.c.bf16 %v1336, %v1336
        %v1338 = vld [vmem:[%s5] sm:$0xf]
        %v1339 = vld [vmem:[%s5 + $0x4] sm:$0xf]
        %v1340 = vld [vmem:[%s5 + $0x8] sm:$0xf]
        %v1341 = vld [vmem:[%s5 + $0xc] sm:$0xf]
        %v1342 = vlaneseq
        %v1343 = vshrl.u32 %v1342, 7
        %v1344 = vsub.s32 1, %v1343
        %v1345 = vrot.slane %v486, %v1344
        %v1350 = vunpack.c.l.b16 %v1338
        %v1351 = vunpack.c.l.b16 %v1339
        %v1352 = vunpack.c.l.b16 %v1340
        %v1353 = vunpack.c.l.b16 %v1341
        %v1354 = vpack.c.b16 %v1351, %v1350
        %v1355 = vpack.c.b16 %v1353, %v1352
        %v1359 = vsel %vm512, %v1337, 0
        %1361 = vmatprep.subr.bf16.mxu0 0
        %1362 = vmatpush1.bf16.msra.mxu0 %v1354
        %1363 = vmatprep.subr.bf16.mxu0 0
        %1364 = vmatpush1.bf16.msra.mxu0 %v1355
        %1365 = vmatprep.subr.bf16.mxu0 0
        %1366 = vmatpush1.bf16.msra.mxu0 0
        %1367 = vmatprep.subr.bf16.mxu0 0
        %1368 = vmatpush1.bf16.msra.mxu0 0
        %1369 = vmatprep.subr.bf16.mxu0 0
        %1370 = vmatpush1.bf16.msra.mxu0 0
        %1371 = vmatprep.subr.bf16.mxu0 0
        %1372 = vmatpush1.bf16.msra.mxu0 0
        %1373 = vmatprep.subr.bf16.mxu0 0
        %1374 = vmatpush1.bf16.msra.mxu0 0
        %1375 = vmatprep.subr.bf16.mxu0 0
        %1376 = vmatpush1.bf16.msra.mxu0 0
        %1377 = vmatprep.subr.bf16.mxu0 0
        %1378 = vmatpush1.bf16.msra.mxu0 0
        %1379 = vmatprep.subr.bf16.mxu0 0
        %1380 = vmatpush1.bf16.msra.mxu0 0
        %1381 = vmatprep.subr.bf16.mxu0 0
        %1382 = vmatpush1.bf16.msra.mxu0 0
        %1383 = vmatprep.subr.bf16.mxu0 0
        %1384 = vmatpush1.bf16.msra.mxu0 0
        %1385 = vmatprep.subr.bf16.mxu0 0
        %1386 = vmatpush1.bf16.msra.mxu0 0
        %1387 = vmatprep.subr.bf16.mxu0 0
        %1388 = vmatpush1.bf16.msra.mxu0 0
        %1389 = vmatprep.subr.bf16.mxu0 0
        %1390 = vmatpush1.bf16.msra.mxu0 0
        %1391 = vmatprep.subr.bf16.mxu0 0
        %1392 = vmatpush1.bf16.msra.mxu0 0
        %1393 = vmatprep.mubr.bf16.mxu0 0
        %1394 = vmatmul.mubr.bf16.gmra.mrb[0].mxu0 %v1359
        %v1395 = vpop.f32.mrb[0].mxu0
        %v1396 = vadd.f32 %v1345, %v1395
        %v1397 = vpop.f32.mrb[0].mxu0
        %v1398 = vpop.f32.mrb[0].mxu0
        %v1399 = vpop.f32.mrb[0].mxu0
        %1400 = vdwg.mxu0
        %v1401 = vmul.f32 %v1396, 0.35355338
        %v1402 = vpack.c.bf16 %v485, %v485
        %v1403 = vld [vmem:[%s6] sm:$0xf]
        %v1404 = vld [vmem:[%s6 + $0x4] sm:$0xf]
        %v1405 = vld [vmem:[%s6 + $0x8] sm:$0xf]
        %v1406 = vld [vmem:[%s6 + $0xc] sm:$0xf]
        %v1407 = vld [vmem:[%s7] sm:$0x1]
        %v1409 = vlaneseq
        %v1410 = vshrl.u32 %v1409, 7
        %v1411 = vsub.s32 0, %v1410
        %v1412 = vrot.slane %v1407, %v1411
        %v1418 = vunpack.c.l.b16 %v1403
        %v1419 = vunpack.c.l.b16 %v1404
        %v1420 = vunpack.c.l.b16 %v1405
        %v1421 = vunpack.c.l.b16 %v1406
        %v1422 = vpack.c.b16 %v1419, %v1418
        %v1423 = vpack.c.b16 %v1421, %v1420
        %v1427 = vsel %vm512, %v1402, 0
        %1429 = vmatprep.subr.bf16.mxu0 0
        %1430 = vmatpush1.bf16.msra.mxu0 %v1422
        %1431 = vmatprep.subr.bf16.mxu0 0
        %1432 = vmatpush1.bf16.msra.mxu0 %v1423
        %1433 = vmatprep.subr.bf16.mxu0 0
        %1434 = vmatpush1.bf16.msra.mxu0 0
        %1435 = vmatprep.subr.bf16.mxu0 0
        %1436 = vmatpush1.bf16.msra.mxu0 0
        %1437 = vmatprep.subr.bf16.mxu0 0
        %1438 = vmatpush1.bf16.msra.mxu0 0
        %1439 = vmatprep.subr.bf16.mxu0 0
        %1440 = vmatpush1.bf16.msra.mxu0 0
        %1441 = vmatprep.subr.bf16.mxu0 0
        %1442 = vmatpush1.bf16.msra.mxu0 0
        %1443 = vmatprep.subr.bf16.mxu0 0
        %1444 = vmatpush1.bf16.msra.mxu0 0
        %1445 = vmatprep.subr.bf16.mxu0 0
        %1446 = vmatpush1.bf16.msra.mxu0 0
        %1447 = vmatprep.subr.bf16.mxu0 0
        %1448 = vmatpush1.bf16.msra.mxu0 0
        %1449 = vmatprep.subr.bf16.mxu0 0
        %1450 = vmatpush1.bf16.msra.mxu0 0
        %1451 = vmatprep.subr.bf16.mxu0 0
        %1452 = vmatpush1.bf16.msra.mxu0 0
        %1453 = vmatprep.subr.bf16.mxu0 0
        %1454 = vmatpush1.bf16.msra.mxu0 0
        %1455 = vmatprep.subr.bf16.mxu0 0
        %1456 = vmatpush1.bf16.msra.mxu0 0
        %1457 = vmatprep.subr.bf16.mxu0 0
        %1458 = vmatpush1.bf16.msra.mxu0 0
        %1459 = vmatprep.subr.bf16.mxu0 0
        %1460 = vmatpush1.bf16.msra.mxu0 0
        %1461 = vmatprep.mubr.bf16.mxu0 0
        %1462 = vmatmul.mubr.bf16.gmra.mrb[0].mxu0 %v1427
        %v1463 = vpop.f32.mrb[0].mxu0
        %v1464 = vadd.f32 %v1412, %v1463
        %v1465 = vpop.f32.mrb[0].mxu0
        %v1466 = vpop.f32.mrb[0].mxu0
        %v1467 = vpop.f32.mrb[0].mxu0
        %1468 = vdwg.mxu0
        %v1469 = vpack.c.bf16 %v1401, %v1401
        %v1470 = vpack.c.bf16 %v1464, %v1464
        %v1472 = vsel %vm562, %v1469, 0
        %v1475 = vsel %vm562, %v1470, 0
        %1477 = vmatprep.subr.bf16.mxu0 0
        %1478 = vmatpush1.bf16.xpose.msra.mxu0 %v1475
        %1479 = vmatprep.subr.bf16.mxu0 0
        %1480 = vmatpush1.bf16.xpose.msra.mxu0 0
        %1481 = vmatprep.subr.bf16.mxu0 0
        %1482 = vmatpush1.bf16.xpose.msra.mxu0 0
        %1483 = vmatprep.subr.bf16.mxu0 0
        %1484 = vmatpush1.bf16.xpose.msra.mxu0 0
        %1485 = vmatprep.subr.bf16.mxu0 0
        %1486 = vmatpush1.bf16.xpose.msra.mxu0 0
        %1487 = vmatprep.subr.bf16.mxu0 0
        %1488 = vmatpush1.bf16.xpose.msra.mxu0 0
        %1489 = vmatprep.subr.bf16.mxu0 0
        %1490 = vmatpush1.bf16.xpose.msra.mxu0 0
        %1491 = vmatprep.subr.bf16.mxu0 0
        %1492 = vmatpush1.bf16.xpose.msra.mxu0 0
        %1493 = vmatprep.subr.bf16.mxu0 0
        %1494 = vmatpush1.bf16.xpose.msra.mxu0 0
        %1495 = vmatprep.subr.bf16.mxu0 0
        %1496 = vmatpush1.bf16.xpose.msra.mxu0 0
        %1497 = vmatprep.subr.bf16.mxu0 0
        %1498 = vmatpush1.bf16.xpose.msra.mxu0 0
        %1499 = vmatprep.subr.bf16.mxu0 0
        %1500 = vmatpush1.bf16.xpose.msra.mxu0 0
        %1501 = vmatprep.subr.bf16.mxu0 0
        %1502 = vmatpush1.bf16.xpose.msra.mxu0 0
        %1503 = vmatprep.subr.bf16.mxu0 0
        %1504 = vmatpush1.bf16.xpose.msra.mxu0 0
        %1505 = vmatprep.subr.bf16.mxu0 0
        %1506 = vmatpush1.bf16.xpose.msra.mxu0 0
        %1507 = vmatprep.subr.bf16.mxu0 0
        %1508 = vmatpush1.bf16.xpose.msra.mxu0 0
        %1509 = vmatprep.mubr.bf16.mxu0 0
        %1510 = vmatmul.mubr.bf16.gmra.mrb[0].mxu0 %v1472
        %v1511 = vpop.f32.mrb[0].mxu0
        %v1512 = vadd.f32 0.0, %v1511
        %v1513 = vpop.f32.mrb[0].mxu0
        %v1514 = vpop.f32.mrb[0].mxu0
        %v1515 = vpop.f32.mrb[0].mxu0
        %1516 = vdwg.mxu0
        %v1517 = vsel %vm562, %v1512, -inf
        %1518 = vmax.xlane.f32.xlu0 %v1517
        %v1519 = vpop.xlane.xlu0 %1518
        %v1520 = vsub.f32 %v1512, %v1519
        %v1521 = vmul.f32 %v1520, 1.442695
        %v1522 = vpow.pop %v1521
        %v1523 = vsel %vm562, %v1522, 0.0
        %1524 = vadd.xlane.f32.xlu0 %v1523
        %v1525 = vpop.xlane.xlu0 %1524
        %v1526 = vrcp.pop %v1525
        %v1527 = vmul.f32 %v1522, %v1526
        %1529 = vrot.lane.b32.xlu0 %v1464, 96
        %v1530 = vpop.permute.xlu0 %1529
        %v1533 = vsel %vm562, %v1527, 0
        %1535 = vmatprep.subr.mxu0 0.0
        %1536 = vmatpush1.msra.mxu0 %v1530
        %1537 = vmatprep.subr.mxu0 0.0
        %1538 = vmatpush1.msra.mxu0 0.0
        %1539 = vmatprep.subr.mxu0 0.0
        %1540 = vmatpush1.msra.mxu0 0.0
        %1541 = vmatprep.subr.mxu0 0.0
        %1542 = vmatpush1.msra.mxu0 0.0
        %1543 = vmatprep.subr.mxu0 0.0
        %1544 = vmatpush1.msra.mxu0 0.0
        %1545 = vmatprep.subr.mxu0 0.0
        %1546 = vmatpush1.msra.mxu0 0.0
        %1547 = vmatprep.subr.mxu0 0.0
        %1548 = vmatpush1.msra.mxu0 0.0
        %1549 = vmatprep.subr.mxu0 0.0
        %1550 = vmatpush1.msra.mxu0 0.0
        %1551 = vmatprep.subr.mxu0 0.0
        %1552 = vmatpush1.msra.mxu0 0.0
        %1553 = vmatprep.subr.mxu0 0.0
        %1554 = vmatpush1.msra.mxu0 0.0
        %1555 = vmatprep.subr.mxu0 0.0
        %1556 = vmatpush1.msra.mxu0 0.0
        %1557 = vmatprep.subr.mxu0 0.0
        %1558 = vmatpush1.msra.mxu0 0.0
        %1559 = vmatprep.subr.mxu0 0.0
        %1560 = vmatpush1.msra.mxu0 0.0
        %1561 = vmatprep.subr.mxu0 0.0
        %1562 = vmatpush1.msra.mxu0 0.0
        %1563 = vmatprep.subr.mxu0 0.0
        %1564 = vmatpush1.msra.mxu0 0.0
        %1565 = vmatprep.subr.mxu0 0.0
        %1566 = vmatpush1.msra.mxu0 0.0
        %1567 = vmatprep.subr.mxu0 0.0
        %1568 = vmatpush1.msra.mxu0 0.0
        %1569 = vmatprep.subr.mxu0 0.0
        %1570 = vmatpush1.msra.mxu0 0.0
        %1571 = vmatprep.subr.mxu0 0.0
        %1572 = vmatpush1.msra.mxu0 0.0
        %1573 = vmatprep.subr.mxu0 0.0
        %1574 = vmatpush1.msra.mxu0 0.0
        %1575 = vmatprep.subr.mxu0 0.0
        %1576 = vmatpush1.msra.mxu0 0.0
        %1577 = vmatprep.subr.mxu0 0.0
        %1578 = vmatpush1.msra.mxu0 0.0
        %1579 = vmatprep.subr.mxu0 0.0
        %1580 = vmatpush1.msra.mxu0 0.0
        %1581 = vmatprep.subr.mxu0 0.0
        %1582 = vmatpush1.msra.mxu0 0.0
        %1583 = vmatprep.subr.mxu0 0.0
        %1584 = vmatpush1.msra.mxu0 0.0
        %1585 = vmatprep.subr.mxu0 0.0
        %1586 = vmatpush1.msra.mxu0 0.0
        %1587 = vmatprep.subr.mxu0 0.0
        %1588 = vmatpush1.msra.mxu0 0.0
        %1589 = vmatprep.subr.mxu0 0.0
        %1590 = vmatpush1.msra.mxu0 0.0
        %1591 = vmatprep.subr.mxu0 0.0
        %1592 = vmatpush1.msra.mxu0 0.0
        %1593 = vmatprep.subr.mxu0 0.0
        %1594 = vmatpush1.msra.mxu0 0.0
        %1595 = vmatprep.subr.mxu0 0.0
        %1596 = vmatpush1.msra.mxu0 0.0
        %1597 = vmatprep.subr.mxu0 0.0
        %1598 = vmatpush1.msra.mxu0 0.0
        %1599 = vmatprep.mubr.f32.mxu0 0.0
        %1600 = vmatmul.mubr.f32.gmra.mrb[0].mxu0 %v1533
        %v1601 = vpop.f32.mrb[0].mxu0
        %v1602 = vadd.f32 0.0, %v1601
        %v1603 = vpop.f32.mrb[0].mxu0
        %1604 = vdwg.mxu0
        %v1605 = vpack.c.bf16 %v1602, %v1602
        %v1606 = vld [vmem:[#allocation2] sm:$0xf]
        %1608 = vrot.lane.b32.xlu0 %v1469, 120
        %v1609 = vpop.permute.xlu0 %1608
        %1611 = vrot.lane.b32.xlu0 %v1470, 120
        %v1612 = vpop.permute.xlu0 %1611
        %v1614 = vsel %vm562, %v1609, 0
        %v1617 = vsel %vm562, %v1612, 0
        %1619 = vmatprep.subr.bf16.mxu0 0
        %1620 = vmatpush1.bf16.xpose.msra.mxu0 %v1617
        %1621 = vmatprep.subr.bf16.mxu0 0
        %1622 = vmatpush1.bf16.xpose.msra.mxu0 0
        %1623 = vmatprep.subr.bf16.mxu0 0
        %1624 = vmatpush1.bf16.xpose.msra.mxu0 0
        %1625 = vmatprep.subr.bf16.mxu0 0
        %1626 = vmatpush1.bf16.xpose.msra.mxu0 0
        %1627 = vmatprep.subr.bf16.mxu0 0
        %1628 = vmatpush1.bf16.xpose.msra.mxu0 0
        %1629 = vmatprep.subr.bf16.mxu0 0
        %1630 = vmatpush1.bf16.xpose.msra.mxu0 0
        %1631 = vmatprep.subr.bf16.mxu0 0
        %1632 = vmatpush1.bf16.xpose.msra.mxu0 0
        %1633 = vmatprep.subr.bf16.mxu0 0
        %1634 = vmatpush1.bf16.xpose.msra.mxu0 0
        %1635 = vmatprep.subr.bf16.mxu0 0
        %1636 = vmatpush1.bf16.xpose.msra.mxu0 0
        %1637 = vmatprep.subr.bf16.mxu0 0
        %1638 = vmatpush1.bf16.xpose.msra.mxu0 0
        %1639 = vmatprep.subr.bf16.mxu0 0
        %1640 = vmatpush1.bf16.xpose.msra.mxu0 0
        %1641 = vmatprep.subr.bf16.mxu0 0
        %1642 = vmatpush1.bf16.xpose.msra.mxu0 0
        %1643 = vmatprep.subr.bf16.mxu0 0
        %1644 = vmatpush1.bf16.xpose.msra.mxu0 0
        %1645 = vmatprep.subr.bf16.mxu0 0
        %1646 = vmatpush1.bf16.xpose.msra.mxu0 0
        %1647 = vmatprep.subr.bf16.mxu0 0
        %1648 = vmatpush1.bf16.xpose.msra.mxu0 0
        %1649 = vmatprep.subr.bf16.mxu0 0
        %1650 = vmatpush1.bf16.xpose.msra.mxu0 0
        %1651 = vmatprep.mubr.bf16.mxu0 0
        %1652 = vmatmul.mubr.bf16.gmra.mrb[0].mxu0 %v1614
        %v1653 = vpop.f32.mrb[0].mxu0
        %v1654 = vadd.f32 0.0, %v1653
        %v1655 = vpop.f32.mrb[0].mxu0
        %v1656 = vpop.f32.mrb[0].mxu0
        %v1657 = vpop.f32.mrb[0].mxu0
        %1658 = vdwg.mxu0
        %v1659 = vsel %vm562, %v1654, -inf
        %1660 = vmax.xlane.f32.xlu0 %v1659
        %v1661 = vpop.xlane.xlu0 %1660
        %v1662 = vsub.f32 %v1654, %v1661
        %v1663 = vmul.f32 %v1662, 1.442695
        %v1664 = vpow.pop %v1663
        %v1665 = vsel %vm562, %v1664, 0.0
        %1666 = vadd.xlane.f32.xlu0 %v1665
        %v1667 = vpop.xlane.xlu0 %1666
        %v1668 = vrcp.pop %v1667
        %v1669 = vmul.f32 %v1664, %v1668
        %1670 = vrot.lane.b32.xlu0 %v1464, 88
        %v1671 = vpop.permute.xlu0 %1670
        %v1674 = vsel %vm562, %v1669, 0
        %1676 = vmatprep.subr.mxu0 0.0
        %1677 = vmatpush1.msra.mxu0 %v1671
        %1678 = vmatprep.subr.mxu0 0.0
        %1679 = vmatpush1.msra.mxu0 0.0
        %1680 = vmatprep.subr.mxu0 0.0
        %1681 = vmatpush1.msra.mxu0 0.0
        %1682 = vmatprep.subr.mxu0 0.0
        %1683 = vmatpush1.msra.mxu0 0.0
        %1684 = vmatprep.subr.mxu0 0.0
        %1685 = vmatpush1.msra.mxu0 0.0
        %1686 = vmatprep.subr.mxu0 0.0
        %1687 = vmatpush1.msra.mxu0 0.0
        %1688 = vmatprep.subr.mxu0 0.0
        %1689 = vmatpush1.msra.mxu0 0.0
        %1690 = vmatprep.subr.mxu0 0.0
        %1691 = vmatpush1.msra.mxu0 0.0
        %1692 = vmatprep.subr.mxu0 0.0
        %1693 = vmatpush1.msra.mxu0 0.0
        %1694 = vmatprep.subr.mxu0 0.0
        %1695 = vmatpush1.msra.mxu0 0.0
        %1696 = vmatprep.subr.mxu0 0.0
        %1697 = vmatpush1.msra.mxu0 0.0
        %1698 = vmatprep.subr.mxu0 0.0
        %1699 = vmatpush1.msra.mxu0 0.0
        %1700 = vmatprep.subr.mxu0 0.0
        %1701 = vmatpush1.msra.mxu0 0.0
        %1702 = vmatprep.subr.mxu0 0.0
        %1703 = vmatpush1.msra.mxu0 0.0
        %1704 = vmatprep.subr.mxu0 0.0
        %1705 = vmatpush1.msra.mxu0 0.0
        %1706 = vmatprep.subr.mxu0 0.0
        %1707 = vmatpush1.msra.mxu0 0.0
        %1708 = vmatprep.subr.mxu0 0.0
        %1709 = vmatpush1.msra.mxu0 0.0
        %1710 = vmatprep.subr.mxu0 0.0
        %1711 = vmatpush1.msra.mxu0 0.0
        %1712 = vmatprep.subr.mxu0 0.0
        %1713 = vmatpush1.msra.mxu0 0.0
        %1714 = vmatprep.subr.mxu0 0.0
        %1715 = vmatpush1.msra.mxu0 0.0
        %1716 = vmatprep.subr.mxu0 0.0
        %1717 = vmatpush1.msra.mxu0 0.0
        %1718 = vmatprep.subr.mxu0 0.0
        %1719 = vmatpush1.msra.mxu0 0.0
        %1720 = vmatprep.subr.mxu0 0.0
        %1721 = vmatpush1.msra.mxu0 0.0
        %1722 = vmatprep.subr.mxu0 0.0
        %1723 = vmatpush1.msra.mxu0 0.0
        %1724 = vmatprep.subr.mxu0 0.0
        %1725 = vmatpush1.msra.mxu0 0.0
        %1726 = vmatprep.subr.mxu0 0.0
        %1727 = vmatpush1.msra.mxu0 0.0
        %1728 = vmatprep.subr.mxu0 0.0
        %1729 = vmatpush1.msra.mxu0 0.0
        %1730 = vmatprep.subr.mxu0 0.0
        %1731 = vmatpush1.msra.mxu0 0.0
        %1732 = vmatprep.subr.mxu0 0.0
        %1733 = vmatpush1.msra.mxu0 0.0
        %1734 = vmatprep.subr.mxu0 0.0
        %1735 = vmatpush1.msra.mxu0 0.0
        %1736 = vmatprep.subr.mxu0 0.0
        %1737 = vmatpush1.msra.mxu0 0.0
        %1738 = vmatprep.subr.mxu0 0.0
        %1739 = vmatpush1.msra.mxu0 0.0
        %1740 = vmatprep.mubr.f32.mxu0 0.0
        %1741 = vmatmul.mubr.f32.gmra.mrb[0].mxu0 %v1674
        %v1742 = vpop.f32.mrb[0].mxu0
        %v1743 = vadd.f32 0.0, %v1742
        %v1744 = vpop.f32.mrb[0].mxu0
        %1745 = vdwg.mxu0
        %v1746 = vpack.c.bf16 %v1743, %v1743
        %s1747 = scalar_lea.vmem [#allocation2], 4
        %v1748 = vld [vmem:[%s1747] sm:$0xf]
        %v1750 = vsel %vm562, %v1746, 0
        %v1753 = vsel %vm843, %v1748, 0
        %1755 = vmatprep.subr.bf16.mxu0 0
        %1756 = vmatpush1.bf16.msra.mxu0 %v1753
        %1757 = vmatprep.subr.bf16.mxu0 0
        %1758 = vmatpush1.bf16.msra.mxu0 0
        %1759 = vmatprep.subr.bf16.mxu0 0
        %1760 = vmatpush1.bf16.msra.mxu0 0
        %1761 = vmatprep.subr.bf16.mxu0 0
        %1762 = vmatpush1.bf16.msra.mxu0 0
        %1763 = vmatprep.subr.bf16.mxu0 0
        %1764 = vmatpush1.bf16.msra.mxu0 0
        %1765 = vmatprep.subr.bf16.mxu0 0
        %1766 = vmatpush1.bf16.msra.mxu0 0
        %1767 = vmatprep.subr.bf16.mxu0 0
        %1768 = vmatpush1.bf16.msra.mxu0 0
        %1769 = vmatprep.subr.bf16.mxu0 0
        %1770 = vmatpush1.bf16.msra.mxu0 0
        %1771 = vmatprep.subr.bf16.mxu0 0
        %1772 = vmatpush1.bf16.msra.mxu0 0
        %1773 = vmatprep.subr.bf16.mxu0 0
        %1774 = vmatpush1.bf16.msra.mxu0 0
        %1775 = vmatprep.subr.bf16.mxu0 0
        %1776 = vmatpush1.bf16.msra.mxu0 0
        %1777 = vmatprep.subr.bf16.mxu0 0
        %1778 = vmatpush1.bf16.msra.mxu0 0
        %1779 = vmatprep.subr.bf16.mxu0 0
        %1780 = vmatpush1.bf16.msra.mxu0 0
        %1781 = vmatprep.subr.bf16.mxu0 0
        %1782 = vmatpush1.bf16.msra.mxu0 0
        %1783 = vmatprep.subr.bf16.mxu0 0
        %1784 = vmatpush1.bf16.msra.mxu0 0
        %1785 = vmatprep.subr.bf16.mxu0 0
        %1786 = vmatpush1.bf16.msra.mxu0 0
        %1787 = vmatprep.mubr.bf16.mxu0 0
        %1788 = vmatmul.mubr.bf16.gmra.mrb[0].mxu0 %v1750
        %v1789 = vpop.f32.mrb[0].mxu0
        %v1790 = vadd.f32 0.0, %v1789
        %v1791 = vpop.f32.mrb[0].mxu0
        %v1792 = vpop.f32.mrb[0].mxu0
        %v1793 = vpop.f32.mrb[0].mxu0
        %1794 = vdwg.mxu0
        %v1796 = vsel %vm562, %v1605, 0
        %v1799 = vsel %vm843, %v1606, 0
        %1801 = vmatprep.subr.bf16.mxu0 0
        %1802 = vmatpush1.bf16.msra.mxu0 %v1799
        %1803 = vmatprep.subr.bf16.mxu0 0
        %1804 = vmatpush1.bf16.msra.mxu0 0
        %1805 = vmatprep.subr.bf16.mxu0 0
        %1806 = vmatpush1.bf16.msra.mxu0 0
        %1807 = vmatprep.subr.bf16.mxu0 0
        %1808 = vmatpush1.bf16.msra.mxu0 0
        %1809 = vmatprep.subr.bf16.mxu0 0
        %1810 = vmatpush1.bf16.msra.mxu0 0
        %1811 = vmatprep.subr.bf16.mxu0 0
        %1812 = vmatpush1.bf16.msra.mxu0 0
        %1813 = vmatprep.subr.bf16.mxu0 0
        %1814 = vmatpush1.bf16.msra.mxu0 0
        %1815 = vmatprep.subr.bf16.mxu0 0
        %1816 = vmatpush1.bf16.msra.mxu0 0
        %1817 = vmatprep.subr.bf16.mxu0 0
        %1818 = vmatpush1.bf16.msra.mxu0 0
        %1819 = vmatprep.subr.bf16.mxu0 0
        %1820 = vmatpush1.bf16.msra.mxu0 0
        %1821 = vmatprep.subr.bf16.mxu0 0
        %1822 = vmatpush1.bf16.msra.mxu0 0
        %1823 = vmatprep.subr.bf16.mxu0 0
        %1824 = vmatpush1.bf16.msra.mxu0 0
        %1825 = vmatprep.subr.bf16.mxu0 0
        %1826 = vmatpush1.bf16.msra.mxu0 0
        %1827 = vmatprep.subr.bf16.mxu0 0
        %1828 = vmatpush1.bf16.msra.mxu0 0
        %1829 = vmatprep.subr.bf16.mxu0 0
        %1830 = vmatpush1.bf16.msra.mxu0 0
        %1831 = vmatprep.subr.bf16.mxu0 0
        %1832 = vmatpush1.bf16.msra.mxu0 0
        %1833 = vmatprep.mubr.bf16.mxu0 0
        %1834 = vmatmul.mubr.bf16.gmra.mrb[0].mxu0 %v1796
        %v1835 = vpop.f32.mrb[0].mxu0
        %v1836 = vadd.f32 %v1790, %v1835
        %v1837 = vpop.f32.mrb[0].mxu0
        %v1838 = vpop.f32.mrb[0].mxu0
        %v1839 = vpop.f32.mrb[0].mxu0
        %1840 = vdwg.mxu0
        %1841 = vrot.lane.b32.xlu0 %v1469, 112
        %v1842 = vpop.permute.xlu0 %1841
        %1843 = vrot.lane.b32.xlu0 %v1470, 112
        %v1844 = vpop.permute.xlu0 %1843
        %v1846 = vsel %vm562, %v1842, 0
        %v1849 = vsel %vm562, %v1844, 0
        %1851 = vmatprep.subr.bf16.mxu0 0
        %1852 = vmatpush1.bf16.xpose.msra.mxu0 %v1849
        %1853 = vmatprep.subr.bf16.mxu0 0
        %1854 = vmatpush1.bf16.xpose.msra.mxu0 0
        %1855 = vmatprep.subr.bf16.mxu0 0
        %1856 = vmatpush1.bf16.xpose.msra.mxu0 0
        %1857 = vmatprep.subr.bf16.mxu0 0
        %1858 = vmatpush1.bf16.xpose.msra.mxu0 0
        %1859 = vmatprep.subr.bf16.mxu0 0
        %1860 = vmatpush1.bf16.xpose.msra.mxu0 0
        %1861 = vmatprep.subr.bf16.mxu0 0
        %1862 = vmatpush1.bf16.xpose.msra.mxu0 0
        %1863 = vmatprep.subr.bf16.mxu0 0
        %1864 = vmatpush1.bf16.xpose.msra.mxu0 0
        %1865 = vmatprep.subr.bf16.mxu0 0
        %1866 = vmatpush1.bf16.xpose.msra.mxu0 0
        %1867 = vmatprep.subr.bf16.mxu0 0
        %1868 = vmatpush1.bf16.xpose.msra.mxu0 0
        %1869 = vmatprep.subr.bf16.mxu0 0
        %1870 = vmatpush1.bf16.xpose.msra.mxu0 0
        %1871 = vmatprep.subr.bf16.mxu0 0
        %1872 = vmatpush1.bf16.xpose.msra.mxu0 0
        %1873 = vmatprep.subr.bf16.mxu0 0
        %1874 = vmatpush1.bf16.xpose.msra.mxu0 0
        %1875 = vmatprep.subr.bf16.mxu0 0
        %1876 = vmatpush1.bf16.xpose.msra.mxu0 0
        %1877 = vmatprep.subr.bf16.mxu0 0
        %1878 = vmatpush1.bf16.xpose.msra.mxu0 0
        %1879 = vmatprep.subr.bf16.mxu0 0
        %1880 = vmatpush1.bf16.xpose.msra.mxu0 0
        %1881 = vmatprep.subr.bf16.mxu0 0
        %1882 = vmatpush1.bf16.xpose.msra.mxu0 0
        %1883 = vmatprep.mubr.bf16.mxu0 0
        %1884 = vmatmul.mubr.bf16.gmra.mrb[0].mxu0 %v1846
        %v1885 = vpop.f32.mrb[0].mxu0
        %v1886 = vadd.f32 0.0, %v1885
        %v1887 = vpop.f32.mrb[0].mxu0
        %v1888 = vpop.f32.mrb[0].mxu0
        %v1889 = vpop.f32.mrb[0].mxu0
        %1890 = vdwg.mxu0
        %v1891 = vsel %vm562, %v1886, -inf
        %1892 = vmax.xlane.f32.xlu0 %v1891
        %v1893 = vpop.xlane.xlu0 %1892
        %v1894 = vsub.f32 %v1886, %v1893
        %v1895 = vmul.f32 %v1894, 1.442695
        %v1896 = vpow.pop %v1895
        %v1897 = vsel %vm562, %v1896, 0.0
        %1898 = vadd.xlane.f32.xlu0 %v1897
        %v1899 = vpop.xlane.xlu0 %1898
        %v1900 = vrcp.pop %v1899
        %v1901 = vmul.f32 %v1896, %v1900
        %1902 = vrot.lane.b32.xlu0 %v1464, 80
        %v1903 = vpop.permute.xlu0 %1902
        %v1906 = vsel %vm562, %v1901, 0
        %1908 = vmatprep.subr.mxu0 0.0
        %1909 = vmatpush1.msra.mxu0 %v1903
        %1910 = vmatprep.subr.mxu0 0.0
        %1911 = vmatpush1.msra.mxu0 0.0
        %1912 = vmatprep.subr.mxu0 0.0
        %1913 = vmatpush1.msra.mxu0 0.0
        %1914 = vmatprep.subr.mxu0 0.0
        %1915 = vmatpush1.msra.mxu0 0.0
        %1916 = vmatprep.subr.mxu0 0.0
        %1917 = vmatpush1.msra.mxu0 0.0
        %1918 = vmatprep.subr.mxu0 0.0
        %1919 = vmatpush1.msra.mxu0 0.0
        %1920 = vmatprep.subr.mxu0 0.0
        %1921 = vmatpush1.msra.mxu0 0.0
        %1922 = vmatprep.subr.mxu0 0.0
        %1923 = vmatpush1.msra.mxu0 0.0
        %1924 = vmatprep.subr.mxu0 0.0
        %1925 = vmatpush1.msra.mxu0 0.0
        %1926 = vmatprep.subr.mxu0 0.0
        %1927 = vmatpush1.msra.mxu0 0.0
        %1928 = vmatprep.subr.mxu0 0.0
        %1929 = vmatpush1.msra.mxu0 0.0
        %1930 = vmatprep.subr.mxu0 0.0
        %1931 = vmatpush1.msra.mxu0 0.0
        %1932 = vmatprep.subr.mxu0 0.0
        %1933 = vmatpush1.msra.mxu0 0.0
        %1934 = vmatprep.subr.mxu0 0.0
        %1935 = vmatpush1.msra.mxu0 0.0
        %1936 = vmatprep.subr.mxu0 0.0
        %1937 = vmatpush1.msra.mxu0 0.0
        %1938 = vmatprep.subr.mxu0 0.0
        %1939 = vmatpush1.msra.mxu0 0.0
        %1940 = vmatprep.subr.mxu0 0.0
        %1941 = vmatpush1.msra.mxu0 0.0
        %1942 = vmatprep.subr.mxu0 0.0
        %1943 = vmatpush1.msra.mxu0 0.0
        %1944 = vmatprep.subr.mxu0 0.0
        %1945 = vmatpush1.msra.mxu0 0.0
        %1946 = vmatprep.subr.mxu0 0.0
        %1947 = vmatpush1.msra.mxu0 0.0
        %1948 = vmatprep.subr.mxu0 0.0
        %1949 = vmatpush1.msra.mxu0 0.0
        %1950 = vmatprep.subr.mxu0 0.0
        %1951 = vmatpush1.msra.mxu0 0.0
        %1952 = vmatprep.subr.mxu0 0.0
        %1953 = vmatpush1.msra.mxu0 0.0
        %1954 = vmatprep.subr.mxu0 0.0
        %1955 = vmatpush1.msra.mxu0 0.0
        %1956 = vmatprep.subr.mxu0 0.0
        %1957 = vmatpush1.msra.mxu0 0.0
        %1958 = vmatprep.subr.mxu0 0.0
        %1959 = vmatpush1.msra.mxu0 0.0
        %1960 = vmatprep.subr.mxu0 0.0
        %1961 = vmatpush1.msra.mxu0 0.0
        %1962 = vmatprep.subr.mxu0 0.0
        %1963 = vmatpush1.msra.mxu0 0.0
        %1964 = vmatprep.subr.mxu0 0.0
        %1965 = vmatpush1.msra.mxu0 0.0
        %1966 = vmatprep.subr.mxu0 0.0
        %1967 = vmatpush1.msra.mxu0 0.0
        %1968 = vmatprep.subr.mxu0 0.0
        %1969 = vmatpush1.msra.mxu0 0.0
        %1970 = vmatprep.subr.mxu0 0.0
        %1971 = vmatpush1.msra.mxu0 0.0
        %1972 = vmatprep.mubr.f32.mxu0 0.0
        %1973 = vmatmul.mubr.f32.gmra.mrb[0].mxu0 %v1906
        %v1974 = vpop.f32.mrb[0].mxu0
        %v1975 = vadd.f32 0.0, %v1974
        %v1976 = vpop.f32.mrb[0].mxu0
        %1977 = vdwg.mxu0
        %v1978 = vpack.c.bf16 %v1975, %v1975
        %s1979 = scalar_lea.vmem [#allocation2], 8
        %v1980 = vld [vmem:[%s1979] sm:$0xf]
        %v1982 = vsel %vm562, %v1978, 0
        %v1985 = vsel %vm843, %v1980, 0
        %1987 = vmatprep.subr.bf16.mxu0 0
        %1988 = vmatpush1.bf16.msra.mxu0 %v1985
        %1989 = vmatprep.subr.bf16.mxu0 0
        %1990 = vmatpush1.bf16.msra.mxu0 0
        %1991 = vmatprep.subr.bf16.mxu0 0
        %1992 = vmatpush1.bf16.msra.mxu0 0
        %1993 = vmatprep.subr.bf16.mxu0 0
        %1994 = vmatpush1.bf16.msra.mxu0 0
        %1995 = vmatprep.subr.bf16.mxu0 0
        %1996 = vmatpush1.bf16.msra.mxu0 0
        %1997 = vmatprep.subr.bf16.mxu0 0
        %1998 = vmatpush1.bf16.msra.mxu0 0
        %1999 = vmatprep.subr.bf16.mxu0 0
        %2000 = vmatpush1.bf16.msra.mxu0 0
        %2001 = vmatprep.subr.bf16.mxu0 0
        %2002 = vmatpush1.bf16.msra.mxu0 0
        %2003 = vmatprep.subr.bf16.mxu0 0
        %2004 = vmatpush1.bf16.msra.mxu0 0
        %2005 = vmatprep.subr.bf16.mxu0 0
        %2006 = vmatpush1.bf16.msra.mxu0 0
        %2007 = vmatprep.subr.bf16.mxu0 0
        %2008 = vmatpush1.bf16.msra.mxu0 0
        %2009 = vmatprep.subr.bf16.mxu0 0
        %2010 = vmatpush1.bf16.msra.mxu0 0
        %2011 = vmatprep.subr.bf16.mxu0 0
        %2012 = vmatpush1.bf16.msra.mxu0 0
        %2013 = vmatprep.subr.bf16.mxu0 0
        %2014 = vmatpush1.bf16.msra.mxu0 0
        %2015 = vmatprep.subr.bf16.mxu0 0
        %2016 = vmatpush1.bf16.msra.mxu0 0
        %2017 = vmatprep.subr.bf16.mxu0 0
        %2018 = vmatpush1.bf16.msra.mxu0 0
        %2019 = vmatprep.mubr.bf16.mxu0 0
        %2020 = vmatmul.mubr.bf16.gmra.mrb[0].mxu0 %v1982
        %v2021 = vpop.f32.mrb[0].mxu0
        %v2022 = vadd.f32 0.0, %v2021
        %v2023 = vpop.f32.mrb[0].mxu0
        %v2024 = vpop.f32.mrb[0].mxu0
        %v2025 = vpop.f32.mrb[0].mxu0
        %2026 = vdwg.mxu0
        %v2027 = vadd.f32 %v1836, %v2022
        %2028 = vrot.lane.b32.xlu0 %v1469, 104
        %v2029 = vpop.permute.xlu0 %2028
        %2030 = vrot.lane.b32.xlu0 %v1470, 104
        %v2031 = vpop.permute.xlu0 %2030
        %v2033 = vsel %vm562, %v2029, 0
        %v2036 = vsel %vm562, %v2031, 0
        %2038 = vmatprep.subr.bf16.mxu0 0
        %2039 = vmatpush1.bf16.xpose.msra.mxu0 %v2036
        %2040 = vmatprep.subr.bf16.mxu0 0
        %2041 = vmatpush1.bf16.xpose.msra.mxu0 0
        %2042 = vmatprep.subr.bf16.mxu0 0
        %2043 = vmatpush1.bf16.xpose.msra.mxu0 0
        %2044 = vmatprep.subr.bf16.mxu0 0
        %2045 = vmatpush1.bf16.xpose.msra.mxu0 0
        %2046 = vmatprep.subr.bf16.mxu0 0
        %2047 = vmatpush1.bf16.xpose.msra.mxu0 0
        %2048 = vmatprep.subr.bf16.mxu0 0
        %2049 = vmatpush1.bf16.xpose.msra.mxu0 0
        %2050 = vmatprep.subr.bf16.mxu0 0
        %2051 = vmatpush1.bf16.xpose.msra.mxu0 0
        %2052 = vmatprep.subr.bf16.mxu0 0
        %2053 = vmatpush1.bf16.xpose.msra.mxu0 0
        %2054 = vmatprep.subr.bf16.mxu0 0
        %2055 = vmatpush1.bf16.xpose.msra.mxu0 0
        %2056 = vmatprep.subr.bf16.mxu0 0
        %2057 = vmatpush1.bf16.xpose.msra.mxu0 0
        %2058 = vmatprep.subr.bf16.mxu0 0
        %2059 = vmatpush1.bf16.xpose.msra.mxu0 0
        %2060 = vmatprep.subr.bf16.mxu0 0
        %2061 = vmatpush1.bf16.xpose.msra.mxu0 0
        %2062 = vmatprep.subr.bf16.mxu0 0
        %2063 = vmatpush1.bf16.xpose.msra.mxu0 0
        %2064 = vmatprep.subr.bf16.mxu0 0
        %2065 = vmatpush1.bf16.xpose.msra.mxu0 0
        %2066 = vmatprep.subr.bf16.mxu0 0
        %2067 = vmatpush1.bf16.xpose.msra.mxu0 0
        %2068 = vmatprep.subr.bf16.mxu0 0
        %2069 = vmatpush1.bf16.xpose.msra.mxu0 0
        %2070 = vmatprep.mubr.bf16.mxu0 0
        %2071 = vmatmul.mubr.bf16.gmra.mrb[0].mxu0 %v2033
        %v2072 = vpop.f32.mrb[0].mxu0
        %v2073 = vadd.f32 0.0, %v2072
        %v2074 = vpop.f32.mrb[0].mxu0
        %v2075 = vpop.f32.mrb[0].mxu0
        %v2076 = vpop.f32.mrb[0].mxu0
        %2077 = vdwg.mxu0
        %v2078 = vsel %vm562, %v2073, -inf
        %2079 = vmax.xlane.f32.xlu0 %v2078
        %v2080 = vpop.xlane.xlu0 %2079
        %v2081 = vsub.f32 %v2073, %v2080
        %v2082 = vmul.f32 %v2081, 1.442695
        %v2083 = vpow.pop %v2082
        %v2084 = vsel %vm562, %v2083, 0.0
        %2085 = vadd.xlane.f32.xlu0 %v2084
        %v2086 = vpop.xlane.xlu0 %2085
        %v2087 = vrcp.pop %v2086
        %v2088 = vmul.f32 %v2083, %v2087
        %2089 = vrot.lane.b32.xlu0 %v1464, 72
        %v2090 = vpop.permute.xlu0 %2089
        %v2093 = vsel %vm562, %v2088, 0
        %2095 = vmatprep.subr.mxu0 0.0
        %2096 = vmatpush1.msra.mxu0 %v2090
        %2097 = vmatprep.subr.mxu0 0.0
        %2098 = vmatpush1.msra.mxu0 0.0
        %2099 = vmatprep.subr.mxu0 0.0
        %2100 = vmatpush1.msra.mxu0 0.0
        %2101 = vmatprep.subr.mxu0 0.0
        %2102 = vmatpush1.msra.mxu0 0.0
        %2103 = vmatprep.subr.mxu0 0.0
        %2104 = vmatpush1.msra.mxu0 0.0
        %2105 = vmatprep.subr.mxu0 0.0
        %2106 = vmatpush1.msra.mxu0 0.0
        %2107 = vmatprep.subr.mxu0 0.0
        %2108 = vmatpush1.msra.mxu0 0.0
        %2109 = vmatprep.subr.mxu0 0.0
        %2110 = vmatpush1.msra.mxu0 0.0
        %2111 = vmatprep.subr.mxu0 0.0
        %2112 = vmatpush1.msra.mxu0 0.0
        %2113 = vmatprep.subr.mxu0 0.0
        %2114 = vmatpush1.msra.mxu0 0.0
        %2115 = vmatprep.subr.mxu0 0.0
        %2116 = vmatpush1.msra.mxu0 0.0
        %2117 = vmatprep.subr.mxu0 0.0
        %2118 = vmatpush1.msra.mxu0 0.0
        %2119 = vmatprep.subr.mxu0 0.0
        %2120 = vmatpush1.msra.mxu0 0.0
        %2121 = vmatprep.subr.mxu0 0.0
        %2122 = vmatpush1.msra.mxu0 0.0
        %2123 = vmatprep.subr.mxu0 0.0
        %2124 = vmatpush1.msra.mxu0 0.0
        %2125 = vmatprep.subr.mxu0 0.0
        %2126 = vmatpush1.msra.mxu0 0.0
        %2127 = vmatprep.subr.mxu0 0.0
        %2128 = vmatpush1.msra.mxu0 0.0
        %2129 = vmatprep.subr.mxu0 0.0
        %2130 = vmatpush1.msra.mxu0 0.0
        %2131 = vmatprep.subr.mxu0 0.0
        %2132 = vmatpush1.msra.mxu0 0.0
        %2133 = vmatprep.subr.mxu0 0.0
        %2134 = vmatpush1.msra.mxu0 0.0
        %2135 = vmatprep.subr.mxu0 0.0
        %2136 = vmatpush1.msra.mxu0 0.0
        %2137 = vmatprep.subr.mxu0 0.0
        %2138 = vmatpush1.msra.mxu0 0.0
        %2139 = vmatprep.subr.mxu0 0.0
        %2140 = vmatpush1.msra.mxu0 0.0
        %2141 = vmatprep.subr.mxu0 0.0
        %2142 = vmatpush1.msra.mxu0 0.0
        %2143 = vmatprep.subr.mxu0 0.0
        %2144 = vmatpush1.msra.mxu0 0.0
        %2145 = vmatprep.subr.mxu0 0.0
        %2146 = vmatpush1.msra.mxu0 0.0
        %2147 = vmatprep.subr.mxu0 0.0
        %2148 = vmatpush1.msra.mxu0 0.0
        %2149 = vmatprep.subr.mxu0 0.0
        %2150 = vmatpush1.msra.mxu0 0.0
        %2151 = vmatprep.subr.mxu0 0.0
        %2152 = vmatpush1.msra.mxu0 0.0
        %2153 = vmatprep.subr.mxu0 0.0
        %2154 = vmatpush1.msra.mxu0 0.0
        %2155 = vmatprep.subr.mxu0 0.0
        %2156 = vmatpush1.msra.mxu0 0.0
        %2157 = vmatprep.subr.mxu0 0.0
        %2158 = vmatpush1.msra.mxu0 0.0
        %2159 = vmatprep.mubr.f32.mxu0 0.0
        %2160 = vmatmul.mubr.f32.gmra.mrb[0].mxu0 %v2093
        %v2161 = vpop.f32.mrb[0].mxu0
        %v2162 = vadd.f32 0.0, %v2161
        %v2163 = vpop.f32.mrb[0].mxu0
        %2164 = vdwg.mxu0
        %v2165 = vpack.c.bf16 %v2162, %v2162
        %s2166 = scalar_lea.vmem [#allocation2], 12
        %v2167 = vld [vmem:[%s2166] sm:$0xf]
        %v2169 = vsel %vm562, %v2165, 0
        %v2172 = vsel %vm843, %v2167, 0
        %2174 = vmatprep.subr.bf16.mxu0 0
        %2175 = vmatpush1.bf16.msra.mxu0 %v2172
        %2176 = vmatprep.subr.bf16.mxu0 0
        %2177 = vmatpush1.bf16.msra.mxu0 0
        %2178 = vmatprep.subr.bf16.mxu0 0
        %2179 = vmatpush1.bf16.msra.mxu0 0
        %2180 = vmatprep.subr.bf16.mxu0 0
        %2181 = vmatpush1.bf16.msra.mxu0 0
        %2182 = vmatprep.subr.bf16.mxu0 0
        %2183 = vmatpush1.bf16.msra.mxu0 0
        %2184 = vmatprep.subr.bf16.mxu0 0
        %2185 = vmatpush1.bf16.msra.mxu0 0
        %2186 = vmatprep.subr.bf16.mxu0 0
        %2187 = vmatpush1.bf16.msra.mxu0 0
        %2188 = vmatprep.subr.bf16.mxu0 0
        %2189 = vmatpush1.bf16.msra.mxu0 0
        %2190 = vmatprep.subr.bf16.mxu0 0
        %2191 = vmatpush1.bf16.msra.mxu0 0
        %2192 = vmatprep.subr.bf16.mxu0 0
        %2193 = vmatpush1.bf16.msra.mxu0 0
        %2194 = vmatprep.subr.bf16.mxu0 0
        %2195 = vmatpush1.bf16.msra.mxu0 0
        %2196 = vmatprep.subr.bf16.mxu0 0
        %2197 = vmatpush1.bf16.msra.mxu0 0
        %2198 = vmatprep.subr.bf16.mxu0 0
        %2199 = vmatpush1.bf16.msra.mxu0 0
        %2200 = vmatprep.subr.bf16.mxu0 0
        %2201 = vmatpush1.bf16.msra.mxu0 0
        %2202 = vmatprep.subr.bf16.mxu0 0
        %2203 = vmatpush1.bf16.msra.mxu0 0
        %2204 = vmatprep.subr.bf16.mxu0 0
        %2205 = vmatpush1.bf16.msra.mxu0 0
        %2206 = vmatprep.mubr.bf16.mxu0 0
        %2207 = vmatmul.mubr.bf16.gmra.mrb[0].mxu0 %v2169
        %v2208 = vpop.f32.mrb[0].mxu0
        %v2209 = vadd.f32 0.0, %v2208
        %v2210 = vpop.f32.mrb[0].mxu0
        %v2211 = vpop.f32.mrb[0].mxu0
        %v2212 = vpop.f32.mrb[0].mxu0
        %2213 = vdwg.mxu0
        %v2214 = vadd.f32 %v2027, %v2209
        %v2215 = vlaneseq
        %v2216 = vshrl.u32 %v2215, 7
        %v2217 = vsub.s32 2, %v2216
        %v2218 = vrot.slane %v486, %v2217
        %v2219 = vadd.f32 %v2214, %v2218
        %v2220 = vadd.f32 %v1336, %v2219
        %v2221 = vsel %vm512, %v2220, 0.0
        %2222 = vadd.xlane.f32.xlu0 %v2221
        %v2223 = vpop.xlane.xlu0 %2222
        %v2224 = vmul.f32 %v2223, %v1316
        %v2225 = vsub.f32 %v2220, %v2224
        %v2226 = vmul.f32 %v2225, %v2225
        %v2227 = vsel %vm512, %v2226, 0.0
        %2228 = vadd.xlane.f32.xlu0 %v2227
        %v2229 = vpop.xlane.xlu0 %2228
        %v2230 = vmul.f32 %v2229, %v1316
        %v2231 = vadd.f32 %v2230, 1e-05
        %v2232 = vrsqrt.pop %v2231
        %v2233 = vmul.f32 %v2225, %v2232
        %v2234 = vlaneseq
        %v2235 = vshrl.u32 %v2234, 7
        %v2236 = vsub.s32 6, %v2235
        %v2237 = vrot.slane %v486, %v2236
        %v2238 = vmul.f32 %v2233, %v2237
        %v2239 = vlaneseq
        %v2240 = vshrl.u32 %v2239, 7
        %v2241 = vsub.s32 7, %v2240
        %v2242 = vrot.slane %v486, %v2241
        %v2243 = vadd.f32 %v2238, %v2242
        %v2244 = vpack.c.bf16 %v2243, %v2243
        %v2245 = vld [vmem:[%s9] sm:$0xf]
        %v2246 = vld [vmem:[%s9 + $0x4] sm:$0xf]
        %v2247 = vld [vmem:[%s9 + $0x8] sm:$0xf]
        %v2248 = vld [vmem:[%s9 + $0xc] sm:$0xf]
        %v2249 = vld [vmem:[%s10] sm:$0x1]
        %v2251 = vlaneseq
        %v2252 = vshrl.u32 %v2251, 7
        %v2253 = vsub.s32 0, %v2252
        %v2254 = vrot.slane %v2249, %v2253
        %v2260 = vunpack.c.l.b16 %v2245
        %v2261 = vunpack.c.l.b16 %v2246
        %v2262 = vunpack.c.l.b16 %v2247
        %v2263 = vunpack.c.l.b16 %v2248
        %v2264 = vpack.c.b16 %v2261, %v2260
        %v2265 = vpack.c.b16 %v2263, %v2262
        %v2269 = vsel %vm512, %v2244, 0
        %2271 = vmatprep.subr.bf16.mxu0 0
        %2272 = vmatpush1.bf16.msra.mxu0 %v2264
        %2273 = vmatprep.subr.bf16.mxu0 0
        %2274 = vmatpush1.bf16.msra.mxu0 %v2265
        %2275 = vmatprep.subr.bf16.mxu0 0
        %2276 = vmatpush1.bf16.msra.mxu0 0
        %2277 = vmatprep.subr.bf16.mxu0 0
        %2278 = vmatpush1.bf16.msra.mxu0 0
        %2279 = vmatprep.subr.bf16.mxu0 0
        %2280 = vmatpush1.bf16.msra.mxu0 0
        %2281 = vmatprep.subr.bf16.mxu0 0
        %2282 = vmatpush1.bf16.msra.mxu0 0
        %2283 = vmatprep.subr.bf16.mxu0 0
        %2284 = vmatpush1.bf16.msra.mxu0 0
        %2285 = vmatprep.subr.bf16.mxu0 0
        %2286 = vmatpush1.bf16.msra.mxu0 0
        %2287 = vmatprep.subr.bf16.mxu0 0
        %2288 = vmatpush1.bf16.msra.mxu0 0
        %2289 = vmatprep.subr.bf16.mxu0 0
        %2290 = vmatpush1.bf16.msra.mxu0 0
        %2291 = vmatprep.subr.bf16.mxu0 0
        %2292 = vmatpush1.bf16.msra.mxu0 0
        %2293 = vmatprep.subr.bf16.mxu0 0
        %2294 = vmatpush1.bf16.msra.mxu0 0
        %2295 = vmatprep.subr.bf16.mxu0 0
        %2296 = vmatpush1.bf16.msra.mxu0 0
        %2297 = vmatprep.subr.bf16.mxu0 0
        %2298 = vmatpush1.bf16.msra.mxu0 0
        %2299 = vmatprep.subr.bf16.mxu0 0
        %2300 = vmatpush1.bf16.msra.mxu0 0
        %2301 = vmatprep.subr.bf16.mxu0 0
        %2302 = vmatpush1.bf16.msra.mxu0 0
        %2303 = vmatprep.mubr.bf16.mxu0 0
        %2304 = vmatmul.mubr.bf16.gmra.mrb[0].mxu0 %v2269
        %v2305 = vpop.f32.mrb[0].mxu0
        %v2306 = vadd.f32 %v2254, %v2305
        %v2307 = vpop.f32.mrb[0].mxu0
        %v2308 = vpop.f32.mrb[0].mxu0
        %v2309 = vpop.f32.mrb[0].mxu0
        %2310 = vdwg.mxu0
        %v2311 = vmax.f32 %v2306, 0.0
        %v2312 = vpack.c.bf16 %v2311, %v2311
        %v2313 = vld [vmem:[%s11] sm:$0xf]
        %v2314 = vld [vmem:[%s11 + $0x4] sm:$0xf]
        %v2315 = vld [vmem:[%s11 + $0x8] sm:$0xf]
        %v2316 = vld [vmem:[%s11 + $0xc] sm:$0xf]
        %v2317 = vld [vmem:[%s11 + $0x10] sm:$0xf]
        %v2318 = vld [vmem:[%s11 + $0x14] sm:$0xf]
        %v2319 = vld [vmem:[%s11 + $0x18] sm:$0xf]
        %v2320 = vld [vmem:[%s11 + $0x1c] sm:$0xf]
        %v2321 = vld [vmem:[%s11 + $0x20] sm:$0xf]
        %v2322 = vld [vmem:[%s11 + $0x24] sm:$0xf]
        %v2323 = vld [vmem:[%s11 + $0x28] sm:$0xf]
        %v2324 = vld [vmem:[%s11 + $0x2c] sm:$0xf]
        %v2325 = vld [vmem:[%s11 + $0x30] sm:$0xf]
        %v2326 = vld [vmem:[%s11 + $0x34] sm:$0xf]
        %v2327 = vld [vmem:[%s11 + $0x38] sm:$0xf]
        %v2328 = vld [vmem:[%s11 + $0x3c] sm:$0xf]
        %v2329 = vlaneseq
        %v2330 = vshrl.u32 %v2329, 7
        %v2331 = vsub.s32 3, %v2330
        %v2332 = vrot.slane %v486, %v2331
        %v2349 = vunpack.c.l.b16 %v2313
        %v2350 = vunpack.c.l.b16 %v2314
        %v2351 = vunpack.c.l.b16 %v2315
        %v2352 = vunpack.c.l.b16 %v2316
        %v2353 = vunpack.c.l.b16 %v2317
        %v2354 = vunpack.c.l.b16 %v2318
        %v2355 = vunpack.c.l.b16 %v2319
        %v2356 = vunpack.c.l.b16 %v2320
        %v2357 = vunpack.c.l.b16 %v2321
        %v2358 = vunpack.c.l.b16 %v2322
        %v2359 = vunpack.c.l.b16 %v2323
        %v2360 = vunpack.c.l.b16 %v2324
        %v2361 = vunpack.c.l.b16 %v2325
        %v2362 = vunpack.c.l.b16 %v2326
        %v2363 = vunpack.c.l.b16 %v2327
        %v2364 = vunpack.c.l.b16 %v2328
        %v2365 = vpack.c.b16 %v2350, %v2349
        %v2366 = vpack.c.b16 %v2352, %v2351
        %v2367 = vpack.c.b16 %v2354, %v2353
        %v2368 = vpack.c.b16 %v2356, %v2355
        %v2369 = vpack.c.b16 %v2358, %v2357
        %v2370 = vpack.c.b16 %v2360, %v2359
        %v2371 = vpack.c.b16 %v2362, %v2361
        %v2372 = vpack.c.b16 %v2364, %v2363
        %2381 = vmatprep.subr.bf16.mxu0 0
        %2382 = vmatpush1.bf16.msra.mxu0 %v2365
        %2383 = vmatprep.subr.bf16.mxu0 0
        %2384 = vmatpush1.bf16.msra.mxu0 %v2366
        %2385 = vmatprep.subr.bf16.mxu0 0
        %2386 = vmatpush1.bf16.msra.mxu0 %v2367
        %2387 = vmatprep.subr.bf16.mxu0 0
        %2388 = vmatpush1.bf16.msra.mxu0 %v2368
        %2389 = vmatprep.subr.bf16.mxu0 0
        %2390 = vmatpush1.bf16.msra.mxu0 %v2369
        %2391 = vmatprep.subr.bf16.mxu0 0
        %2392 = vmatpush1.bf16.msra.mxu0 %v2370
        %2393 = vmatprep.subr.bf16.mxu0 0
        %2394 = vmatpush1.bf16.msra.mxu0 %v2371
        %2395 = vmatprep.subr.bf16.mxu0 0
        %2396 = vmatpush1.bf16.msra.mxu0 %v2372
        %2397 = vmatprep.subr.bf16.mxu0 0
        %2398 = vmatpush1.bf16.msra.mxu0 0
        %2399 = vmatprep.subr.bf16.mxu0 0
        %2400 = vmatpush1.bf16.msra.mxu0 0
        %2401 = vmatprep.subr.bf16.mxu0 0
        %2402 = vmatpush1.bf16.msra.mxu0 0
        %2403 = vmatprep.subr.bf16.mxu0 0
        %2404 = vmatpush1.bf16.msra.mxu0 0
        %2405 = vmatprep.subr.bf16.mxu0 0
        %2406 = vmatpush1.bf16.msra.mxu0 0
        %2407 = vmatprep.subr.bf16.mxu0 0
        %2408 = vmatpush1.bf16.msra.mxu0 0
        %2409 = vmatprep.subr.bf16.mxu0 0
        %2410 = vmatpush1.bf16.msra.mxu0 0
        %2411 = vmatprep.subr.bf16.mxu0 0
        %2412 = vmatpush1.bf16.msra.mxu0 0
        %2413 = vmatprep.mubr.bf16.mxu0 0
        %2414 = vmatmul.mubr.bf16.gmra.mrb[0].mxu0 %v2312
        %v2415 = vpop.f32.mrb[0].mxu0
        %v2416 = vadd.f32 %v2332, %v2415
        %v2417 = vpop.f32.mrb[0].mxu0
        %v2418 = vpop.f32.mrb[0].mxu0
        %v2419 = vpop.f32.mrb[0].mxu0
        %2420 = vdwg.mxu0
        %v2421 = vadd.f32 %v2243, %v2416
        %v2422 = vsel %vm512, %v2421, 0.0
        %2423 = vadd.xlane.f32.xlu0 %v2422
        %v2424 = vpop.xlane.xlu0 %2423
        %v2425 = vmul.f32 %v2424, %v1316
        %v2426 = vsub.f32 %v2421, %v2425
        %v2427 = vmul.f32 %v2426, %v2426
        %v2428 = vsel %vm512, %v2427, 0.0
        %2429 = vadd.xlane.f32.xlu0 %v2428
        %v2430 = vpop.xlane.xlu0 %2429
        %v2431 = vmul.f32 %v2430, %v1316
        %v2432 = vadd.f32 %v2431, 1e-05
        %v2433 = vrsqrt.pop %v2432
        %v2434 = vmul.f32 %v2426, %v2433
        %v2435 = vlaneseq
        %v2436 = vshrl.u32 %v2435, 7
        %v2437 = vsub.s32 0, %v2436
        %v2438 = vrot.slane %v487, %v2437
        %v2439 = vmul.f32 %v2434, %v2438
        %v2440 = vlaneseq
        %v2441 = vshrl.u32 %v2440, 7
        %v2442 = vsub.s32 1, %v2441
        %v2443 = vrot.slane %v487, %v2442
        %v2444 = vadd.f32 %v2439, %v2443
        %2445 = vst.msk [vmem:[%s474] sm:$0xff] %vm512, %v2444
        %s2446 = sand.u32 %s320, 1
        %s2447 = scalar_lea.sflag [#allocation4], %s2446
        %s2448 = sand.u32 %s320, 1
        %s2449 = smul.addr %s2448, 8
        %s2450 = scalar_lea.vmem [#allocation7], %s2449
        // Predicated region
        $region81: #{tpu_custom_call.1} parent=71 // pred_check
          %p2451 = pneg %p330
        $region82: #{tpu_custom_call.1} parent=71 // pred_check_branch
          %2453 = sbr.rel (%p2451) target = $region84
        $region83: #{tpu_custom_call.1} parent=71 // pred_region
          %s2455 = ssub.s32 128, 128
          %2456 = vsyncadd %s2447, %s2455
          %s2457 = smul.addr %s29, 128
          %s2458 = scalar_lea.hbm %s13, %s2457
          %s2460 = sshll.u32 %s2450, 4
          %s2461 = int_to_ptr.vmem [resolvable:$true] %s2460
          %2463 = dma.vmem_to_hbm [thread:$0]  %s2461, 128, %s2458, %s2447
        $region84: #{tpu_custom_call.1} parent=71 // pred_fallthru
          _
      $region72: #{tpu_custom_call.1} parent=5 // pred_fallthru
        _
      %p2464 = scmp.le.s32.totalorder 2, %s24
      // Predicated region
      $region85: #{tpu_custom_call.1} parent=5 // pred_check
        %p2465 = pneg %p2464
      $region86: #{tpu_custom_call.1} parent=5 // pred_check_branch
        %2467 = sbr.rel (%p2465) target = $region88
      $region87: #{tpu_custom_call.1} parent=5 // pred_region
        %s2468 = ssub.s32 %s24, 2
        // Predicated region
        $region89: #{tpu_custom_call.1} parent=87 // pred_check
          %p2469 = pneg %p336
        $region90: #{tpu_custom_call.1} parent=87 // pred_check_branch
          %2471 = sbr.rel (%p2469) target = $region92
        $region91: #{tpu_custom_call.1} parent=87 // pred_region
          %s2472 = sand.u32 %s321, 1
          %s2473 = scalar_lea.sflag [#allocation4], %s2472
          %s2474 = sand.u32 %s321, 1
          %s2475 = smul.addr %s2474, 8
          %s2476 = scalar_lea.vmem [#allocation7], %s2475
          %2477 = dma.done %s2473, 128
        $region92: #{tpu_custom_call.1} parent=87 // pred_fallthru
          _
      $region88: #{tpu_custom_call.1} parent=5 // pred_fallthru
        _
    $region6: #{tpu_custom_call.1} parent=1 // loop_footer
      %s28 = sadd.s32 1, %s24
    $region7: #{tpu_custom_call.1} parent=1 // loop_footer_branch
      %23 = sbr.rel target = $region3
    $region8: #{tpu_custom_call.1} parent=1 // loop_exit
      _
    %2478 = vsyncpa [#allocation3], 1
    %s2479 = scalar_lea.sflag [#allocation3], 1
    %2480 = vsyncpa %s2479, 1
    %2481 = vsyncpa [#allocation6], 1
    %2482 = vsyncpa [#allocation4], 1
    %s2483 = scalar_lea.sflag [#allocation4], 1
    %2484 = vsyncpa %s2483, 1

</llo_original>
